<compile_context>
chip_gen: v7x
topology: tpu7x:2x2x1
jax: 0.10.0
libtpu: 0.0.40
codegen_flags: <defaults>
</compile_context>

<pallas_src>
import jax
import jax.numpy as jnp
from jax import lax
from jax.experimental import pallas as pl
from jax.experimental.pallas import tpu as pltpu


def lstm_tagger_kernel(sent_ref, emb_hbm, w_ih_ref, w_hh_ref, b_ref,
                       w_tag_ref, b_tag_ref, out_ref,
                       x_sc, h_sc, sems):
    T, _ = x_sc.shape
    H = w_hh_ref.shape[0]            # w_hh_T is (H, 4H)

    # ---- Fused embedding gather: T row DMAs HBM -> VMEM, issued in parallel.
    copies = []
    for t in range(T):
        cp = pltpu.make_async_copy(
            emb_hbm.at[pl.ds(sent_ref[t], 1)],    # (1, E) table row
            x_sc.at[pl.ds(t, 1)],                 # (1, E) destination row
            sems.at[t])
        cp.start()
        copies.append(cp)

    w_hh = w_hh_ref[...]             # (H, 4H) — load while DMAs are in flight

    for cp in copies:
        cp.wait()

    # ---- Hoisted input projection: one batched MXU matmul + fused bias. ----
    xw = (jnp.dot(x_sc[...], w_ih_ref[...],
                  preferred_element_type=jnp.float32)
          + b_ref[...])              # (T, 4H)

    # ---- Serial recurrence (statically unrolled; T is compile-time). ----
    h = None
    c = None
    for t in range(T):
        if t == 0:
            gates = xw[0:1, :]       # h0 = 0 -> recurrent matmul elided
        else:
            gates = xw[t:t + 1, :] + jnp.dot(
                h, w_hh, preferred_element_type=jnp.float32)    # (1, 4H)
        sig = jax.nn.sigmoid(gates)                             # i, f, (.), o
        g = jnp.tanh(gates[:, 2 * H:3 * H])                     # lane-aligned
        i = sig[:, 0 * H:1 * H]
        f = sig[:, 1 * H:2 * H]
        o = sig[:, 3 * H:4 * H]
        c = i * g if t == 0 else f * c + i * g                  # c0 = 0
        h = o * jnp.tanh(c)
        h_sc[t:t + 1, :] = h

    # ---- Deferred tag head: one matmul + vectorized log_softmax, one store.
    tag = (jnp.dot(h_sc[...], w_tag_ref[...],
                   preferred_element_type=jnp.float32)
           + b_tag_ref[...])                                    # (T, Tg)
    m = jnp.max(tag, axis=-1, keepdims=True)
    lse = m + jnp.log(jnp.sum(jnp.exp(tag - m), axis=-1, keepdims=True))
    out_ref[...] = tag - lse


def lstm_tagger_forward(sentence, params):
    """sentence: (T,) int32 token ids."""
    embedding = params["embedding"]     # (V, E)
    w_ih_T = params["w_ih_T"]           # (E, 4H)
    w_hh_T = params["w_hh_T"]           # (H, 4H)
    b = params["b"]                     # (1, 4H)   (b_ih + b_hh)
    w_tag_T = params["w_tag_T"]         # (H, Tg)
    b_tag = params["b_tag"]             # (1, Tg)

    T = sentence.shape[0]
    E = embedding.shape[1]
    H = w_hh_T.shape[0]
    Tg = w_tag_T.shape[1]

    smem = pl.BlockSpec(memory_space=pltpu.MemorySpace.SMEM)
    vmem = pl.BlockSpec(memory_space=pltpu.MemorySpace.VMEM)
    hbm = pl.BlockSpec(memory_space=pl.ANY)    # embedding table stays in HBM

    return pl.pallas_call(
        lstm_tagger_kernel,
        out_shape=jax.ShapeDtypeStruct((T, Tg), jnp.float32),
        in_specs=[smem, hbm, vmem, vmem, vmem, vmem, vmem],
        out_specs=vmem,
        scratch_shapes=[pltpu.VMEM((T, E), jnp.float32),      # gathered embeds
                        pltpu.VMEM((T, H), jnp.float32),      # per-step h
                        pltpu.SemaphoreType.DMA((T,))],
    )(sentence.astype(jnp.int32), embedding, w_ih_T, w_hh_T, b, w_tag_T, b_tag)


def init_params(key, vocab_size, embedding_dim, hidden_dim, tagset_size):
    ks = jax.random.split(key, 7)
    E, H, V, Tg = embedding_dim, hidden_dim, vocab_size, tagset_size
    scale = 1.0 / jnp.sqrt(H)
    embedding = jax.random.normal(ks[0], (V, E), jnp.float32)
    w_ih = jax.random.uniform(ks[1], (4 * H, E), jnp.float32, -scale, scale)
    w_hh = jax.random.uniform(ks[2], (4 * H, H), jnp.float32, -scale, scale)
    b_ih = jax.random.uniform(ks[3], (4 * H,), jnp.float32, -scale, scale)
    b_hh = jax.random.uniform(ks[4], (4 * H,), jnp.float32, -scale, scale)
    w_tag = jax.random.uniform(ks[5], (Tg, H), jnp.float32, -scale, scale)
    b_tag = jax.random.uniform(ks[6], (Tg,), jnp.float32, -scale, scale)
    return {
        "embedding": embedding,
        "w_ih_T": w_ih.T,                      # (E, 4H)
        "w_hh_T": w_hh.T,                      # (H, 4H)
        "b": (b_ih + b_hh)[None, :],           # (1, 4H)
        "w_tag_T": w_tag.T,                    # (H, Tg)
        "b_tag": b_tag[None, :],               # (1, Tg)
    }


def reference_forward(sentence, params):
    """Pure-JAX reference for correctness checking."""
    embeds = params["embedding"][sentence]
    H = params["w_hh_T"].shape[0]
    hi = lax.Precision.HIGHEST

    def step(carry, x_t):
        h, c = carry
        gates = (jnp.dot(x_t, params["w_ih_T"], precision=hi)
                 + jnp.dot(h, params["w_hh_T"], precision=hi)
                 + params["b"][0])
        i = jax.nn.sigmoid(gates[0 * H:1 * H])
        f = jax.nn.sigmoid(gates[1 * H:2 * H])
        g = jnp.tanh(gates[2 * H:3 * H])
        o = jax.nn.sigmoid(gates[3 * H:4 * H])
        c_new = f * c + i * g
        h_new = o * jnp.tanh(c_new)
        return (h_new, c_new), h_new

    (_, _), hs = lax.scan(step, (jnp.zeros((H,)), jnp.zeros((H,))), embeds)
    tag_space = jnp.dot(hs, params["w_tag_T"], precision=hi) + params["b_tag"]
    return jax.nn.log_softmax(tag_space, axis=1)


if __name__ == "__main__":
    # Small shapes consistent with the module's forward.  H = E = 128 keeps
    # the [i|f|g|o] gate boundaries 128-lane-aligned inside the kernel.
    T = 8              # sentence length
    E = 128            # embedding_dim
    H = 128            # hidden_dim
    V = 50             # vocab_size
    TG = 8             # tagset_size

    key = jax.random.PRNGKey(0)
    pkey, skey = jax.random.split(key)
    params = init_params(pkey, V, E, H, TG)
    sentence = jax.random.randint(skey, (T,), 0, V, dtype=jnp.int32)

    tag_scores = lstm_tagger_forward(sentence, params)
    tag_scores = jax.block_until_ready(tag_scores)

    ref = reference_forward(sentence, params)
    assert tag_scores.shape == (T, TG)
    assert jnp.allclose(tag_scores, ref, atol=1e-4, rtol=1e-4), "mismatch vs reference"

    print("KERNEL_OK")
</pallas_src>

<mosaic_0001>
module attributes {stable_mosaic.version = 11 : i64} {
  func.func @lstm_tagger_kernel(%arg0: memref<8xi32, #tpu.memory_space<smem>>, %arg1: memref<50x128xf32, #tpu.memory_space<any>>, %arg2: memref<128x512xf32, #tpu.memory_space<vmem>>, %arg3: memref<128x512xf32, #tpu.memory_space<vmem>>, %arg4: memref<1x512xf32, #tpu.memory_space<vmem>>, %arg5: memref<128x8xf32, #tpu.memory_space<vmem>>, %arg6: memref<1x8xf32, #tpu.memory_space<vmem>>, %arg7: memref<8x8xf32, #tpu.memory_space<vmem>>, %arg8: memref<8x128xf32, #tpu.memory_space<vmem>>, %arg9: memref<8x128xf32, #tpu.memory_space<vmem>>, %arg10: memref<8x!tpu.dma_semaphore, #tpu.memory_space<semaphore_mem>>) attributes {dimension_semantics = [], scalar_prefetch = 0 : i64, scratch_operands = 3 : i64, tpu.core_type = #tpu.core_type<tc>} {
    %c0 = arith.constant 0 : index
    %0 = memref.load %arg0[%c0] : memref<8xi32, #tpu.memory_space<smem>>
    %c0_i32 = arith.constant 0 : i32
    %c0_i32_0 = arith.constant 0 : i32
    %1 = tpu.memref_slice %arg1[%0, %c0_i32_0] : memref<50x128xf32, #tpu.memory_space<any>> -> memref<1x128xf32, #tpu.memory_space<any>>
    %c0_i32_1 = arith.constant 0 : i32
    %c0_i32_2 = arith.constant 0 : i32
    %2 = tpu.memref_slice %arg8[%c0_i32_1, %c0_i32_2] : memref<8x128xf32, #tpu.memory_space<vmem>> -> memref<1x128xf32, #tpu.memory_space<vmem>>
    %3 = tpu.memref_slice %arg10[%c0_i32] : memref<8x!tpu.dma_semaphore, #tpu.memory_space<semaphore_mem>> -> memref<1x!tpu.dma_semaphore, #tpu.memory_space<semaphore_mem>>
    %4 = tpu.memref_squeeze %3 : memref<1x!tpu.dma_semaphore, #tpu.memory_space<semaphore_mem>> -> memref<!tpu.dma_semaphore, #tpu.memory_space<semaphore_mem>>
    tpu.enqueue_dma source(%1 : memref<1x128xf32, #tpu.memory_space<any>>) target(%2 : memref<1x128xf32, #tpu.memory_space<vmem>>) target_semaphore(%4 : memref<!tpu.dma_semaphore, #tpu.memory_space<semaphore_mem>>)
    %c1 = arith.constant 1 : index
    %5 = memref.load %arg0[%c1] : memref<8xi32, #tpu.memory_space<smem>>
    %c1_i32 = arith.constant 1 : i32
    %c0_i32_3 = arith.constant 0 : i32
    %6 = tpu.memref_slice %arg1[%5, %c0_i32_3] : memref<50x128xf32, #tpu.memory_space<any>> -> memref<1x128xf32, #tpu.memory_space<any>>
    %c1_i32_4 = arith.constant 1 : i32
    %c0_i32_5 = arith.constant 0 : i32
    %7 = tpu.memref_slice %arg8[%c1_i32_4, %c0_i32_5] : memref<8x128xf32, #tpu.memory_space<vmem>> -> memref<1x128xf32, #tpu.memory_space<vmem>>
    %8 = tpu.memref_slice %arg10[%c1_i32] : memref<8x!tpu.dma_semaphore, #tpu.memory_space<semaphore_mem>> -> memref<1x!tpu.dma_semaphore, #tpu.memory_space<semaphore_mem>>
    %9 = tpu.memref_squeeze %8 : memref<1x!tpu.dma_semaphore, #tpu.memory_space<semaphore_mem>> -> memref<!tpu.dma_semaphore, #tpu.memory_space<semaphore_mem>>
    tpu.enqueue_dma source(%6 : memref<1x128xf32, #tpu.memory_space<any>>) target(%7 : memref<1x128xf32, #tpu.memory_space<vmem>>) target_semaphore(%9 : memref<!tpu.dma_semaphore, #tpu.memory_space<semaphore_mem>>)
    %c2 = arith.constant 2 : index
    %10 = memref.load %arg0[%c2] : memref<8xi32, #tpu.memory_space<smem>>
    %c2_i32 = arith.constant 2 : i32
    %c0_i32_6 = arith.constant 0 : i32
    %11 = tpu.memref_slice %arg1[%10, %c0_i32_6] : memref<50x128xf32, #tpu.memory_space<any>> -> memref<1x128xf32, #tpu.memory_space<any>>
    %c2_i32_7 = arith.constant 2 : i32
    %c0_i32_8 = arith.constant 0 : i32
    %12 = tpu.memref_slice %arg8[%c2_i32_7, %c0_i32_8] : memref<8x128xf32, #tpu.memory_space<vmem>> -> memref<1x128xf32, #tpu.memory_space<vmem>>
    %13 = tpu.memref_slice %arg10[%c2_i32] : memref<8x!tpu.dma_semaphore, #tpu.memory_space<semaphore_mem>> -> memref<1x!tpu.dma_semaphore, #tpu.memory_space<semaphore_mem>>
    %14 = tpu.memref_squeeze %13 : memref<1x!tpu.dma_semaphore, #tpu.memory_space<semaphore_mem>> -> memref<!tpu.dma_semaphore, #tpu.memory_space<semaphore_mem>>
    tpu.enqueue_dma source(%11 : memref<1x128xf32, #tpu.memory_space<any>>) target(%12 : memref<1x128xf32, #tpu.memory_space<vmem>>) target_semaphore(%14 : memref<!tpu.dma_semaphore, #tpu.memory_space<semaphore_mem>>)
    %c3 = arith.constant 3 : index
    %15 = memref.load %arg0[%c3] : memref<8xi32, #tpu.memory_space<smem>>
    %c3_i32 = arith.constant 3 : i32
    %c0_i32_9 = arith.constant 0 : i32
    %16 = tpu.memref_slice %arg1[%15, %c0_i32_9] : memref<50x128xf32, #tpu.memory_space<any>> -> memref<1x128xf32, #tpu.memory_space<any>>
    %c3_i32_10 = arith.constant 3 : i32
    %c0_i32_11 = arith.constant 0 : i32
    %17 = tpu.memref_slice %arg8[%c3_i32_10, %c0_i32_11] : memref<8x128xf32, #tpu.memory_space<vmem>> -> memref<1x128xf32, #tpu.memory_space<vmem>>
    %18 = tpu.memref_slice %arg10[%c3_i32] : memref<8x!tpu.dma_semaphore, #tpu.memory_space<semaphore_mem>> -> memref<1x!tpu.dma_semaphore, #tpu.memory_space<semaphore_mem>>
    %19 = tpu.memref_squeeze %18 : memref<1x!tpu.dma_semaphore, #tpu.memory_space<semaphore_mem>> -> memref<!tpu.dma_semaphore, #tpu.memory_space<semaphore_mem>>
    tpu.enqueue_dma source(%16 : memref<1x128xf32, #tpu.memory_space<any>>) target(%17 : memref<1x128xf32, #tpu.memory_space<vmem>>) target_semaphore(%19 : memref<!tpu.dma_semaphore, #tpu.memory_space<semaphore_mem>>)
    %c4 = arith.constant 4 : index
    %20 = memref.load %arg0[%c4] : memref<8xi32, #tpu.memory_space<smem>>
    %c4_i32 = arith.constant 4 : i32
    %c0_i32_12 = arith.constant 0 : i32
    %21 = tpu.memref_slice %arg1[%20, %c0_i32_12] : memref<50x128xf32, #tpu.memory_space<any>> -> memref<1x128xf32, #tpu.memory_space<any>>
    %c4_i32_13 = arith.constant 4 : i32
    %c0_i32_14 = arith.constant 0 : i32
    %22 = tpu.memref_slice %arg8[%c4_i32_13, %c0_i32_14] : memref<8x128xf32, #tpu.memory_space<vmem>> -> memref<1x128xf32, #tpu.memory_space<vmem>>
    %23 = tpu.memref_slice %arg10[%c4_i32] : memref<8x!tpu.dma_semaphore, #tpu.memory_space<semaphore_mem>> -> memref<1x!tpu.dma_semaphore, #tpu.memory_space<semaphore_mem>>
    %24 = tpu.memref_squeeze %23 : memref<1x!tpu.dma_semaphore, #tpu.memory_space<semaphore_mem>> -> memref<!tpu.dma_semaphore, #tpu.memory_space<semaphore_mem>>
    tpu.enqueue_dma source(%21 : memref<1x128xf32, #tpu.memory_space<any>>) target(%22 : memref<1x128xf32, #tpu.memory_space<vmem>>) target_semaphore(%24 : memref<!tpu.dma_semaphore, #tpu.memory_space<semaphore_mem>>)
    %c5 = arith.constant 5 : index
    %25 = memref.load %arg0[%c5] : memref<8xi32, #tpu.memory_space<smem>>
    %c5_i32 = arith.constant 5 : i32
    %c0_i32_15 = arith.constant 0 : i32
    %26 = tpu.memref_slice %arg1[%25, %c0_i32_15] : memref<50x128xf32, #tpu.memory_space<any>> -> memref<1x128xf32, #tpu.memory_space<any>>
    %c5_i32_16 = arith.constant 5 : i32
    %c0_i32_17 = arith.constant 0 : i32
    %27 = tpu.memref_slice %arg8[%c5_i32_16, %c0_i32_17] : memref<8x128xf32, #tpu.memory_space<vmem>> -> memref<1x128xf32, #tpu.memory_space<vmem>>
    %28 = tpu.memref_slice %arg10[%c5_i32] : memref<8x!tpu.dma_semaphore, #tpu.memory_space<semaphore_mem>> -> memref<1x!tpu.dma_semaphore, #tpu.memory_space<semaphore_mem>>
    %29 = tpu.memref_squeeze %28 : memref<1x!tpu.dma_semaphore, #tpu.memory_space<semaphore_mem>> -> memref<!tpu.dma_semaphore, #tpu.memory_space<semaphore_mem>>
    tpu.enqueue_dma source(%26 : memref<1x128xf32, #tpu.memory_space<any>>) target(%27 : memref<1x128xf32, #tpu.memory_space<vmem>>) target_semaphore(%29 : memref<!tpu.dma_semaphore, #tpu.memory_space<semaphore_mem>>)
    %c6 = arith.constant 6 : index
    %30 = memref.load %arg0[%c6] : memref<8xi32, #tpu.memory_space<smem>>
    %c6_i32 = arith.constant 6 : i32
    %c0_i32_18 = arith.constant 0 : i32
    %31 = tpu.memref_slice %arg1[%30, %c0_i32_18] : memref<50x128xf32, #tpu.memory_space<any>> -> memref<1x128xf32, #tpu.memory_space<any>>
    %c6_i32_19 = arith.constant 6 : i32
    %c0_i32_20 = arith.constant 0 : i32
    %32 = tpu.memref_slice %arg8[%c6_i32_19, %c0_i32_20] : memref<8x128xf32, #tpu.memory_space<vmem>> -> memref<1x128xf32, #tpu.memory_space<vmem>>
    %33 = tpu.memref_slice %arg10[%c6_i32] : memref<8x!tpu.dma_semaphore, #tpu.memory_space<semaphore_mem>> -> memref<1x!tpu.dma_semaphore, #tpu.memory_space<semaphore_mem>>
    %34 = tpu.memref_squeeze %33 : memref<1x!tpu.dma_semaphore, #tpu.memory_space<semaphore_mem>> -> memref<!tpu.dma_semaphore, #tpu.memory_space<semaphore_mem>>
    tpu.enqueue_dma source(%31 : memref<1x128xf32, #tpu.memory_space<any>>) target(%32 : memref<1x128xf32, #tpu.memory_space<vmem>>) target_semaphore(%34 : memref<!tpu.dma_semaphore, #tpu.memory_space<semaphore_mem>>)
    %c7 = arith.constant 7 : index
    %35 = memref.load %arg0[%c7] : memref<8xi32, #tpu.memory_space<smem>>
    %c7_i32 = arith.constant 7 : i32
    %c0_i32_21 = arith.constant 0 : i32
    %36 = tpu.memref_slice %arg1[%35, %c0_i32_21] : memref<50x128xf32, #tpu.memory_space<any>> -> memref<1x128xf32, #tpu.memory_space<any>>
    %c7_i32_22 = arith.constant 7 : i32
    %c0_i32_23 = arith.constant 0 : i32
    %37 = tpu.memref_slice %arg8[%c7_i32_22, %c0_i32_23] : memref<8x128xf32, #tpu.memory_space<vmem>> -> memref<1x128xf32, #tpu.memory_space<vmem>>
    %38 = tpu.memref_slice %arg10[%c7_i32] : memref<8x!tpu.dma_semaphore, #tpu.memory_space<semaphore_mem>> -> memref<1x!tpu.dma_semaphore, #tpu.memory_space<semaphore_mem>>
    %39 = tpu.memref_squeeze %38 : memref<1x!tpu.dma_semaphore, #tpu.memory_space<semaphore_mem>> -> memref<!tpu.dma_semaphore, #tpu.memory_space<semaphore_mem>>
    tpu.enqueue_dma source(%36 : memref<1x128xf32, #tpu.memory_space<any>>) target(%37 : memref<1x128xf32, #tpu.memory_space<vmem>>) target_semaphore(%39 : memref<!tpu.dma_semaphore, #tpu.memory_space<semaphore_mem>>)
    %c0_24 = arith.constant 0 : index
    %c0_25 = arith.constant 0 : index
    %40 = vector.load %arg3[%c0_24, %c0_25] : memref<128x512xf32, #tpu.memory_space<vmem>>, vector<128x512xf32>
    %c0_i32_26 = arith.constant 0 : i32
    %c0_i32_27 = arith.constant 0 : i32
    %41 = tpu.memref_slice %arg1[%0, %c0_i32_27] : memref<50x128xf32, #tpu.memory_space<any>> -> memref<1x128xf32, #tpu.memory_space<any>>
    %c0_i32_28 = arith.constant 0 : i32
    %c0_i32_29 = arith.constant 0 : i32
    %42 = tpu.memref_slice %arg8[%c0_i32_28, %c0_i32_29] : memref<8x128xf32, #tpu.memory_space<vmem>> -> memref<1x128xf32, #tpu.memory_space<vmem>>
    %43 = tpu.memref_slice %arg10[%c0_i32_26] : memref<8x!tpu.dma_semaphore, #tpu.memory_space<semaphore_mem>> -> memref<1x!tpu.dma_semaphore, #tpu.memory_space<semaphore_mem>>
    %44 = tpu.memref_squeeze %43 : memref<1x!tpu.dma_semaphore, #tpu.memory_space<semaphore_mem>> -> memref<!tpu.dma_semaphore, #tpu.memory_space<semaphore_mem>>
    tpu.wait_dma2 semaphore(%44 : memref<!tpu.dma_semaphore, #tpu.memory_space<semaphore_mem>>) src(%41 : memref<1x128xf32, #tpu.memory_space<any>>) dst(%42 : memref<1x128xf32, #tpu.memory_space<vmem>>)
    %c1_i32_30 = arith.constant 1 : i32
    %c0_i32_31 = arith.constant 0 : i32
    %45 = tpu.memref_slice %arg1[%5, %c0_i32_31] : memref<50x128xf32, #tpu.memory_space<any>> -> memref<1x128xf32, #tpu.memory_space<any>>
    %c1_i32_32 = arith.constant 1 : i32
    %c0_i32_33 = arith.constant 0 : i32
    %46 = tpu.memref_slice %arg8[%c1_i32_32, %c0_i32_33] : memref<8x128xf32, #tpu.memory_space<vmem>> -> memref<1x128xf32, #tpu.memory_space<vmem>>
    %47 = tpu.memref_slice %arg10[%c1_i32_30] : memref<8x!tpu.dma_semaphore, #tpu.memory_space<semaphore_mem>> -> memref<1x!tpu.dma_semaphore, #tpu.memory_space<semaphore_mem>>
    %48 = tpu.memref_squeeze %47 : memref<1x!tpu.dma_semaphore, #tpu.memory_space<semaphore_mem>> -> memref<!tpu.dma_semaphore, #tpu.memory_space<semaphore_mem>>
    tpu.wait_dma2 semaphore(%48 : memref<!tpu.dma_semaphore, #tpu.memory_space<semaphore_mem>>) src(%45 : memref<1x128xf32, #tpu.memory_space<any>>) dst(%46 : memref<1x128xf32, #tpu.memory_space<vmem>>)
    %c2_i32_34 = arith.constant 2 : i32
    %c0_i32_35 = arith.constant 0 : i32
    %49 = tpu.memref_slice %arg1[%10, %c0_i32_35] : memref<50x128xf32, #tpu.memory_space<any>> -> memref<1x128xf32, #tpu.memory_space<any>>
    %c2_i32_36 = arith.constant 2 : i32
    %c0_i32_37 = arith.constant 0 : i32
    %50 = tpu.memref_slice %arg8[%c2_i32_36, %c0_i32_37] : memref<8x128xf32, #tpu.memory_space<vmem>> -> memref<1x128xf32, #tpu.memory_space<vmem>>
    %51 = tpu.memref_slice %arg10[%c2_i32_34] : memref<8x!tpu.dma_semaphore, #tpu.memory_space<semaphore_mem>> -> memref<1x!tpu.dma_semaphore, #tpu.memory_space<semaphore_mem>>
    %52 = tpu.memref_squeeze %51 : memref<1x!tpu.dma_semaphore, #tpu.memory_space<semaphore_mem>> -> memref<!tpu.dma_semaphore, #tpu.memory_space<semaphore_mem>>
    tpu.wait_dma2 semaphore(%52 : memref<!tpu.dma_semaphore, #tpu.memory_space<semaphore_mem>>) src(%49 : memref<1x128xf32, #tpu.memory_space<any>>) dst(%50 : memref<1x128xf32, #tpu.memory_space<vmem>>)
    %c3_i32_38 = arith.constant 3 : i32
    %c0_i32_39 = arith.constant 0 : i32
    %53 = tpu.memref_slice %arg1[%15, %c0_i32_39] : memref<50x128xf32, #tpu.memory_space<any>> -> memref<1x128xf32, #tpu.memory_space<any>>
    %c3_i32_40 = arith.constant 3 : i32
    %c0_i32_41 = arith.constant 0 : i32
    %54 = tpu.memref_slice %arg8[%c3_i32_40, %c0_i32_41] : memref<8x128xf32, #tpu.memory_space<vmem>> -> memref<1x128xf32, #tpu.memory_space<vmem>>
    %55 = tpu.memref_slice %arg10[%c3_i32_38] : memref<8x!tpu.dma_semaphore, #tpu.memory_space<semaphore_mem>> -> memref<1x!tpu.dma_semaphore, #tpu.memory_space<semaphore_mem>>
    %56 = tpu.memref_squeeze %55 : memref<1x!tpu.dma_semaphore, #tpu.memory_space<semaphore_mem>> -> memref<!tpu.dma_semaphore, #tpu.memory_space<semaphore_mem>>
    tpu.wait_dma2 semaphore(%56 : memref<!tpu.dma_semaphore, #tpu.memory_space<semaphore_mem>>) src(%53 : memref<1x128xf32, #tpu.memory_space<any>>) dst(%54 : memref<1x128xf32, #tpu.memory_space<vmem>>)
    %c4_i32_42 = arith.constant 4 : i32
    %c0_i32_43 = arith.constant 0 : i32
    %57 = tpu.memref_slice %arg1[%20, %c0_i32_43] : memref<50x128xf32, #tpu.memory_space<any>> -> memref<1x128xf32, #tpu.memory_space<any>>
    %c4_i32_44 = arith.constant 4 : i32
    %c0_i32_45 = arith.constant 0 : i32
    %58 = tpu.memref_slice %arg8[%c4_i32_44, %c0_i32_45] : memref<8x128xf32, #tpu.memory_space<vmem>> -> memref<1x128xf32, #tpu.memory_space<vmem>>
    %59 = tpu.memref_slice %arg10[%c4_i32_42] : memref<8x!tpu.dma_semaphore, #tpu.memory_space<semaphore_mem>> -> memref<1x!tpu.dma_semaphore, #tpu.memory_space<semaphore_mem>>
    %60 = tpu.memref_squeeze %59 : memref<1x!tpu.dma_semaphore, #tpu.memory_space<semaphore_mem>> -> memref<!tpu.dma_semaphore, #tpu.memory_space<semaphore_mem>>
    tpu.wait_dma2 semaphore(%60 : memref<!tpu.dma_semaphore, #tpu.memory_space<semaphore_mem>>) src(%57 : memref<1x128xf32, #tpu.memory_space<any>>) dst(%58 : memref<1x128xf32, #tpu.memory_space<vmem>>)
    %c5_i32_46 = arith.constant 5 : i32
    %c0_i32_47 = arith.constant 0 : i32
    %61 = tpu.memref_slice %arg1[%25, %c0_i32_47] : memref<50x128xf32, #tpu.memory_space<any>> -> memref<1x128xf32, #tpu.memory_space<any>>
    %c5_i32_48 = arith.constant 5 : i32
    %c0_i32_49 = arith.constant 0 : i32
    %62 = tpu.memref_slice %arg8[%c5_i32_48, %c0_i32_49] : memref<8x128xf32, #tpu.memory_space<vmem>> -> memref<1x128xf32, #tpu.memory_space<vmem>>
    %63 = tpu.memref_slice %arg10[%c5_i32_46] : memref<8x!tpu.dma_semaphore, #tpu.memory_space<semaphore_mem>> -> memref<1x!tpu.dma_semaphore, #tpu.memory_space<semaphore_mem>>
    %64 = tpu.memref_squeeze %63 : memref<1x!tpu.dma_semaphore, #tpu.memory_space<semaphore_mem>> -> memref<!tpu.dma_semaphore, #tpu.memory_space<semaphore_mem>>
    tpu.wait_dma2 semaphore(%64 : memref<!tpu.dma_semaphore, #tpu.memory_space<semaphore_mem>>) src(%61 : memref<1x128xf32, #tpu.memory_space<any>>) dst(%62 : memref<1x128xf32, #tpu.memory_space<vmem>>)
    %c6_i32_50 = arith.constant 6 : i32
    %c0_i32_51 = arith.constant 0 : i32
    %65 = tpu.memref_slice %arg1[%30, %c0_i32_51] : memref<50x128xf32, #tpu.memory_space<any>> -> memref<1x128xf32, #tpu.memory_space<any>>
    %c6_i32_52 = arith.constant 6 : i32
    %c0_i32_53 = arith.constant 0 : i32
    %66 = tpu.memref_slice %arg8[%c6_i32_52, %c0_i32_53] : memref<8x128xf32, #tpu.memory_space<vmem>> -> memref<1x128xf32, #tpu.memory_space<vmem>>
    %67 = tpu.memref_slice %arg10[%c6_i32_50] : memref<8x!tpu.dma_semaphore, #tpu.memory_space<semaphore_mem>> -> memref<1x!tpu.dma_semaphore, #tpu.memory_space<semaphore_mem>>
    %68 = tpu.memref_squeeze %67 : memref<1x!tpu.dma_semaphore, #tpu.memory_space<semaphore_mem>> -> memref<!tpu.dma_semaphore, #tpu.memory_space<semaphore_mem>>
    tpu.wait_dma2 semaphore(%68 : memref<!tpu.dma_semaphore, #tpu.memory_space<semaphore_mem>>) src(%65 : memref<1x128xf32, #tpu.memory_space<any>>) dst(%66 : memref<1x128xf32, #tpu.memory_space<vmem>>)
    %c7_i32_54 = arith.constant 7 : i32
    %c0_i32_55 = arith.constant 0 : i32
    %69 = tpu.memref_slice %arg1[%35, %c0_i32_55] : memref<50x128xf32, #tpu.memory_space<any>> -> memref<1x128xf32, #tpu.memory_space<any>>
    %c7_i32_56 = arith.constant 7 : i32
    %c0_i32_57 = arith.constant 0 : i32
    %70 = tpu.memref_slice %arg8[%c7_i32_56, %c0_i32_57] : memref<8x128xf32, #tpu.memory_space<vmem>> -> memref<1x128xf32, #tpu.memory_space<vmem>>
    %71 = tpu.memref_slice %arg10[%c7_i32_54] : memref<8x!tpu.dma_semaphore, #tpu.memory_space<semaphore_mem>> -> memref<1x!tpu.dma_semaphore, #tpu.memory_space<semaphore_mem>>
    %72 = tpu.memref_squeeze %71 : memref<1x!tpu.dma_semaphore, #tpu.memory_space<semaphore_mem>> -> memref<!tpu.dma_semaphore, #tpu.memory_space<semaphore_mem>>
    tpu.wait_dma2 semaphore(%72 : memref<!tpu.dma_semaphore, #tpu.memory_space<semaphore_mem>>) src(%69 : memref<1x128xf32, #tpu.memory_space<any>>) dst(%70 : memref<1x128xf32, #tpu.memory_space<vmem>>)
    %c0_58 = arith.constant 0 : index
    %c0_59 = arith.constant 0 : index
    %73 = vector.load %arg8[%c0_58, %c0_59] : memref<8x128xf32, #tpu.memory_space<vmem>>, vector<8x128xf32>
    %c0_60 = arith.constant 0 : index
    %c0_61 = arith.constant 0 : index
    %74 = vector.load %arg2[%c0_60, %c0_61] : memref<128x512xf32, #tpu.memory_space<vmem>>, vector<128x512xf32>
    %cst = arith.constant dense<0.000000e+00> : vector<8x512xf32>
    %75 = tpu.matmul %73, %74, %cst {dimension_numbers = #tpu.dot_dimension_numbers<[1], [0], [0], [1], [0, 0, 1, 1], [], []>} : vector<8x128xf32>, vector<128x512xf32>, vector<8x512xf32> -> vector<8x512xf32>
    %c0_62 = arith.constant 0 : index
    %c0_63 = arith.constant 0 : index
    %76 = vector.load %arg4[%c0_62, %c0_63] : memref<1x512xf32, #tpu.memory_space<vmem>>, vector<1x512xf32>
    %77 = vector.broadcast %76 : vector<1x512xf32> to vector<8x512xf32>
    %78 = arith.addf %75, %77 : vector<8x512xf32>
    %79 = vector.extract_strided_slice %78 {offsets = [0, 0], sizes = [1, 512], strides = [1, 1]} : vector<8x512xf32> to vector<1x512xf32>
    %80 = arith.negf %79 : vector<1x512xf32>
    %81 = math.exp %80 : vector<1x512xf32>
    %cst_64 = arith.constant 1.000000e+00 : f32
    %82 = vector.broadcast %cst_64 : f32 to vector<1x512xf32>
    %83 = arith.addf %82, %81 : vector<1x512xf32>
    %84 = arith.divf %82, %83 : vector<1x512xf32>
    %85 = vector.extract_strided_slice %79 {offsets = [0, 256], sizes = [1, 128], strides = [1, 1]} : vector<1x512xf32> to vector<1x128xf32>
    %86 = math.tanh %85 : vector<1x128xf32>
    %87 = vector.extract_strided_slice %84 {offsets = [0, 0], sizes = [1, 128], strides = [1, 1]} : vector<1x512xf32> to vector<1x128xf32>
    %88 = vector.extract_strided_slice %84 {offsets = [0, 384], sizes = [1, 128], strides = [1, 1]} : vector<1x512xf32> to vector<1x128xf32>
    %89 = arith.mulf %87, %86 : vector<1x128xf32>
    %90 = math.tanh %89 : vector<1x128xf32>
    %91 = arith.mulf %88, %90 : vector<1x128xf32>
    %c0_65 = arith.constant 0 : index
    %c0_66 = arith.constant 0 : index
    %92 = vector.load %arg9[%c0_65, %c0_66] : memref<8x128xf32, #tpu.memory_space<vmem>>, vector<1x128xf32>
    tpu.vector_store %arg9[%c0_65, %c0_66], %91 {strides = array<i32>} : memref<8x128xf32, #tpu.memory_space<vmem>>, vector<1x128xf32>,
    %93 = vector.extract_strided_slice %78 {offsets = [1, 0], sizes = [1, 512], strides = [1, 1]} : vector<8x512xf32> to vector<1x512xf32>
    %cst_67 = arith.constant dense<0.000000e+00> : vector<1x512xf32>
    %94 = tpu.matmul %91, %40, %cst_67 {dimension_numbers = #tpu.dot_dimension_numbers<[1], [0], [0], [1], [0, 0, 1, 1], [], []>} : vector<1x128xf32>, vector<128x512xf32>, vector<1x512xf32> -> vector<1x512xf32>
    %95 = arith.addf %93, %94 : vector<1x512xf32>
    %96 = arith.negf %95 : vector<1x512xf32>
    %97 = math.exp %96 : vector<1x512xf32>
    %cst_68 = arith.constant 1.000000e+00 : f32
    %98 = vector.broadcast %cst_68 : f32 to vector<1x512xf32>
    %99 = arith.addf %98, %97 : vector<1x512xf32>
    %100 = arith.divf %98, %99 : vector<1x512xf32>
    %101 = vector.extract_strided_slice %95 {offsets = [0, 256], sizes = [1, 128], strides = [1, 1]} : vector<1x512xf32> to vector<1x128xf32>
    %102 = math.tanh %101 : vector<1x128xf32>
    %103 = vector.extract_strided_slice %100 {offsets = [0, 0], sizes = [1, 128], strides = [1, 1]} : vector<1x512xf32> to vector<1x128xf32>
    %104 = vector.extract_strided_slice %100 {offsets = [0, 128], sizes = [1, 128], strides = [1, 1]} : vector<1x512xf32> to vector<1x128xf32>
    %105 = vector.extract_strided_slice %100 {offsets = [0, 384], sizes = [1, 128], strides = [1, 1]} : vector<1x512xf32> to vector<1x128xf32>
    %106 = arith.mulf %104, %89 : vector<1x128xf32>
    %107 = arith.mulf %103, %102 : vector<1x128xf32>
    %108 = arith.addf %106, %107 : vector<1x128xf32>
    %109 = math.tanh %108 : vector<1x128xf32>
    %110 = arith.mulf %105, %109 : vector<1x128xf32>
    %c1_69 = arith.constant 1 : index
    %c0_70 = arith.constant 0 : index
    %111 = vector.load %arg9[%c1_69, %c0_70] : memref<8x128xf32, #tpu.memory_space<vmem>>, vector<1x128xf32>
    tpu.vector_store %arg9[%c1_69, %c0_70], %110 {strides = array<i32>} : memref<8x128xf32, #tpu.memory_space<vmem>>, vector<1x128xf32>,
    %112 = vector.extract_strided_slice %78 {offsets = [2, 0], sizes = [1, 512], strides = [1, 1]} : vector<8x512xf32> to vector<1x512xf32>
    %cst_71 = arith.constant dense<0.000000e+00> : vector<1x512xf32>
    %113 = tpu.matmul %110, %40, %cst_71 {dimension_numbers = #tpu.dot_dimension_numbers<[1], [0], [0], [1], [0, 0, 1, 1], [], []>} : vector<1x128xf32>, vector<128x512xf32>, vector<1x512xf32> -> vector<1x512xf32>
    %114 = arith.addf %112, %113 : vector<1x512xf32>
    %115 = arith.negf %114 : vector<1x512xf32>
    %116 = math.exp %115 : vector<1x512xf32>
    %cst_72 = arith.constant 1.000000e+00 : f32
    %117 = vector.broadcast %cst_72 : f32 to vector<1x512xf32>
    %118 = arith.addf %117, %116 : vector<1x512xf32>
    %119 = arith.divf %117, %118 : vector<1x512xf32>
    %120 = vector.extract_strided_slice %114 {offsets = [0, 256], sizes = [1, 128], strides = [1, 1]} : vector<1x512xf32> to vector<1x128xf32>
    %121 = math.tanh %120 : vector<1x128xf32>
    %122 = vector.extract_strided_slice %119 {offsets = [0, 0], sizes = [1, 128], strides = [1, 1]} : vector<1x512xf32> to vector<1x128xf32>
    %123 = vector.extract_strided_slice %119 {offsets = [0, 128], sizes = [1, 128], strides = [1, 1]} : vector<1x512xf32> to vector<1x128xf32>
    %124 = vector.extract_strided_slice %119 {offsets = [0, 384], sizes = [1, 128], strides = [1, 1]} : vector<1x512xf32> to vector<1x128xf32>
    %125 = arith.mulf %123, %108 : vector<1x128xf32>
    %126 = arith.mulf %122, %121 : vector<1x128xf32>
    %127 = arith.addf %125, %126 : vector<1x128xf32>
    %128 = math.tanh %127 : vector<1x128xf32>
    %129 = arith.mulf %124, %128 : vector<1x128xf32>
    %c2_73 = arith.constant 2 : index
    %c0_74 = arith.constant 0 : index
    %130 = vector.load %arg9[%c2_73, %c0_74] : memref<8x128xf32, #tpu.memory_space<vmem>>, vector<1x128xf32>
    tpu.vector_store %arg9[%c2_73, %c0_74], %129 {strides = array<i32>} : memref<8x128xf32, #tpu.memory_space<vmem>>, vector<1x128xf32>,
    %131 = vector.extract_strided_slice %78 {offsets = [3, 0], sizes = [1, 512], strides = [1, 1]} : vector<8x512xf32> to vector<1x512xf32>
    %cst_75 = arith.constant dense<0.000000e+00> : vector<1x512xf32>
    %132 = tpu.matmul %129, %40, %cst_75 {dimension_numbers = #tpu.dot_dimension_numbers<[1], [0], [0], [1], [0, 0, 1, 1], [], []>} : vector<1x128xf32>, vector<128x512xf32>, vector<1x512xf32> -> vector<1x512xf32>
    %133 = arith.addf %131, %132 : vector<1x512xf32>
    %134 = arith.negf %133 : vector<1x512xf32>
    %135 = math.exp %134 : vector<1x512xf32>
    %cst_76 = arith.constant 1.000000e+00 : f32
    %136 = vector.broadcast %cst_76 : f32 to vector<1x512xf32>
    %137 = arith.addf %136, %135 : vector<1x512xf32>
    %138 = arith.divf %136, %137 : vector<1x512xf32>
    %139 = vector.extract_strided_slice %133 {offsets = [0, 256], sizes = [1, 128], strides = [1, 1]} : vector<1x512xf32> to vector<1x128xf32>
    %140 = math.tanh %139 : vector<1x128xf32>
    %141 = vector.extract_strided_slice %138 {offsets = [0, 0], sizes = [1, 128], strides = [1, 1]} : vector<1x512xf32> to vector<1x128xf32>
    %142 = vector.extract_strided_slice %138 {offsets = [0, 128], sizes = [1, 128], strides = [1, 1]} : vector<1x512xf32> to vector<1x128xf32>
    %143 = vector.extract_strided_slice %138 {offsets = [0, 384], sizes = [1, 128], strides = [1, 1]} : vector<1x512xf32> to vector<1x128xf32>
    %144 = arith.mulf %142, %127 : vector<1x128xf32>
    %145 = arith.mulf %141, %140 : vector<1x128xf32>
    %146 = arith.addf %144, %145 : vector<1x128xf32>
    %147 = math.tanh %146 : vector<1x128xf32>
    %148 = arith.mulf %143, %147 : vector<1x128xf32>
    %c3_77 = arith.constant 3 : index
    %c0_78 = arith.constant 0 : index
    %149 = vector.load %arg9[%c3_77, %c0_78] : memref<8x128xf32, #tpu.memory_space<vmem>>, vector<1x128xf32>
    tpu.vector_store %arg9[%c3_77, %c0_78], %148 {strides = array<i32>} : memref<8x128xf32, #tpu.memory_space<vmem>>, vector<1x128xf32>,
    %150 = vector.extract_strided_slice %78 {offsets = [4, 0], sizes = [1, 512], strides = [1, 1]} : vector<8x512xf32> to vector<1x512xf32>
    %cst_79 = arith.constant dense<0.000000e+00> : vector<1x512xf32>
    %151 = tpu.matmul %148, %40, %cst_79 {dimension_numbers = #tpu.dot_dimension_numbers<[1], [0], [0], [1], [0, 0, 1, 1], [], []>} : vector<1x128xf32>, vector<128x512xf32>, vector<1x512xf32> -> vector<1x512xf32>
    %152 = arith.addf %150, %151 : vector<1x512xf32>
    %153 = arith.negf %152 : vector<1x512xf32>
    %154 = math.exp %153 : vector<1x512xf32>
    %cst_80 = arith.constant 1.000000e+00 : f32
    %155 = vector.broadcast %cst_80 : f32 to vector<1x512xf32>
    %156 = arith.addf %155, %154 : vector<1x512xf32>
    %157 = arith.divf %155, %156 : vector<1x512xf32>
    %158 = vector.extract_strided_slice %152 {offsets = [0, 256], sizes = [1, 128], strides = [1, 1]} : vector<1x512xf32> to vector<1x128xf32>
    %159 = math.tanh %158 : vector<1x128xf32>
    %160 = vector.extract_strided_slice %157 {offsets = [0, 0], sizes = [1, 128], strides = [1, 1]} : vector<1x512xf32> to vector<1x128xf32>
    %161 = vector.extract_strided_slice %157 {offsets = [0, 128], sizes = [1, 128], strides = [1, 1]} : vector<1x512xf32> to vector<1x128xf32>
    %162 = vector.extract_strided_slice %157 {offsets = [0, 384], sizes = [1, 128], strides = [1, 1]} : vector<1x512xf32> to vector<1x128xf32>
    %163 = arith.mulf %161, %146 : vector<1x128xf32>
    %164 = arith.mulf %160, %159 : vector<1x128xf32>
    %165 = arith.addf %163, %164 : vector<1x128xf32>
    %166 = math.tanh %165 : vector<1x128xf32>
    %167 = arith.mulf %162, %166 : vector<1x128xf32>
    %c4_81 = arith.constant 4 : index
    %c0_82 = arith.constant 0 : index
    %168 = vector.load %arg9[%c4_81, %c0_82] : memref<8x128xf32, #tpu.memory_space<vmem>>, vector<1x128xf32>
    tpu.vector_store %arg9[%c4_81, %c0_82], %167 {strides = array<i32>} : memref<8x128xf32, #tpu.memory_space<vmem>>, vector<1x128xf32>,
    %169 = vector.extract_strided_slice %78 {offsets = [5, 0], sizes = [1, 512], strides = [1, 1]} : vector<8x512xf32> to vector<1x512xf32>
    %cst_83 = arith.constant dense<0.000000e+00> : vector<1x512xf32>
    %170 = tpu.matmul %167, %40, %cst_83 {dimension_numbers = #tpu.dot_dimension_numbers<[1], [0], [0], [1], [0, 0, 1, 1], [], []>} : vector<1x128xf32>, vector<128x512xf32>, vector<1x512xf32> -> vector<1x512xf32>
    %171 = arith.addf %169, %170 : vector<1x512xf32>
    %172 = arith.negf %171 : vector<1x512xf32>
    %173 = math.exp %172 : vector<1x512xf32>
    %cst_84 = arith.constant 1.000000e+00 : f32
    %174 = vector.broadcast %cst_84 : f32 to vector<1x512xf32>
    %175 = arith.addf %174, %173 : vector<1x512xf32>
    %176 = arith.divf %174, %175 : vector<1x512xf32>
    %177 = vector.extract_strided_slice %171 {offsets = [0, 256], sizes = [1, 128], strides = [1, 1]} : vector<1x512xf32> to vector<1x128xf32>
    %178 = math.tanh %177 : vector<1x128xf32>
    %179 = vector.extract_strided_slice %176 {offsets = [0, 0], sizes = [1, 128], strides = [1, 1]} : vector<1x512xf32> to vector<1x128xf32>
    %180 = vector.extract_strided_slice %176 {offsets = [0, 128], sizes = [1, 128], strides = [1, 1]} : vector<1x512xf32> to vector<1x128xf32>
    %181 = vector.extract_strided_slice %176 {offsets = [0, 384], sizes = [1, 128], strides = [1, 1]} : vector<1x512xf32> to vector<1x128xf32>
    %182 = arith.mulf %180, %165 : vector<1x128xf32>
    %183 = arith.mulf %179, %178 : vector<1x128xf32>
    %184 = arith.addf %182, %183 : vector<1x128xf32>
    %185 = math.tanh %184 : vector<1x128xf32>
    %186 = arith.mulf %181, %185 : vector<1x128xf32>
    %c5_85 = arith.constant 5 : index
    %c0_86 = arith.constant 0 : index
    %187 = vector.load %arg9[%c5_85, %c0_86] : memref<8x128xf32, #tpu.memory_space<vmem>>, vector<1x128xf32>
    tpu.vector_store %arg9[%c5_85, %c0_86], %186 {strides = array<i32>} : memref<8x128xf32, #tpu.memory_space<vmem>>, vector<1x128xf32>,
    %188 = vector.extract_strided_slice %78 {offsets = [6, 0], sizes = [1, 512], strides = [1, 1]} : vector<8x512xf32> to vector<1x512xf32>
    %cst_87 = arith.constant dense<0.000000e+00> : vector<1x512xf32>
    %189 = tpu.matmul %186, %40, %cst_87 {dimension_numbers = #tpu.dot_dimension_numbers<[1], [0], [0], [1], [0, 0, 1, 1], [], []>} : vector<1x128xf32>, vector<128x512xf32>, vector<1x512xf32> -> vector<1x512xf32>
    %190 = arith.addf %188, %189 : vector<1x512xf32>
    %191 = arith.negf %190 : vector<1x512xf32>
    %192 = math.exp %191 : vector<1x512xf32>
    %cst_88 = arith.constant 1.000000e+00 : f32
    %193 = vector.broadcast %cst_88 : f32 to vector<1x512xf32>
    %194 = arith.addf %193, %192 : vector<1x512xf32>
    %195 = arith.divf %193, %194 : vector<1x512xf32>
    %196 = vector.extract_strided_slice %190 {offsets = [0, 256], sizes = [1, 128], strides = [1, 1]} : vector<1x512xf32> to vector<1x128xf32>
    %197 = math.tanh %196 : vector<1x128xf32>
    %198 = vector.extract_strided_slice %195 {offsets = [0, 0], sizes = [1, 128], strides = [1, 1]} : vector<1x512xf32> to vector<1x128xf32>
    %199 = vector.extract_strided_slice %195 {offsets = [0, 128], sizes = [1, 128], strides = [1, 1]} : vector<1x512xf32> to vector<1x128xf32>
    %200 = vector.extract_strided_slice %195 {offsets = [0, 384], sizes = [1, 128], strides = [1, 1]} : vector<1x512xf32> to vector<1x128xf32>
    %201 = arith.mulf %199, %184 : vector<1x128xf32>
    %202 = arith.mulf %198, %197 : vector<1x128xf32>
    %203 = arith.addf %201, %202 : vector<1x128xf32>
    %204 = math.tanh %203 : vector<1x128xf32>
    %205 = arith.mulf %200, %204 : vector<1x128xf32>
    %c6_89 = arith.constant 6 : index
    %c0_90 = arith.constant 0 : index
    %206 = vector.load %arg9[%c6_89, %c0_90] : memref<8x128xf32, #tpu.memory_space<vmem>>, vector<1x128xf32>
    tpu.vector_store %arg9[%c6_89, %c0_90], %205 {strides = array<i32>} : memref<8x128xf32, #tpu.memory_space<vmem>>, vector<1x128xf32>,
    %207 = vector.extract_strided_slice %78 {offsets = [7, 0], sizes = [1, 512], strides = [1, 1]} : vector<8x512xf32> to vector<1x512xf32>
    %cst_91 = arith.constant dense<0.000000e+00> : vector<1x512xf32>
    %208 = tpu.matmul %205, %40, %cst_91 {dimension_numbers = #tpu.dot_dimension_numbers<[1], [0], [0], [1], [0, 0, 1, 1], [], []>} : vector<1x128xf32>, vector<128x512xf32>, vector<1x512xf32> -> vector<1x512xf32>
    %209 = arith.addf %207, %208 : vector<1x512xf32>
    %210 = arith.negf %209 : vector<1x512xf32>
    %211 = math.exp %210 : vector<1x512xf32>
    %cst_92 = arith.constant 1.000000e+00 : f32
    %212 = vector.broadcast %cst_92 : f32 to vector<1x512xf32>
    %213 = arith.addf %212, %211 : vector<1x512xf32>
    %214 = arith.divf %212, %213 : vector<1x512xf32>
    %215 = vector.extract_strided_slice %209 {offsets = [0, 256], sizes = [1, 128], strides = [1, 1]} : vector<1x512xf32> to vector<1x128xf32>
    %216 = math.tanh %215 : vector<1x128xf32>
    %217 = vector.extract_strided_slice %214 {offsets = [0, 0], sizes = [1, 128], strides = [1, 1]} : vector<1x512xf32> to vector<1x128xf32>
    %218 = vector.extract_strided_slice %214 {offsets = [0, 128], sizes = [1, 128], strides = [1, 1]} : vector<1x512xf32> to vector<1x128xf32>
    %219 = vector.extract_strided_slice %214 {offsets = [0, 384], sizes = [1, 128], strides = [1, 1]} : vector<1x512xf32> to vector<1x128xf32>
    %220 = arith.mulf %218, %203 : vector<1x128xf32>
    %221 = arith.mulf %217, %216 : vector<1x128xf32>
    %222 = arith.addf %220, %221 : vector<1x128xf32>
    %223 = math.tanh %222 : vector<1x128xf32>
    %224 = arith.mulf %219, %223 : vector<1x128xf32>
    %c7_93 = arith.constant 7 : index
    %c0_94 = arith.constant 0 : index
    %225 = vector.load %arg9[%c7_93, %c0_94] : memref<8x128xf32, #tpu.memory_space<vmem>>, vector<1x128xf32>
    tpu.vector_store %arg9[%c7_93, %c0_94], %224 {strides = array<i32>} : memref<8x128xf32, #tpu.memory_space<vmem>>, vector<1x128xf32>,
    %c0_95 = arith.constant 0 : index
    %c0_96 = arith.constant 0 : index
    %226 = vector.load %arg9[%c0_95, %c0_96] : memref<8x128xf32, #tpu.memory_space<vmem>>, vector<8x128xf32>
    %c0_97 = arith.constant 0 : index
    %c0_98 = arith.constant 0 : index
    %227 = vector.load %arg5[%c0_97, %c0_98] : memref<128x8xf32, #tpu.memory_space<vmem>>, vector<128x8xf32>
    %cst_99 = arith.constant dense<0.000000e+00> : vector<8x8xf32>
    %228 = tpu.matmul %226, %227, %cst_99 {dimension_numbers = #tpu.dot_dimension_numbers<[1], [0], [0], [1], [0, 0, 1, 1], [], []>} : vector<8x128xf32>, vector<128x8xf32>, vector<8x8xf32> -> vector<8x8xf32>
    %c0_100 = arith.constant 0 : index
    %c0_101 = arith.constant 0 : index
    %229 = vector.load %arg6[%c0_100, %c0_101] : memref<1x8xf32, #tpu.memory_space<vmem>>, vector<1x8xf32>
    %230 = vector.broadcast %229 : vector<1x8xf32> to vector<8x8xf32>
    %231 = arith.addf %228, %230 : vector<8x8xf32>
    %cst_102 = arith.constant dense<0xFF800000> : vector<8xf32>
    %232 = vector.multi_reduction <maximumf>, %231, %cst_102 [1] : vector<8x8xf32> to vector<8xf32>
    %233 = vector.shape_cast %232 : vector<8xf32> to vector<8x1xf32>
    %234 = vector.broadcast %233 : vector<8x1xf32> to vector<8x8xf32>
    %235 = arith.subf %231, %234 : vector<8x8xf32>
    %236 = math.exp %235 : vector<8x8xf32>
    %cst_103 = arith.constant dense<0.000000e+00> : vector<8xf32>
    %237 = vector.multi_reduction <add>, %236, %cst_103 [1] : vector<8x8xf32> to vector<8xf32>
    %238 = vector.shape_cast %237 : vector<8xf32> to vector<8x1xf32>
    %239 = math.log %238 : vector<8x1xf32>
    %240 = arith.addf %233, %239 : vector<8x1xf32>
    %241 = vector.broadcast %240 : vector<8x1xf32> to vector<8x8xf32>
    %242 = arith.subf %231, %241 : vector<8x8xf32>
    %c0_104 = arith.constant 0 : index
    %c0_105 = arith.constant 0 : index
    %243 = vector.load %arg7[%c0_104, %c0_105] : memref<8x8xf32, #tpu.memory_space<vmem>>, vector<8x8xf32>
    tpu.vector_store %arg7[%c0_104, %c0_105], %242 {strides = array<i32>} : memref<8x8xf32, #tpu.memory_space<vmem>>, vector<8x8xf32>,
    return
  }
}

</mosaic_0001>

<llo_original>
// kernel: tpu_custom_call.1
$region0: #{tpu_custom_call.1}
  #allocation0 [shape = 'u32[]', space=smem, size = 0x4, offset = 0x4, fixed_abs, tag = 'smem constant byte address 0x4 - core index']
  #allocation1 [shape = 'u32[144,128]{1,0:T(1,128)}', space=vmem, size = 0x12000, scoped, tag = 'internal scratch']
  #allocation2 [shape = 'f32[8,128]{1,0:T(8,128)}', space=vmem, size = 0x1000, scoped, tag = 'scratch operand']
  #allocation3 [shape = 'f32[8,128]{1,0:T(8,128)}', space=vmem, size = 0x1000, scoped, tag = 'scratch operand']
  #allocation4 [shape = 's32[8]{0}', space=sflag, size = 0x20, scoped, tag = 'scratch operand']
  #allocation13 [shape = 's32[]', space=sflag, size = 0x4, offset = 0, fixed_abs, tag = 'sflag constant byte address 0x0 - dummy sync flag']
  #allocation14 [shape = 's32[]', space=sflag, size = 0x4, offset = 0, fixed_abs, tag = 'sflag constant byte address 0x0 - dummy sync flag']
  #allocation15 [shape = 's32[]', space=sflag, size = 0x4, offset = 0, fixed_abs, tag = 'sflag constant byte address 0x0 - dummy sync flag']
  #allocation16 [shape = 's32[]', space=sflag, size = 0x4, offset = 0, fixed_abs, tag = 'sflag constant byte address 0x0 - dummy sync flag']
  #allocation17 [shape = 's32[]', space=sflag, size = 0x4, offset = 0, fixed_abs, tag = 'sflag constant byte address 0x0 - dummy sync flag']
  #allocation18 [shape = 's32[]', space=sflag, size = 0x4, offset = 0, fixed_abs, tag = 'sflag constant byte address 0x0 - dummy sync flag']
  #allocation19 [shape = 's32[]', space=sflag, size = 0x4, offset = 0, fixed_abs, tag = 'sflag constant byte address 0x0 - dummy sync flag']
  #allocation20 [shape = 's32[]', space=sflag, size = 0x4, offset = 0, fixed_abs, tag = 'sflag constant byte address 0x0 - dummy sync flag']
  %s0 = inlined_call_operand.vmem [shape: s32[8], index: 0, kind: input, shape index: {}]
  %s1 = inlined_call_operand.vmem [shape: f32[50,128], index: 1, kind: input, shape index: {}]
  %s2 = inlined_call_operand.hbm [shape: f32[128,512], index: 2, kind: input, shape index: {}]
  %s3 = inlined_call_operand.hbm [shape: f32[128,512], index: 3, kind: input, shape index: {}]
  %s4 = inlined_call_operand.vmem [shape: f32[1,512], index: 4, kind: input, shape index: {}]
  %s5 = inlined_call_operand.vmem [shape: f32[128,8], index: 5, kind: input, shape index: {}]
  %s6 = inlined_call_operand.vmem [shape: f32[1,8], index: 6, kind: input, shape index: {}]
  %s7 = inlined_call_operand.hbm [shape: f32[8,8], index: 7, kind: output, shape index: {}]
  %s8 = sld [smem:[#allocation0]]
  $region286: #{tpu_custom_call.1} parent=0
    _
  %s10 = ssub.s32 1, %s8
  %s11 = scalar_select 0, %s10, %s8
  $region1: #{tpu_custom_call.1} parent=0
    #allocation5 [shape = 'u8[512]{0}', space=smem, size = 0x200, scoped, tag = 'input window, operand 0, single buffered']
    #allocation6 [shape = 's32[1]{0}', space=sflag, size = 0x4, scoped, tag = 'scoped memory for tpu_custom_call.1']
    #allocation7 [shape = 's32[1]{0}', space=sflag, size = 0x4, scoped, tag = 'scoped memory for tpu_custom_call.1']
    #allocation8 [shape = 's32[1]{0}', space=sflag, size = 0x4, scoped, tag = 'scoped memory for tpu_custom_call.1']
    #allocation9 [shape = 'u8[262144]{0}', space=vmem, size = 0x40000, scoped, tag = 'input window, operand 2, single buffered']
    #allocation10 [shape = 'u8[262144]{0}', space=vmem, size = 0x40000, scoped, tag = 'input window, operand 3, single buffered']
    #allocation11 [shape = 's32[1]{0}', space=sflag, size = 0x4, scoped, tag = 'scoped memory for tpu_custom_call.1']
    #allocation12 [shape = 'u8[4096]{0}', space=vmem, size = 0x1000, scoped, tag = 'output window, operand 0, single buffered']
    %12 = vsyncpa [#allocation8], 0
    %13 = vsyncpa [#allocation6], 0
    %14 = vsyncpa [#allocation11], 0
    %15 = vsyncpa [#allocation7], 0
    // Predicated region
    $region2: #{tpu_custom_call.1} parent=1 // pred_check
      _
    $region3: #{tpu_custom_call.1} parent=1 // pred_check_branch
      %17 = sbr.rel (0) target = $region5
    $region4: #{tpu_custom_call.1} parent=1 // pred_region
      %s19 = ssub.s32 16, 16
      %20 = vsyncadd [#allocation8], %s19
      %s22 = sshll.u32 %s0, 4
      %s23 = int_to_ptr.vmem [resolvable:$true] %s22
      %25 = dma.vmem_to_smem %s23, 16, [#allocation5], [#allocation8]
    $region5: #{tpu_custom_call.1} parent=1 // pred_fallthru
      _
    // Predicated region
    $region6: #{tpu_custom_call.1} parent=1 // pred_check
      _
    $region7: #{tpu_custom_call.1} parent=1 // pred_check_branch
      %27 = sbr.rel (0) target = $region9
    $region8: #{tpu_custom_call.1} parent=1 // pred_region
      %s29 = ssub.s32 8192, 8192
      %30 = vsyncadd [#allocation6], %s29
      %s31 = sshll.u32 [#allocation9], 4
      %s32 = int_to_ptr.vmem [resolvable:$true] %s31
      %37 = dma.hbm_to_vmem [thread:$0]  %s2, 8192, %s32, [#allocation6], 512, 512, 32
    $region9: #{tpu_custom_call.1} parent=1 // pred_fallthru
      _
    // Predicated region
    $region10: #{tpu_custom_call.1} parent=1 // pred_check
      _
    $region11: #{tpu_custom_call.1} parent=1 // pred_check_branch
      %39 = sbr.rel (0) target = $region13
    $region12: #{tpu_custom_call.1} parent=1 // pred_region
      %s41 = ssub.s32 8192, 8192
      %42 = vsyncadd [#allocation11], %s41
      %s43 = sshll.u32 [#allocation10], 4
      %s44 = int_to_ptr.vmem [resolvable:$true] %s43
      %49 = dma.hbm_to_vmem [thread:$0]  %s3, 8192, %s44, [#allocation11], 512, 512, 32
    $region13: #{tpu_custom_call.1} parent=1 // pred_fallthru
      _
    // Predicated region
    $region14: #{tpu_custom_call.1} parent=1 // pred_check
      _
    $region15: #{tpu_custom_call.1} parent=1 // pred_check_branch
      %51 = sbr.rel (0) target = $region17
    $region16: #{tpu_custom_call.1} parent=1 // pred_region
      _
    $region17: #{tpu_custom_call.1} parent=1 // pred_fallthru
      _
    // Predicated region
    $region18: #{tpu_custom_call.1} parent=1 // pred_check
      _
    $region19: #{tpu_custom_call.1} parent=1 // pred_check_branch
      %53 = sbr.rel (0) target = $region21
    $region20: #{tpu_custom_call.1} parent=1 // pred_region
      _
    $region21: #{tpu_custom_call.1} parent=1 // pred_fallthru
      _
    // Predicated region
    $region22: #{tpu_custom_call.1} parent=1 // pred_check
      _
    $region23: #{tpu_custom_call.1} parent=1 // pred_check_branch
      %55 = sbr.rel (0) target = $region25
    $region24: #{tpu_custom_call.1} parent=1 // pred_region
      _
    $region25: #{tpu_custom_call.1} parent=1 // pred_fallthru
      _
    // Predicated region
    $region26: #{tpu_custom_call.1} parent=1 // pred_check
      _
    $region27: #{tpu_custom_call.1} parent=1 // pred_check_branch
      %57 = sbr.rel (0) target = $region29
    $region28: #{tpu_custom_call.1} parent=1 // pred_region
      %58 = dma.done [#allocation8], 16
    $region29: #{tpu_custom_call.1} parent=1 // pred_fallthru
      _
    // Predicated region
    $region30: #{tpu_custom_call.1} parent=1 // pred_check
      _
    $region31: #{tpu_custom_call.1} parent=1 // pred_check_branch
      %60 = sbr.rel (0) target = $region33
    $region32: #{tpu_custom_call.1} parent=1 // pred_region
      %61 = dma.done [#allocation6], 8192
    $region33: #{tpu_custom_call.1} parent=1 // pred_fallthru
      _
    // Predicated region
    $region34: #{tpu_custom_call.1} parent=1 // pred_check
      _
    $region35: #{tpu_custom_call.1} parent=1 // pred_check_branch
      %63 = sbr.rel (0) target = $region37
    $region36: #{tpu_custom_call.1} parent=1 // pred_region
      %64 = dma.done [#allocation11], 8192
    $region37: #{tpu_custom_call.1} parent=1 // pred_fallthru
      _
    %65 = sfence
    %s66 = sld [smem:[#allocation5]]
    %s67 = scalar_lea.vmem %s1, %s66
    %p69 = scmp.lt.u32.totalorder 1, 8
    %p70 = pneg %p69
    // Predicated region
    $region38: #{tpu_custom_call.1} parent=1 // pred_check
      _
    $region39: #{tpu_custom_call.1} parent=1 // pred_check_branch
      %72 = sbr.rel (%p69) target = $region41
    $region40: #{tpu_custom_call.1} parent=1 // pred_region
      %s87 = sand.u32 1, 7
      %p88 = scmp.eq.s32.totalorder %s87, 0
      %p89 = pneg %p88
      // Predicated region
      $region53: #{tpu_custom_call.1} parent=40 // pred_check
        _
      $region54: #{tpu_custom_call.1} parent=40 // pred_check_branch
        %91 = sbr.rel (%p88) target = $region56
      $region55: #{tpu_custom_call.1} parent=40 // pred_region
        %s92 = sand.u32 1, 7
        %s93 = ssub.s32 1, %s92
        %s94 = scalar_lea.vmem %s67, %s93
        %s95 = ssub.s32 1, %s92
        %s96 = scalar_lea.vmem [#allocation2], %s95
        %s97 = sshllo.u32 0, %s92
        loop: start=0, step=1, limit=1
        $region57: #{tpu_custom_call.1} parent=55 // loop_pre_header
          _
        $region58: #{tpu_custom_call.1} parent=55 // loop_header
          %s99 = sphi 0, %s103
          %p100 = scmp.ge.s32.totalorder %s99, 1
          %s104 = sphi %s94, %s94
          %s105 = sphi %s96, %s96
        $region59: #{tpu_custom_call.1} parent=55 // loop_header_branch
          %102 = sbr.rel (%p100) target = $region63
        $region60: #{tpu_custom_call.1} parent=55 // loop_body
          %v106 = vld [vmem:[%s104] sm:%s97]
          %107 = vst [vmem:[%s105] sm:%s97] %v106
        $region61: #{tpu_custom_call.1} parent=55 // loop_footer
          %s103 = sadd.s32 1, %s99
        $region62: #{tpu_custom_call.1} parent=55 // loop_footer_branch
          %98 = sbr.rel target = $region58
        $region63: #{tpu_custom_call.1} parent=55 // loop_exit
          _
      $region56: #{tpu_custom_call.1} parent=40 // pred_fallthru
        _
    $region41: #{tpu_custom_call.1} parent=1 // pred_fallthru
      _
    // Predicated region
    $region42: #{tpu_custom_call.1} parent=1 // pred_check
      %p73 = pneg %p69
    $region43: #{tpu_custom_call.1} parent=1 // pred_check_branch
      %75 = sbr.rel (%p73) target = $region45
    $region44: #{tpu_custom_call.1} parent=1 // pred_region
      %s76 = sshllo.u32 0, 1
      loop: start=0, step=1, limit=1
      $region46: #{tpu_custom_call.1} parent=44 // loop_pre_header
        _
      $region47: #{tpu_custom_call.1} parent=44 // loop_header
        %s78 = sphi 0, %s82
        %p79 = scmp.ge.s32.totalorder %s78, 1
        %s83 = sphi %s67, %s67
        %s84 = sphi [#allocation2], [#allocation2]
      $region48: #{tpu_custom_call.1} parent=44 // loop_header_branch
        %81 = sbr.rel (%p79) target = $region52
      $region49: #{tpu_custom_call.1} parent=44 // loop_body
        %v85 = vld [vmem:[%s83] sm:%s76]
        %86 = vst [vmem:[%s84] sm:%s76] %v85
      $region50: #{tpu_custom_call.1} parent=44 // loop_footer
        %s82 = sadd.s32 1, %s78
      $region51: #{tpu_custom_call.1} parent=44 // loop_footer_branch
        %77 = sbr.rel target = $region47
      $region52: #{tpu_custom_call.1} parent=44 // loop_exit
        _
    $region45: #{tpu_custom_call.1} parent=1 // pred_fallthru
      _
    // Predicated region
    $region64: #{tpu_custom_call.1} parent=1 // pred_check
      _
    $region65: #{tpu_custom_call.1} parent=1 // pred_check_branch
      %110 = sbr.rel (0) target = $region67
    $region66: #{tpu_custom_call.1} parent=1 // pred_region
      %111 = vsyncadd [#allocation4], 16
    $region67: #{tpu_custom_call.1} parent=1 // pred_fallthru
      _
    %s112 = sld [smem:[#allocation5 + $0x1]]
    %s113 = scalar_lea.vmem %s1, %s112
    %s114 = scalar_lea.vmem [#allocation2], 1
    %s115 = scalar_lea.sflag [#allocation4], 1
    %p117 = scmp.lt.u32.totalorder 1, 8
    %p118 = pneg %p117
    // Predicated region
    $region68: #{tpu_custom_call.1} parent=1 // pred_check
      _
    $region69: #{tpu_custom_call.1} parent=1 // pred_check_branch
      %120 = sbr.rel (%p117) target = $region71
    $region70: #{tpu_custom_call.1} parent=1 // pred_region
      %s135 = sand.u32 1, 7
      %p136 = scmp.eq.s32.totalorder %s135, 0
      %p137 = pneg %p136
      // Predicated region
      $region83: #{tpu_custom_call.1} parent=70 // pred_check
        _
      $region84: #{tpu_custom_call.1} parent=70 // pred_check_branch
        %139 = sbr.rel (%p136) target = $region86
      $region85: #{tpu_custom_call.1} parent=70 // pred_region
        %s140 = sand.u32 1, 7
        %s141 = ssub.s32 1, %s140
        %s142 = scalar_lea.vmem %s113, %s141
        %s143 = ssub.s32 1, %s140
        %s144 = scalar_lea.vmem %s114, %s143 [#allocation2]
        %s145 = sshllo.u32 0, %s140
        loop: start=0, step=1, limit=1
        $region87: #{tpu_custom_call.1} parent=85 // loop_pre_header
          _
        $region88: #{tpu_custom_call.1} parent=85 // loop_header
          %s147 = sphi 0, %s151
          %p148 = scmp.ge.s32.totalorder %s147, 1
          %s152 = sphi %s142, %s142
          %s153 = sphi %s144, %s144
        $region89: #{tpu_custom_call.1} parent=85 // loop_header_branch
          %150 = sbr.rel (%p148) target = $region93
        $region90: #{tpu_custom_call.1} parent=85 // loop_body
          %v154 = vld [vmem:[%s152] sm:%s145]
          %155 = vst [vmem:[%s153] sm:%s145] %v154
        $region91: #{tpu_custom_call.1} parent=85 // loop_footer
          %s151 = sadd.s32 1, %s147
        $region92: #{tpu_custom_call.1} parent=85 // loop_footer_branch
          %146 = sbr.rel target = $region88
        $region93: #{tpu_custom_call.1} parent=85 // loop_exit
          _
      $region86: #{tpu_custom_call.1} parent=70 // pred_fallthru
        _
    $region71: #{tpu_custom_call.1} parent=1 // pred_fallthru
      _
    // Predicated region
    $region72: #{tpu_custom_call.1} parent=1 // pred_check
      %p121 = pneg %p117
    $region73: #{tpu_custom_call.1} parent=1 // pred_check_branch
      %123 = sbr.rel (%p121) target = $region75
    $region74: #{tpu_custom_call.1} parent=1 // pred_region
      %s124 = sshllo.u32 0, 1
      loop: start=0, step=1, limit=1
      $region76: #{tpu_custom_call.1} parent=74 // loop_pre_header
        _
      $region77: #{tpu_custom_call.1} parent=74 // loop_header
        %s126 = sphi 0, %s130
        %p127 = scmp.ge.s32.totalorder %s126, 1
        %s131 = sphi %s113, %s113
        %s132 = sphi %s114, %s114
      $region78: #{tpu_custom_call.1} parent=74 // loop_header_branch
        %129 = sbr.rel (%p127) target = $region82
      $region79: #{tpu_custom_call.1} parent=74 // loop_body
        %v133 = vld [vmem:[%s131] sm:%s124]
        %134 = vst [vmem:[%s132] sm:%s124] %v133
      $region80: #{tpu_custom_call.1} parent=74 // loop_footer
        %s130 = sadd.s32 1, %s126
      $region81: #{tpu_custom_call.1} parent=74 // loop_footer_branch
        %125 = sbr.rel target = $region77
      $region82: #{tpu_custom_call.1} parent=74 // loop_exit
        _
    $region75: #{tpu_custom_call.1} parent=1 // pred_fallthru
      _
    // Predicated region
    $region94: #{tpu_custom_call.1} parent=1 // pred_check
      _
    $region95: #{tpu_custom_call.1} parent=1 // pred_check_branch
      %158 = sbr.rel (0) target = $region97
    $region96: #{tpu_custom_call.1} parent=1 // pred_region
      %159 = vsyncadd %s115, 16
    $region97: #{tpu_custom_call.1} parent=1 // pred_fallthru
      _
    %s160 = sld [smem:[#allocation5 + $0x2]]
    %s161 = scalar_lea.vmem %s1, %s160
    %s162 = scalar_lea.vmem [#allocation2], 2
    %s163 = scalar_lea.sflag [#allocation4], 2
    %p165 = scmp.lt.u32.totalorder 1, 8
    %p166 = pneg %p165
    // Predicated region
    $region98: #{tpu_custom_call.1} parent=1 // pred_check
      _
    $region99: #{tpu_custom_call.1} parent=1 // pred_check_branch
      %168 = sbr.rel (%p165) target = $region101
    $region100: #{tpu_custom_call.1} parent=1 // pred_region
      %s183 = sand.u32 1, 7
      %p184 = scmp.eq.s32.totalorder %s183, 0
      %p185 = pneg %p184
      // Predicated region
      $region113: #{tpu_custom_call.1} parent=100 // pred_check
        _
      $region114: #{tpu_custom_call.1} parent=100 // pred_check_branch
        %187 = sbr.rel (%p184) target = $region116
      $region115: #{tpu_custom_call.1} parent=100 // pred_region
        %s188 = sand.u32 1, 7
        %s189 = ssub.s32 1, %s188
        %s190 = scalar_lea.vmem %s161, %s189
        %s191 = ssub.s32 1, %s188
        %s192 = scalar_lea.vmem %s162, %s191 [#allocation2]
        %s193 = sshllo.u32 0, %s188
        loop: start=0, step=1, limit=1
        $region117: #{tpu_custom_call.1} parent=115 // loop_pre_header
          _
        $region118: #{tpu_custom_call.1} parent=115 // loop_header
          %s195 = sphi 0, %s199
          %p196 = scmp.ge.s32.totalorder %s195, 1
          %s200 = sphi %s190, %s190
          %s201 = sphi %s192, %s192
        $region119: #{tpu_custom_call.1} parent=115 // loop_header_branch
          %198 = sbr.rel (%p196) target = $region123
        $region120: #{tpu_custom_call.1} parent=115 // loop_body
          %v202 = vld [vmem:[%s200] sm:%s193]
          %203 = vst [vmem:[%s201] sm:%s193] %v202
        $region121: #{tpu_custom_call.1} parent=115 // loop_footer
          %s199 = sadd.s32 1, %s195
        $region122: #{tpu_custom_call.1} parent=115 // loop_footer_branch
          %194 = sbr.rel target = $region118
        $region123: #{tpu_custom_call.1} parent=115 // loop_exit
          _
      $region116: #{tpu_custom_call.1} parent=100 // pred_fallthru
        _
    $region101: #{tpu_custom_call.1} parent=1 // pred_fallthru
      _
    // Predicated region
    $region102: #{tpu_custom_call.1} parent=1 // pred_check
      %p169 = pneg %p165
    $region103: #{tpu_custom_call.1} parent=1 // pred_check_branch
      %171 = sbr.rel (%p169) target = $region105
    $region104: #{tpu_custom_call.1} parent=1 // pred_region
      %s172 = sshllo.u32 0, 1
      loop: start=0, step=1, limit=1
      $region106: #{tpu_custom_call.1} parent=104 // loop_pre_header
        _
      $region107: #{tpu_custom_call.1} parent=104 // loop_header
        %s174 = sphi 0, %s178
        %p175 = scmp.ge.s32.totalorder %s174, 1
        %s179 = sphi %s161, %s161
        %s180 = sphi %s162, %s162
      $region108: #{tpu_custom_call.1} parent=104 // loop_header_branch
        %177 = sbr.rel (%p175) target = $region112
      $region109: #{tpu_custom_call.1} parent=104 // loop_body
        %v181 = vld [vmem:[%s179] sm:%s172]
        %182 = vst [vmem:[%s180] sm:%s172] %v181
      $region110: #{tpu_custom_call.1} parent=104 // loop_footer
        %s178 = sadd.s32 1, %s174
      $region111: #{tpu_custom_call.1} parent=104 // loop_footer_branch
        %173 = sbr.rel target = $region107
      $region112: #{tpu_custom_call.1} parent=104 // loop_exit
        _
    $region105: #{tpu_custom_call.1} parent=1 // pred_fallthru
      _
    // Predicated region
    $region124: #{tpu_custom_call.1} parent=1 // pred_check
      _
    $region125: #{tpu_custom_call.1} parent=1 // pred_check_branch
      %206 = sbr.rel (0) target = $region127
    $region126: #{tpu_custom_call.1} parent=1 // pred_region
      %207 = vsyncadd %s163, 16
    $region127: #{tpu_custom_call.1} parent=1 // pred_fallthru
      _
    %s208 = sld [smem:[#allocation5 + $0x3]]
    %s209 = scalar_lea.vmem %s1, %s208
    %s210 = scalar_lea.vmem [#allocation2], 3
    %s211 = scalar_lea.sflag [#allocation4], 3
    %p213 = scmp.lt.u32.totalorder 1, 8
    %p214 = pneg %p213
    // Predicated region
    $region128: #{tpu_custom_call.1} parent=1 // pred_check
      _
    $region129: #{tpu_custom_call.1} parent=1 // pred_check_branch
      %216 = sbr.rel (%p213) target = $region131
    $region130: #{tpu_custom_call.1} parent=1 // pred_region
      %s231 = sand.u32 1, 7
      %p232 = scmp.eq.s32.totalorder %s231, 0
      %p233 = pneg %p232
      // Predicated region
      $region143: #{tpu_custom_call.1} parent=130 // pred_check
        _
      $region144: #{tpu_custom_call.1} parent=130 // pred_check_branch
        %235 = sbr.rel (%p232) target = $region146
      $region145: #{tpu_custom_call.1} parent=130 // pred_region
        %s236 = sand.u32 1, 7
        %s237 = ssub.s32 1, %s236
        %s238 = scalar_lea.vmem %s209, %s237
        %s239 = ssub.s32 1, %s236
        %s240 = scalar_lea.vmem %s210, %s239 [#allocation2]
        %s241 = sshllo.u32 0, %s236
        loop: start=0, step=1, limit=1
        $region147: #{tpu_custom_call.1} parent=145 // loop_pre_header
          _
        $region148: #{tpu_custom_call.1} parent=145 // loop_header
          %s243 = sphi 0, %s247
          %p244 = scmp.ge.s32.totalorder %s243, 1
          %s248 = sphi %s238, %s238
          %s249 = sphi %s240, %s240
        $region149: #{tpu_custom_call.1} parent=145 // loop_header_branch
          %246 = sbr.rel (%p244) target = $region153
        $region150: #{tpu_custom_call.1} parent=145 // loop_body
          %v250 = vld [vmem:[%s248] sm:%s241]
          %251 = vst [vmem:[%s249] sm:%s241] %v250
        $region151: #{tpu_custom_call.1} parent=145 // loop_footer
          %s247 = sadd.s32 1, %s243
        $region152: #{tpu_custom_call.1} parent=145 // loop_footer_branch
          %242 = sbr.rel target = $region148
        $region153: #{tpu_custom_call.1} parent=145 // loop_exit
          _
      $region146: #{tpu_custom_call.1} parent=130 // pred_fallthru
        _
    $region131: #{tpu_custom_call.1} parent=1 // pred_fallthru
      _
    // Predicated region
    $region132: #{tpu_custom_call.1} parent=1 // pred_check
      %p217 = pneg %p213
    $region133: #{tpu_custom_call.1} parent=1 // pred_check_branch
      %219 = sbr.rel (%p217) target = $region135
    $region134: #{tpu_custom_call.1} parent=1 // pred_region
      %s220 = sshllo.u32 0, 1
      loop: start=0, step=1, limit=1
      $region136: #{tpu_custom_call.1} parent=134 // loop_pre_header
        _
      $region137: #{tpu_custom_call.1} parent=134 // loop_header
        %s222 = sphi 0, %s226
        %p223 = scmp.ge.s32.totalorder %s222, 1
        %s227 = sphi %s209, %s209
        %s228 = sphi %s210, %s210
      $region138: #{tpu_custom_call.1} parent=134 // loop_header_branch
        %225 = sbr.rel (%p223) target = $region142
      $region139: #{tpu_custom_call.1} parent=134 // loop_body
        %v229 = vld [vmem:[%s227] sm:%s220]
        %230 = vst [vmem:[%s228] sm:%s220] %v229
      $region140: #{tpu_custom_call.1} parent=134 // loop_footer
        %s226 = sadd.s32 1, %s222
      $region141: #{tpu_custom_call.1} parent=134 // loop_footer_branch
        %221 = sbr.rel target = $region137
      $region142: #{tpu_custom_call.1} parent=134 // loop_exit
        _
    $region135: #{tpu_custom_call.1} parent=1 // pred_fallthru
      _
    // Predicated region
    $region154: #{tpu_custom_call.1} parent=1 // pred_check
      _
    $region155: #{tpu_custom_call.1} parent=1 // pred_check_branch
      %254 = sbr.rel (0) target = $region157
    $region156: #{tpu_custom_call.1} parent=1 // pred_region
      %255 = vsyncadd %s211, 16
    $region157: #{tpu_custom_call.1} parent=1 // pred_fallthru
      _
    %s256 = sld [smem:[#allocation5 + $0x4]]
    %s257 = scalar_lea.vmem %s1, %s256
    %s258 = scalar_lea.vmem [#allocation2], 4
    %s259 = scalar_lea.sflag [#allocation4], 4
    %p261 = scmp.lt.u32.totalorder 1, 8
    %p262 = pneg %p261
    // Predicated region
    $region158: #{tpu_custom_call.1} parent=1 // pred_check
      _
    $region159: #{tpu_custom_call.1} parent=1 // pred_check_branch
      %264 = sbr.rel (%p261) target = $region161
    $region160: #{tpu_custom_call.1} parent=1 // pred_region
      %s279 = sand.u32 1, 7
      %p280 = scmp.eq.s32.totalorder %s279, 0
      %p281 = pneg %p280
      // Predicated region
      $region173: #{tpu_custom_call.1} parent=160 // pred_check
        _
      $region174: #{tpu_custom_call.1} parent=160 // pred_check_branch
        %283 = sbr.rel (%p280) target = $region176
      $region175: #{tpu_custom_call.1} parent=160 // pred_region
        %s284 = sand.u32 1, 7
        %s285 = ssub.s32 1, %s284
        %s286 = scalar_lea.vmem %s257, %s285
        %s287 = ssub.s32 1, %s284
        %s288 = scalar_lea.vmem %s258, %s287 [#allocation2]
        %s289 = sshllo.u32 0, %s284
        loop: start=0, step=1, limit=1
        $region177: #{tpu_custom_call.1} parent=175 // loop_pre_header
          _
        $region178: #{tpu_custom_call.1} parent=175 // loop_header
          %s291 = sphi 0, %s295
          %p292 = scmp.ge.s32.totalorder %s291, 1
          %s296 = sphi %s286, %s286
          %s297 = sphi %s288, %s288
        $region179: #{tpu_custom_call.1} parent=175 // loop_header_branch
          %294 = sbr.rel (%p292) target = $region183
        $region180: #{tpu_custom_call.1} parent=175 // loop_body
          %v298 = vld [vmem:[%s296] sm:%s289]
          %299 = vst [vmem:[%s297] sm:%s289] %v298
        $region181: #{tpu_custom_call.1} parent=175 // loop_footer
          %s295 = sadd.s32 1, %s291
        $region182: #{tpu_custom_call.1} parent=175 // loop_footer_branch
          %290 = sbr.rel target = $region178
        $region183: #{tpu_custom_call.1} parent=175 // loop_exit
          _
      $region176: #{tpu_custom_call.1} parent=160 // pred_fallthru
        _
    $region161: #{tpu_custom_call.1} parent=1 // pred_fallthru
      _
    // Predicated region
    $region162: #{tpu_custom_call.1} parent=1 // pred_check
      %p265 = pneg %p261
    $region163: #{tpu_custom_call.1} parent=1 // pred_check_branch
      %267 = sbr.rel (%p265) target = $region165
    $region164: #{tpu_custom_call.1} parent=1 // pred_region
      %s268 = sshllo.u32 0, 1
      loop: start=0, step=1, limit=1
      $region166: #{tpu_custom_call.1} parent=164 // loop_pre_header
        _
      $region167: #{tpu_custom_call.1} parent=164 // loop_header
        %s270 = sphi 0, %s274
        %p271 = scmp.ge.s32.totalorder %s270, 1
        %s275 = sphi %s257, %s257
        %s276 = sphi %s258, %s258
      $region168: #{tpu_custom_call.1} parent=164 // loop_header_branch
        %273 = sbr.rel (%p271) target = $region172
      $region169: #{tpu_custom_call.1} parent=164 // loop_body
        %v277 = vld [vmem:[%s275] sm:%s268]
        %278 = vst [vmem:[%s276] sm:%s268] %v277
      $region170: #{tpu_custom_call.1} parent=164 // loop_footer
        %s274 = sadd.s32 1, %s270
      $region171: #{tpu_custom_call.1} parent=164 // loop_footer_branch
        %269 = sbr.rel target = $region167
      $region172: #{tpu_custom_call.1} parent=164 // loop_exit
        _
    $region165: #{tpu_custom_call.1} parent=1 // pred_fallthru
      _
    // Predicated region
    $region184: #{tpu_custom_call.1} parent=1 // pred_check
      _
    $region185: #{tpu_custom_call.1} parent=1 // pred_check_branch
      %302 = sbr.rel (0) target = $region187
    $region186: #{tpu_custom_call.1} parent=1 // pred_region
      %303 = vsyncadd %s259, 16
    $region187: #{tpu_custom_call.1} parent=1 // pred_fallthru
      _
    %s304 = sld [smem:[#allocation5 + $0x5]]
    %s305 = scalar_lea.vmem %s1, %s304
    %s306 = scalar_lea.vmem [#allocation2], 5
    %s307 = scalar_lea.sflag [#allocation4], 5
    %p309 = scmp.lt.u32.totalorder 1, 8
    %p310 = pneg %p309
    // Predicated region
    $region188: #{tpu_custom_call.1} parent=1 // pred_check
      _
    $region189: #{tpu_custom_call.1} parent=1 // pred_check_branch
      %312 = sbr.rel (%p309) target = $region191
    $region190: #{tpu_custom_call.1} parent=1 // pred_region
      %s327 = sand.u32 1, 7
      %p328 = scmp.eq.s32.totalorder %s327, 0
      %p329 = pneg %p328
      // Predicated region
      $region203: #{tpu_custom_call.1} parent=190 // pred_check
        _
      $region204: #{tpu_custom_call.1} parent=190 // pred_check_branch
        %331 = sbr.rel (%p328) target = $region206
      $region205: #{tpu_custom_call.1} parent=190 // pred_region
        %s332 = sand.u32 1, 7
        %s333 = ssub.s32 1, %s332
        %s334 = scalar_lea.vmem %s305, %s333
        %s335 = ssub.s32 1, %s332
        %s336 = scalar_lea.vmem %s306, %s335 [#allocation2]
        %s337 = sshllo.u32 0, %s332
        loop: start=0, step=1, limit=1
        $region207: #{tpu_custom_call.1} parent=205 // loop_pre_header
          _
        $region208: #{tpu_custom_call.1} parent=205 // loop_header
          %s339 = sphi 0, %s343
          %p340 = scmp.ge.s32.totalorder %s339, 1
          %s344 = sphi %s334, %s334
          %s345 = sphi %s336, %s336
        $region209: #{tpu_custom_call.1} parent=205 // loop_header_branch
          %342 = sbr.rel (%p340) target = $region213
        $region210: #{tpu_custom_call.1} parent=205 // loop_body
          %v346 = vld [vmem:[%s344] sm:%s337]
          %347 = vst [vmem:[%s345] sm:%s337] %v346
        $region211: #{tpu_custom_call.1} parent=205 // loop_footer
          %s343 = sadd.s32 1, %s339
        $region212: #{tpu_custom_call.1} parent=205 // loop_footer_branch
          %338 = sbr.rel target = $region208
        $region213: #{tpu_custom_call.1} parent=205 // loop_exit
          _
      $region206: #{tpu_custom_call.1} parent=190 // pred_fallthru
        _
    $region191: #{tpu_custom_call.1} parent=1 // pred_fallthru
      _
    // Predicated region
    $region192: #{tpu_custom_call.1} parent=1 // pred_check
      %p313 = pneg %p309
    $region193: #{tpu_custom_call.1} parent=1 // pred_check_branch
      %315 = sbr.rel (%p313) target = $region195
    $region194: #{tpu_custom_call.1} parent=1 // pred_region
      %s316 = sshllo.u32 0, 1
      loop: start=0, step=1, limit=1
      $region196: #{tpu_custom_call.1} parent=194 // loop_pre_header
        _
      $region197: #{tpu_custom_call.1} parent=194 // loop_header
        %s318 = sphi 0, %s322
        %p319 = scmp.ge.s32.totalorder %s318, 1
        %s323 = sphi %s305, %s305
        %s324 = sphi %s306, %s306
      $region198: #{tpu_custom_call.1} parent=194 // loop_header_branch
        %321 = sbr.rel (%p319) target = $region202
      $region199: #{tpu_custom_call.1} parent=194 // loop_body
        %v325 = vld [vmem:[%s323] sm:%s316]
        %326 = vst [vmem:[%s324] sm:%s316] %v325
      $region200: #{tpu_custom_call.1} parent=194 // loop_footer
        %s322 = sadd.s32 1, %s318
      $region201: #{tpu_custom_call.1} parent=194 // loop_footer_branch
        %317 = sbr.rel target = $region197
      $region202: #{tpu_custom_call.1} parent=194 // loop_exit
        _
    $region195: #{tpu_custom_call.1} parent=1 // pred_fallthru
      _
    // Predicated region
    $region214: #{tpu_custom_call.1} parent=1 // pred_check
      _
    $region215: #{tpu_custom_call.1} parent=1 // pred_check_branch
      %350 = sbr.rel (0) target = $region217
    $region216: #{tpu_custom_call.1} parent=1 // pred_region
      %351 = vsyncadd %s307, 16
    $region217: #{tpu_custom_call.1} parent=1 // pred_fallthru
      _
    %s352 = sld [smem:[#allocation5 + $0x6]]
    %s353 = scalar_lea.vmem %s1, %s352
    %s354 = scalar_lea.vmem [#allocation2], 6
    %s355 = scalar_lea.sflag [#allocation4], 6
    %p357 = scmp.lt.u32.totalorder 1, 8
    %p358 = pneg %p357
    // Predicated region
    $region218: #{tpu_custom_call.1} parent=1 // pred_check
      _
    $region219: #{tpu_custom_call.1} parent=1 // pred_check_branch
      %360 = sbr.rel (%p357) target = $region221
    $region220: #{tpu_custom_call.1} parent=1 // pred_region
      %s375 = sand.u32 1, 7
      %p376 = scmp.eq.s32.totalorder %s375, 0
      %p377 = pneg %p376
      // Predicated region
      $region233: #{tpu_custom_call.1} parent=220 // pred_check
        _
      $region234: #{tpu_custom_call.1} parent=220 // pred_check_branch
        %379 = sbr.rel (%p376) target = $region236
      $region235: #{tpu_custom_call.1} parent=220 // pred_region
        %s380 = sand.u32 1, 7
        %s381 = ssub.s32 1, %s380
        %s382 = scalar_lea.vmem %s353, %s381
        %s383 = ssub.s32 1, %s380
        %s384 = scalar_lea.vmem %s354, %s383 [#allocation2]
        %s385 = sshllo.u32 0, %s380
        loop: start=0, step=1, limit=1
        $region237: #{tpu_custom_call.1} parent=235 // loop_pre_header
          _
        $region238: #{tpu_custom_call.1} parent=235 // loop_header
          %s387 = sphi 0, %s391
          %p388 = scmp.ge.s32.totalorder %s387, 1
          %s392 = sphi %s382, %s382
          %s393 = sphi %s384, %s384
        $region239: #{tpu_custom_call.1} parent=235 // loop_header_branch
          %390 = sbr.rel (%p388) target = $region243
        $region240: #{tpu_custom_call.1} parent=235 // loop_body
          %v394 = vld [vmem:[%s392] sm:%s385]
          %395 = vst [vmem:[%s393] sm:%s385] %v394
        $region241: #{tpu_custom_call.1} parent=235 // loop_footer
          %s391 = sadd.s32 1, %s387
        $region242: #{tpu_custom_call.1} parent=235 // loop_footer_branch
          %386 = sbr.rel target = $region238
        $region243: #{tpu_custom_call.1} parent=235 // loop_exit
          _
      $region236: #{tpu_custom_call.1} parent=220 // pred_fallthru
        _
    $region221: #{tpu_custom_call.1} parent=1 // pred_fallthru
      _
    // Predicated region
    $region222: #{tpu_custom_call.1} parent=1 // pred_check
      %p361 = pneg %p357
    $region223: #{tpu_custom_call.1} parent=1 // pred_check_branch
      %363 = sbr.rel (%p361) target = $region225
    $region224: #{tpu_custom_call.1} parent=1 // pred_region
      %s364 = sshllo.u32 0, 1
      loop: start=0, step=1, limit=1
      $region226: #{tpu_custom_call.1} parent=224 // loop_pre_header
        _
      $region227: #{tpu_custom_call.1} parent=224 // loop_header
        %s366 = sphi 0, %s370
        %p367 = scmp.ge.s32.totalorder %s366, 1
        %s371 = sphi %s353, %s353
        %s372 = sphi %s354, %s354
      $region228: #{tpu_custom_call.1} parent=224 // loop_header_branch
        %369 = sbr.rel (%p367) target = $region232
      $region229: #{tpu_custom_call.1} parent=224 // loop_body
        %v373 = vld [vmem:[%s371] sm:%s364]
        %374 = vst [vmem:[%s372] sm:%s364] %v373
      $region230: #{tpu_custom_call.1} parent=224 // loop_footer
        %s370 = sadd.s32 1, %s366
      $region231: #{tpu_custom_call.1} parent=224 // loop_footer_branch
        %365 = sbr.rel target = $region227
      $region232: #{tpu_custom_call.1} parent=224 // loop_exit
        _
    $region225: #{tpu_custom_call.1} parent=1 // pred_fallthru
      _
    // Predicated region
    $region244: #{tpu_custom_call.1} parent=1 // pred_check
      _
    $region245: #{tpu_custom_call.1} parent=1 // pred_check_branch
      %398 = sbr.rel (0) target = $region247
    $region246: #{tpu_custom_call.1} parent=1 // pred_region
      %399 = vsyncadd %s355, 16
    $region247: #{tpu_custom_call.1} parent=1 // pred_fallthru
      _
    %s400 = sld [smem:[#allocation5 + $0x7]]
    %s401 = scalar_lea.vmem %s1, %s400
    %s402 = scalar_lea.vmem [#allocation2], 7
    %s403 = scalar_lea.sflag [#allocation4], 7
    %p405 = scmp.lt.u32.totalorder 1, 8
    %p406 = pneg %p405
    // Predicated region
    $region248: #{tpu_custom_call.1} parent=1 // pred_check
      _
    $region249: #{tpu_custom_call.1} parent=1 // pred_check_branch
      %408 = sbr.rel (%p405) target = $region251
    $region250: #{tpu_custom_call.1} parent=1 // pred_region
      %s423 = sand.u32 1, 7
      %p424 = scmp.eq.s32.totalorder %s423, 0
      %p425 = pneg %p424
      // Predicated region
      $region263: #{tpu_custom_call.1} parent=250 // pred_check
        _
      $region264: #{tpu_custom_call.1} parent=250 // pred_check_branch
        %427 = sbr.rel (%p424) target = $region266
      $region265: #{tpu_custom_call.1} parent=250 // pred_region
        %s428 = sand.u32 1, 7
        %s429 = ssub.s32 1, %s428
        %s430 = scalar_lea.vmem %s401, %s429
        %s431 = ssub.s32 1, %s428
        %s432 = scalar_lea.vmem %s402, %s431 [#allocation2]
        %s433 = sshllo.u32 0, %s428
        loop: start=0, step=1, limit=1
        $region267: #{tpu_custom_call.1} parent=265 // loop_pre_header
          _
        $region268: #{tpu_custom_call.1} parent=265 // loop_header
          %s435 = sphi 0, %s439
          %p436 = scmp.ge.s32.totalorder %s435, 1
          %s440 = sphi %s430, %s430
          %s441 = sphi %s432, %s432
        $region269: #{tpu_custom_call.1} parent=265 // loop_header_branch
          %438 = sbr.rel (%p436) target = $region273
        $region270: #{tpu_custom_call.1} parent=265 // loop_body
          %v442 = vld [vmem:[%s440] sm:%s433]
          %443 = vst [vmem:[%s441] sm:%s433] %v442
        $region271: #{tpu_custom_call.1} parent=265 // loop_footer
          %s439 = sadd.s32 1, %s435
        $region272: #{tpu_custom_call.1} parent=265 // loop_footer_branch
          %434 = sbr.rel target = $region268
        $region273: #{tpu_custom_call.1} parent=265 // loop_exit
          _
      $region266: #{tpu_custom_call.1} parent=250 // pred_fallthru
        _
    $region251: #{tpu_custom_call.1} parent=1 // pred_fallthru
      _
    // Predicated region
    $region252: #{tpu_custom_call.1} parent=1 // pred_check
      %p409 = pneg %p405
    $region253: #{tpu_custom_call.1} parent=1 // pred_check_branch
      %411 = sbr.rel (%p409) target = $region255
    $region254: #{tpu_custom_call.1} parent=1 // pred_region
      %s412 = sshllo.u32 0, 1
      loop: start=0, step=1, limit=1
      $region256: #{tpu_custom_call.1} parent=254 // loop_pre_header
        _
      $region257: #{tpu_custom_call.1} parent=254 // loop_header
        %s414 = sphi 0, %s418
        %p415 = scmp.ge.s32.totalorder %s414, 1
        %s419 = sphi %s401, %s401
        %s420 = sphi %s402, %s402
      $region258: #{tpu_custom_call.1} parent=254 // loop_header_branch
        %417 = sbr.rel (%p415) target = $region262
      $region259: #{tpu_custom_call.1} parent=254 // loop_body
        %v421 = vld [vmem:[%s419] sm:%s412]
        %422 = vst [vmem:[%s420] sm:%s412] %v421
      $region260: #{tpu_custom_call.1} parent=254 // loop_footer
        %s418 = sadd.s32 1, %s414
      $region261: #{tpu_custom_call.1} parent=254 // loop_footer_branch
        %413 = sbr.rel target = $region257
      $region262: #{tpu_custom_call.1} parent=254 // loop_exit
        _
    $region255: #{tpu_custom_call.1} parent=1 // pred_fallthru
      _
    // Predicated region
    $region274: #{tpu_custom_call.1} parent=1 // pred_check
      _
    $region275: #{tpu_custom_call.1} parent=1 // pred_check_branch
      %446 = sbr.rel (0) target = $region277
    $region276: #{tpu_custom_call.1} parent=1 // pred_region
      %447 = vsyncadd %s403, 16
    $region277: #{tpu_custom_call.1} parent=1 // pred_fallthru
      _
    %v448 = vld [vmem:[#allocation10] sm:$0xff]
    %v449 = vld [vmem:[#allocation10 + $0x8] sm:$0xff]
    %v450 = vld [vmem:[#allocation10 + $0x10] sm:$0xff]
    %v451 = vld [vmem:[#allocation10 + $0x18] sm:$0xff]
    %v452 = vld [vmem:[#allocation10 + $0x20] sm:$0xff]
    %v453 = vld [vmem:[#allocation10 + $0x28] sm:$0xff]
    %v454 = vld [vmem:[#allocation10 + $0x30] sm:$0xff]
    %v455 = vld [vmem:[#allocation10 + $0x38] sm:$0xff]
    %v456 = vld [vmem:[#allocation10 + $0x40] sm:$0xff]
    %v457 = vld [vmem:[#allocation10 + $0x48] sm:$0xff]
    %v458 = vld [vmem:[#allocation10 + $0x50] sm:$0xff]
    %v459 = vld [vmem:[#allocation10 + $0x58] sm:$0xff]
    %v460 = vld [vmem:[#allocation10 + $0x60] sm:$0xff]
    %v461 = vld [vmem:[#allocation10 + $0x68] sm:$0xff]
    %v462 = vld [vmem:[#allocation10 + $0x70] sm:$0xff]
    %v463 = vld [vmem:[#allocation10 + $0x78] sm:$0xff]
    %v464 = vld [vmem:[#allocation10 + $0x80] sm:$0xff]
    %v465 = vld [vmem:[#allocation10 + $0x88] sm:$0xff]
    %v466 = vld [vmem:[#allocation10 + $0x90] sm:$0xff]
    %v467 = vld [vmem:[#allocation10 + $0x98] sm:$0xff]
    %v468 = vld [vmem:[#allocation10 + $0xa0] sm:$0xff]
    %v469 = vld [vmem:[#allocation10 + $0xa8] sm:$0xff]
    %v470 = vld [vmem:[#allocation10 + $0xb0] sm:$0xff]
    %v471 = vld [vmem:[#allocation10 + $0xb8] sm:$0xff]
    %v472 = vld [vmem:[#allocation10 + $0xc0] sm:$0xff]
    %v473 = vld [vmem:[#allocation10 + $0xc8] sm:$0xff]
    %v474 = vld [vmem:[#allocation10 + $0xd0] sm:$0xff]
    %v475 = vld [vmem:[#allocation10 + $0xd8] sm:$0xff]
    %v476 = vld [vmem:[#allocation10 + $0xe0] sm:$0xff]
    %v477 = vld [vmem:[#allocation10 + $0xe8] sm:$0xff]
    %v478 = vld [vmem:[#allocation10 + $0xf0] sm:$0xff]
    %v479 = vld [vmem:[#allocation10 + $0xf8] sm:$0xff]
    %v480 = vld [vmem:[#allocation10 + $0x100] sm:$0xff]
    %v481 = vld [vmem:[#allocation10 + $0x108] sm:$0xff]
    %v482 = vld [vmem:[#allocation10 + $0x110] sm:$0xff]
    %v483 = vld [vmem:[#allocation10 + $0x118] sm:$0xff]
    %v484 = vld [vmem:[#allocation10 + $0x120] sm:$0xff]
    %v485 = vld [vmem:[#allocation10 + $0x128] sm:$0xff]
    %v486 = vld [vmem:[#allocation10 + $0x130] sm:$0xff]
    %v487 = vld [vmem:[#allocation10 + $0x138] sm:$0xff]
    %v488 = vld [vmem:[#allocation10 + $0x140] sm:$0xff]
    %v489 = vld [vmem:[#allocation10 + $0x148] sm:$0xff]
    %v490 = vld [vmem:[#allocation10 + $0x150] sm:$0xff]
    %v491 = vld [vmem:[#allocation10 + $0x158] sm:$0xff]
    %v492 = vld [vmem:[#allocation10 + $0x160] sm:$0xff]
    %v493 = vld [vmem:[#allocation10 + $0x168] sm:$0xff]
    %v494 = vld [vmem:[#allocation10 + $0x170] sm:$0xff]
    %v495 = vld [vmem:[#allocation10 + $0x178] sm:$0xff]
    %v496 = vld [vmem:[#allocation10 + $0x180] sm:$0xff]
    %v497 = vld [vmem:[#allocation10 + $0x188] sm:$0xff]
    %v498 = vld [vmem:[#allocation10 + $0x190] sm:$0xff]
    %v499 = vld [vmem:[#allocation10 + $0x198] sm:$0xff]
    %v500 = vld [vmem:[#allocation10 + $0x1a0] sm:$0xff]
    %v501 = vld [vmem:[#allocation10 + $0x1a8] sm:$0xff]
    %v502 = vld [vmem:[#allocation10 + $0x1b0] sm:$0xff]
    %v503 = vld [vmem:[#allocation10 + $0x1b8] sm:$0xff]
    %v504 = vld [vmem:[#allocation10 + $0x1c0] sm:$0xff]
    %v505 = vld [vmem:[#allocation10 + $0x1c8] sm:$0xff]
    %v506 = vld [vmem:[#allocation10 + $0x1d0] sm:$0xff]
    %v507 = vld [vmem:[#allocation10 + $0x1d8] sm:$0xff]
    %v508 = vld [vmem:[#allocation10 + $0x1e0] sm:$0xff]
    %v509 = vld [vmem:[#allocation10 + $0x1e8] sm:$0xff]
    %v510 = vld [vmem:[#allocation10 + $0x1f0] sm:$0xff]
    %v511 = vld [vmem:[#allocation10 + $0x1f8] sm:$0xff]
    %s512 = smul.u32 1, 1
    %s513 = sshll.u32 %s512, 4
    %514 = dma.done [#allocation4], %s513
    %s515 = sshll.u32 %s512, 4
    %516 = dma.done %s115, %s515
    %s517 = sshll.u32 %s512, 4
    %518 = dma.done %s163, %s517
    %s519 = sshll.u32 %s512, 4
    %520 = dma.done %s211, %s519
    %s521 = sshll.u32 %s512, 4
    %522 = dma.done %s259, %s521
    %s523 = sshll.u32 %s512, 4
    %524 = dma.done %s307, %s523
    %s525 = sshll.u32 %s512, 4
    %526 = dma.done %s355, %s525
    %s527 = sshll.u32 %s512, 4
    %528 = dma.done %s403, %s527
    %v529 = vld [vmem:[#allocation2] sm:$0xff]
    %v530 = vld [vmem:[#allocation9] sm:$0xff]
    %v531 = vld [vmem:[#allocation9 + $0x8] sm:$0xff]
    %v532 = vld [vmem:[#allocation9 + $0x10] sm:$0xff]
    %v533 = vld [vmem:[#allocation9 + $0x18] sm:$0xff]
    %v534 = vld [vmem:[#allocation9 + $0x20] sm:$0xff]
    %v535 = vld [vmem:[#allocation9 + $0x28] sm:$0xff]
    %v536 = vld [vmem:[#allocation9 + $0x30] sm:$0xff]
    %v537 = vld [vmem:[#allocation9 + $0x38] sm:$0xff]
    %v538 = vld [vmem:[#allocation9 + $0x40] sm:$0xff]
    %v539 = vld [vmem:[#allocation9 + $0x48] sm:$0xff]
    %v540 = vld [vmem:[#allocation9 + $0x50] sm:$0xff]
    %v541 = vld [vmem:[#allocation9 + $0x58] sm:$0xff]
    %v542 = vld [vmem:[#allocation9 + $0x60] sm:$0xff]
    %v543 = vld [vmem:[#allocation9 + $0x68] sm:$0xff]
    %v544 = vld [vmem:[#allocation9 + $0x70] sm:$0xff]
    %v545 = vld [vmem:[#allocation9 + $0x78] sm:$0xff]
    %v546 = vld [vmem:[#allocation9 + $0x80] sm:$0xff]
    %v547 = vld [vmem:[#allocation9 + $0x88] sm:$0xff]
    %v548 = vld [vmem:[#allocation9 + $0x90] sm:$0xff]
    %v549 = vld [vmem:[#allocation9 + $0x98] sm:$0xff]
    %v550 = vld [vmem:[#allocation9 + $0xa0] sm:$0xff]
    %v551 = vld [vmem:[#allocation9 + $0xa8] sm:$0xff]
    %v552 = vld [vmem:[#allocation9 + $0xb0] sm:$0xff]
    %v553 = vld [vmem:[#allocation9 + $0xb8] sm:$0xff]
    %v554 = vld [vmem:[#allocation9 + $0xc0] sm:$0xff]
    %v555 = vld [vmem:[#allocation9 + $0xc8] sm:$0xff]
    %v556 = vld [vmem:[#allocation9 + $0xd0] sm:$0xff]
    %v557 = vld [vmem:[#allocation9 + $0xd8] sm:$0xff]
    %v558 = vld [vmem:[#allocation9 + $0xe0] sm:$0xff]
    %v559 = vld [vmem:[#allocation9 + $0xe8] sm:$0xff]
    %v560 = vld [vmem:[#allocation9 + $0xf0] sm:$0xff]
    %v561 = vld [vmem:[#allocation9 + $0xf8] sm:$0xff]
    %v562 = vld [vmem:[#allocation9 + $0x100] sm:$0xff]
    %v563 = vld [vmem:[#allocation9 + $0x108] sm:$0xff]
    %v564 = vld [vmem:[#allocation9 + $0x110] sm:$0xff]
    %v565 = vld [vmem:[#allocation9 + $0x118] sm:$0xff]
    %v566 = vld [vmem:[#allocation9 + $0x120] sm:$0xff]
    %v567 = vld [vmem:[#allocation9 + $0x128] sm:$0xff]
    %v568 = vld [vmem:[#allocation9 + $0x130] sm:$0xff]
    %v569 = vld [vmem:[#allocation9 + $0x138] sm:$0xff]
    %v570 = vld [vmem:[#allocation9 + $0x140] sm:$0xff]
    %v571 = vld [vmem:[#allocation9 + $0x148] sm:$0xff]
    %v572 = vld [vmem:[#allocation9 + $0x150] sm:$0xff]
    %v573 = vld [vmem:[#allocation9 + $0x158] sm:$0xff]
    %v574 = vld [vmem:[#allocation9 + $0x160] sm:$0xff]
    %v575 = vld [vmem:[#allocation9 + $0x168] sm:$0xff]
    %v576 = vld [vmem:[#allocation9 + $0x170] sm:$0xff]
    %v577 = vld [vmem:[#allocation9 + $0x178] sm:$0xff]
    %v578 = vld [vmem:[#allocation9 + $0x180] sm:$0xff]
    %v579 = vld [vmem:[#allocation9 + $0x188] sm:$0xff]
    %v580 = vld [vmem:[#allocation9 + $0x190] sm:$0xff]
    %v581 = vld [vmem:[#allocation9 + $0x198] sm:$0xff]
    %v582 = vld [vmem:[#allocation9 + $0x1a0] sm:$0xff]
    %v583 = vld [vmem:[#allocation9 + $0x1a8] sm:$0xff]
    %v584 = vld [vmem:[#allocation9 + $0x1b0] sm:$0xff]
    %v585 = vld [vmem:[#allocation9 + $0x1b8] sm:$0xff]
    %v586 = vld [vmem:[#allocation9 + $0x1c0] sm:$0xff]
    %v587 = vld [vmem:[#allocation9 + $0x1c8] sm:$0xff]
    %v588 = vld [vmem:[#allocation9 + $0x1d0] sm:$0xff]
    %v589 = vld [vmem:[#allocation9 + $0x1d8] sm:$0xff]
    %v590 = vld [vmem:[#allocation9 + $0x1e0] sm:$0xff]
    %v591 = vld [vmem:[#allocation9 + $0x1e8] sm:$0xff]
    %v592 = vld [vmem:[#allocation9 + $0x1f0] sm:$0xff]
    %v593 = vld [vmem:[#allocation9 + $0x1f8] sm:$0xff]
    %v594 = vld [vmem:[%s4] sm:$0xf]
    %v596 = vlaneseq
    %v597 = vshrl.u32 %v596, 7
    %v598 = vsub.s32 0, %v597
    %v599 = vrot.slane %v594, %v598
    %v600 = vlaneseq
    %v601 = vshrl.u32 %v600, 7
    %v602 = vsub.s32 1, %v601
    %v603 = vrot.slane %v594, %v602
    %v604 = vlaneseq
    %v605 = vshrl.u32 %v604, 7
    %v606 = vsub.s32 2, %v605
    %v607 = vrot.slane %v594, %v606
    %v608 = vlaneseq
    %v609 = vshrl.u32 %v608, 7
    %v610 = vsub.s32 3, %v609
    %v611 = vrot.slane %v594, %v610
    %616 = vmatprep.subr.mxu0 %v531
    %617 = vmatpush1.msra.mxu0 %v530
    %618 = vmatprep.subr.mxu0 %v535
    %619 = vmatpush1.msra.mxu0 %v534
    %620 = vmatprep.subr.mxu0 %v539
    %621 = vmatpush1.msra.mxu0 %v538
    %622 = vmatprep.subr.mxu0 %v543
    %623 = vmatpush1.msra.mxu0 %v542
    %624 = vmatprep.subr.mxu0 %v547
    %625 = vmatpush1.msra.mxu0 %v546
    %626 = vmatprep.subr.mxu0 %v551
    %627 = vmatpush1.msra.mxu0 %v550
    %628 = vmatprep.subr.mxu0 %v555
    %629 = vmatpush1.msra.mxu0 %v554
    %630 = vmatprep.subr.mxu0 %v559
    %631 = vmatpush1.msra.mxu0 %v558
    %632 = vmatprep.subr.mxu0 %v563
    %633 = vmatpush1.msra.mxu0 %v562
    %634 = vmatprep.subr.mxu0 %v567
    %635 = vmatpush1.msra.mxu0 %v566
    %636 = vmatprep.subr.mxu0 %v571
    %637 = vmatpush1.msra.mxu0 %v570
    %638 = vmatprep.subr.mxu0 %v575
    %639 = vmatpush1.msra.mxu0 %v574
    %640 = vmatprep.subr.mxu0 %v579
    %641 = vmatpush1.msra.mxu0 %v578
    %642 = vmatprep.subr.mxu0 %v583
    %643 = vmatpush1.msra.mxu0 %v582
    %644 = vmatprep.subr.mxu0 %v587
    %645 = vmatpush1.msra.mxu0 %v586
    %646 = vmatprep.subr.mxu0 %v591
    %647 = vmatpush1.msra.mxu0 %v590
    %648 = vmatprep.subr.mxu0 0.0
    %649 = vmatpush1.msra.mxu0 0.0
    %650 = vmatprep.subr.mxu0 0.0
    %651 = vmatpush1.msra.mxu0 0.0
    %652 = vmatprep.subr.mxu0 0.0
    %653 = vmatpush1.msra.mxu0 0.0
    %654 = vmatprep.subr.mxu0 0.0
    %655 = vmatpush1.msra.mxu0 0.0
    %656 = vmatprep.subr.mxu0 0.0
    %657 = vmatpush1.msra.mxu0 0.0
    %658 = vmatprep.subr.mxu0 0.0
    %659 = vmatpush1.msra.mxu0 0.0
    %660 = vmatprep.subr.mxu0 0.0
    %661 = vmatpush1.msra.mxu0 0.0
    %662 = vmatprep.subr.mxu0 0.0
    %663 = vmatpush1.msra.mxu0 0.0
    %664 = vmatprep.subr.mxu0 0.0
    %665 = vmatpush1.msra.mxu0 0.0
    %666 = vmatprep.subr.mxu0 0.0
    %667 = vmatpush1.msra.mxu0 0.0
    %668 = vmatprep.subr.mxu0 0.0
    %669 = vmatpush1.msra.mxu0 0.0
    %670 = vmatprep.subr.mxu0 0.0
    %671 = vmatpush1.msra.mxu0 0.0
    %672 = vmatprep.subr.mxu0 0.0
    %673 = vmatpush1.msra.mxu0 0.0
    %674 = vmatprep.subr.mxu0 0.0
    %675 = vmatpush1.msra.mxu0 0.0
    %676 = vmatprep.subr.mxu0 0.0
    %677 = vmatpush1.msra.mxu0 0.0
    %678 = vmatprep.subr.mxu0 0.0
    %679 = vmatpush1.msra.mxu0 0.0
    %680 = vmatprep.mubr.f32.mxu0 0.0
    %681 = vmatmul.mubr.f32.gmra.mrb[0].mxu0 %v529
    %v682 = vpop.f32.mrb[0].mxu0
    %v683 = vadd.f32 %v599, %v682
    %v684 = vpop.f32.mrb[0].mxu0
    %v685 = vadd.f32 %v603, %v684
    %686 = vdwg.mxu0
    %687 = vmatprep.subr.mxu0 %v533
    %688 = vmatpush1.msra.mxu0 %v532
    %689 = vmatprep.subr.mxu0 %v537
    %690 = vmatpush1.msra.mxu0 %v536
    %691 = vmatprep.subr.mxu0 %v541
    %692 = vmatpush1.msra.mxu0 %v540
    %693 = vmatprep.subr.mxu0 %v545
    %694 = vmatpush1.msra.mxu0 %v544
    %695 = vmatprep.subr.mxu0 %v549
    %696 = vmatpush1.msra.mxu0 %v548
    %697 = vmatprep.subr.mxu0 %v553
    %698 = vmatpush1.msra.mxu0 %v552
    %699 = vmatprep.subr.mxu0 %v557
    %700 = vmatpush1.msra.mxu0 %v556
    %701 = vmatprep.subr.mxu0 %v561
    %702 = vmatpush1.msra.mxu0 %v560
    %703 = vmatprep.subr.mxu0 %v565
    %704 = vmatpush1.msra.mxu0 %v564
    %705 = vmatprep.subr.mxu0 %v569
    %706 = vmatpush1.msra.mxu0 %v568
    %707 = vmatprep.subr.mxu0 %v573
    %708 = vmatpush1.msra.mxu0 %v572
    %709 = vmatprep.subr.mxu0 %v577
    %710 = vmatpush1.msra.mxu0 %v576
    %711 = vmatprep.subr.mxu0 %v581
    %712 = vmatpush1.msra.mxu0 %v580
    %713 = vmatprep.subr.mxu0 %v585
    %714 = vmatpush1.msra.mxu0 %v584
    %715 = vmatprep.subr.mxu0 %v589
    %716 = vmatpush1.msra.mxu0 %v588
    %717 = vmatprep.subr.mxu0 %v593
    %718 = vmatpush1.msra.mxu0 %v592
    %719 = vmatprep.subr.mxu0 0.0
    %720 = vmatpush1.msra.mxu0 0.0
    %721 = vmatprep.subr.mxu0 0.0
    %722 = vmatpush1.msra.mxu0 0.0
    %723 = vmatprep.subr.mxu0 0.0
    %724 = vmatpush1.msra.mxu0 0.0
    %725 = vmatprep.subr.mxu0 0.0
    %726 = vmatpush1.msra.mxu0 0.0
    %727 = vmatprep.subr.mxu0 0.0
    %728 = vmatpush1.msra.mxu0 0.0
    %729 = vmatprep.subr.mxu0 0.0
    %730 = vmatpush1.msra.mxu0 0.0
    %731 = vmatprep.subr.mxu0 0.0
    %732 = vmatpush1.msra.mxu0 0.0
    %733 = vmatprep.subr.mxu0 0.0
    %734 = vmatpush1.msra.mxu0 0.0
    %735 = vmatprep.subr.mxu0 0.0
    %736 = vmatpush1.msra.mxu0 0.0
    %737 = vmatprep.subr.mxu0 0.0
    %738 = vmatpush1.msra.mxu0 0.0
    %739 = vmatprep.subr.mxu0 0.0
    %740 = vmatpush1.msra.mxu0 0.0
    %741 = vmatprep.subr.mxu0 0.0
    %742 = vmatpush1.msra.mxu0 0.0
    %743 = vmatprep.subr.mxu0 0.0
    %744 = vmatpush1.msra.mxu0 0.0
    %745 = vmatprep.subr.mxu0 0.0
    %746 = vmatpush1.msra.mxu0 0.0
    %747 = vmatprep.subr.mxu0 0.0
    %748 = vmatpush1.msra.mxu0 0.0
    %749 = vmatprep.subr.mxu0 0.0
    %750 = vmatpush1.msra.mxu0 0.0
    %751 = vmatprep.mubr.f32.mxu0 0.0
    %752 = vmatmul.mubr.f32.gmra.mrb[0].mxu0 %v529
    %v753 = vpop.f32.mrb[0].mxu0
    %v754 = vadd.f32 %v607, %v753
    %v755 = vpop.f32.mrb[0].mxu0
    %v756 = vadd.f32 %v611, %v755
    %757 = vdwg.mxu0
    %v758 = vxor.u32 %v683, 2147483648
    %v759 = vxor.u32 %v756, 2147483648
    %v760 = vmul.f32 %v758, 1.442695
    %v761 = vpow.pop %v760
    %v762 = vmul.f32 %v759, 1.442695
    %v763 = vpow.pop %v762
    %v764 = vadd.f32 %v761, 1.0
    %v765 = vadd.f32 %v763, 1.0
    %v766 = vrcp.pop %v764
    %v767 = vmul.f32 1.0, %v766
    %v768 = vrcp.pop %v765
    %v769 = vmul.f32 1.0, %v768
    %v770 = vtanh.pop %v754
    %v771 = vmul.f32 %v767, %v770
    %v772 = vtanh.pop %v771
    %v773 = vmul.f32 %v769, %v772
    %774 = vst [vmem:[#allocation3] sm:$0x1] %v773
    %775 = vmatprep.subr.mxu0 %v449
    %776 = vmatpush1.msra.mxu0 %v448
    %777 = vmatprep.subr.mxu0 %v453
    %778 = vmatpush1.msra.mxu0 %v452
    %779 = vmatprep.subr.mxu0 %v457
    %780 = vmatpush1.msra.mxu0 %v456
    %781 = vmatprep.subr.mxu0 %v461
    %782 = vmatpush1.msra.mxu0 %v460
    %783 = vmatprep.subr.mxu0 %v465
    %784 = vmatpush1.msra.mxu0 %v464
    %785 = vmatprep.subr.mxu0 %v469
    %786 = vmatpush1.msra.mxu0 %v468
    %787 = vmatprep.subr.mxu0 %v473
    %788 = vmatpush1.msra.mxu0 %v472
    %789 = vmatprep.subr.mxu0 %v477
    %790 = vmatpush1.msra.mxu0 %v476
    %791 = vmatprep.subr.mxu0 %v481
    %792 = vmatpush1.msra.mxu0 %v480
    %793 = vmatprep.subr.mxu0 %v485
    %794 = vmatpush1.msra.mxu0 %v484
    %795 = vmatprep.subr.mxu0 %v489
    %796 = vmatpush1.msra.mxu0 %v488
    %797 = vmatprep.subr.mxu0 %v493
    %798 = vmatpush1.msra.mxu0 %v492
    %799 = vmatprep.subr.mxu0 %v497
    %800 = vmatpush1.msra.mxu0 %v496
    %801 = vmatprep.subr.mxu0 %v501
    %802 = vmatpush1.msra.mxu0 %v500
    %803 = vmatprep.subr.mxu0 %v505
    %804 = vmatpush1.msra.mxu0 %v504
    %805 = vmatprep.subr.mxu0 %v509
    %806 = vmatpush1.msra.mxu0 %v508
    %807 = vmatprep.subr.mxu0 0.0
    %808 = vmatpush1.msra.mxu0 0.0
    %809 = vmatprep.subr.mxu0 0.0
    %810 = vmatpush1.msra.mxu0 0.0
    %811 = vmatprep.subr.mxu0 0.0
    %812 = vmatpush1.msra.mxu0 0.0
    %813 = vmatprep.subr.mxu0 0.0
    %814 = vmatpush1.msra.mxu0 0.0
    %815 = vmatprep.subr.mxu0 0.0
    %816 = vmatpush1.msra.mxu0 0.0
    %817 = vmatprep.subr.mxu0 0.0
    %818 = vmatpush1.msra.mxu0 0.0
    %819 = vmatprep.subr.mxu0 0.0
    %820 = vmatpush1.msra.mxu0 0.0
    %821 = vmatprep.subr.mxu0 0.0
    %822 = vmatpush1.msra.mxu0 0.0
    %823 = vmatprep.subr.mxu0 0.0
    %824 = vmatpush1.msra.mxu0 0.0
    %825 = vmatprep.subr.mxu0 0.0
    %826 = vmatpush1.msra.mxu0 0.0
    %827 = vmatprep.subr.mxu0 0.0
    %828 = vmatpush1.msra.mxu0 0.0
    %829 = vmatprep.subr.mxu0 0.0
    %830 = vmatpush1.msra.mxu0 0.0
    %831 = vmatprep.subr.mxu0 0.0
    %832 = vmatpush1.msra.mxu0 0.0
    %833 = vmatprep.subr.mxu0 0.0
    %834 = vmatpush1.msra.mxu0 0.0
    %835 = vmatprep.subr.mxu0 0.0
    %836 = vmatpush1.msra.mxu0 0.0
    %837 = vmatprep.subr.mxu0 0.0
    %838 = vmatpush1.msra.mxu0 0.0
    %839 = vmatprep.mubr.f32.mxu0 0.0
    %840 = vmatmul.mubr.f32.gmra.mrb[0].mxu0 %v773
    %v841 = vpop.f32.mrb[0].mxu0
    %v842 = vadd.f32 0.0, %v841
    %v843 = vpop.f32.mrb[0].mxu0
    %v844 = vadd.f32 0.0, %v843
    %845 = vdwg.mxu0
    %846 = vmatprep.subr.mxu0 %v451
    %847 = vmatpush1.msra.mxu0 %v450
    %848 = vmatprep.subr.mxu0 %v455
    %849 = vmatpush1.msra.mxu0 %v454
    %850 = vmatprep.subr.mxu0 %v459
    %851 = vmatpush1.msra.mxu0 %v458
    %852 = vmatprep.subr.mxu0 %v463
    %853 = vmatpush1.msra.mxu0 %v462
    %854 = vmatprep.subr.mxu0 %v467
    %855 = vmatpush1.msra.mxu0 %v466
    %856 = vmatprep.subr.mxu0 %v471
    %857 = vmatpush1.msra.mxu0 %v470
    %858 = vmatprep.subr.mxu0 %v475
    %859 = vmatpush1.msra.mxu0 %v474
    %860 = vmatprep.subr.mxu0 %v479
    %861 = vmatpush1.msra.mxu0 %v478
    %862 = vmatprep.subr.mxu0 %v483
    %863 = vmatpush1.msra.mxu0 %v482
    %864 = vmatprep.subr.mxu0 %v487
    %865 = vmatpush1.msra.mxu0 %v486
    %866 = vmatprep.subr.mxu0 %v491
    %867 = vmatpush1.msra.mxu0 %v490
    %868 = vmatprep.subr.mxu0 %v495
    %869 = vmatpush1.msra.mxu0 %v494
    %870 = vmatprep.subr.mxu0 %v499
    %871 = vmatpush1.msra.mxu0 %v498
    %872 = vmatprep.subr.mxu0 %v503
    %873 = vmatpush1.msra.mxu0 %v502
    %874 = vmatprep.subr.mxu0 %v507
    %875 = vmatpush1.msra.mxu0 %v506
    %876 = vmatprep.subr.mxu0 %v511
    %877 = vmatpush1.msra.mxu0 %v510
    %878 = vmatprep.subr.mxu0 0.0
    %879 = vmatpush1.msra.mxu0 0.0
    %880 = vmatprep.subr.mxu0 0.0
    %881 = vmatpush1.msra.mxu0 0.0
    %882 = vmatprep.subr.mxu0 0.0
    %883 = vmatpush1.msra.mxu0 0.0
    %884 = vmatprep.subr.mxu0 0.0
    %885 = vmatpush1.msra.mxu0 0.0
    %886 = vmatprep.subr.mxu0 0.0
    %887 = vmatpush1.msra.mxu0 0.0
    %888 = vmatprep.subr.mxu0 0.0
    %889 = vmatpush1.msra.mxu0 0.0
    %890 = vmatprep.subr.mxu0 0.0
    %891 = vmatpush1.msra.mxu0 0.0
    %892 = vmatprep.subr.mxu0 0.0
    %893 = vmatpush1.msra.mxu0 0.0
    %894 = vmatprep.subr.mxu0 0.0
    %895 = vmatpush1.msra.mxu0 0.0
    %896 = vmatprep.subr.mxu0 0.0
    %897 = vmatpush1.msra.mxu0 0.0
    %898 = vmatprep.subr.mxu0 0.0
    %899 = vmatpush1.msra.mxu0 0.0
    %900 = vmatprep.subr.mxu0 0.0
    %901 = vmatpush1.msra.mxu0 0.0
    %902 = vmatprep.subr.mxu0 0.0
    %903 = vmatpush1.msra.mxu0 0.0
    %904 = vmatprep.subr.mxu0 0.0
    %905 = vmatpush1.msra.mxu0 0.0
    %906 = vmatprep.subr.mxu0 0.0
    %907 = vmatpush1.msra.mxu0 0.0
    %908 = vmatprep.subr.mxu0 0.0
    %909 = vmatpush1.msra.mxu0 0.0
    %910 = vmatprep.mubr.f32.mxu0 0.0
    %911 = vmatmul.mubr.f32.gmra.mrb[0].mxu0 %v773
    %v912 = vpop.f32.mrb[0].mxu0
    %v913 = vadd.f32 0.0, %v912
    %v914 = vpop.f32.mrb[0].mxu0
    %v915 = vadd.f32 0.0, %v914
    %916 = vdwg.mxu0
    %v921 = vrot.slane %v842, 7
    %v922 = vrot.slane %v844, 7
    %v923 = vrot.slane %v913, 7
    %v924 = vrot.slane %v915, 7
    %v929 = vadd.f32 %v683, %v921
    %v930 = vadd.f32 %v685, %v922
    %v931 = vadd.f32 %v754, %v923
    %v932 = vadd.f32 %v756, %v924
    %v933 = vxor.u32 %v929, 2147483648
    %v934 = vxor.u32 %v930, 2147483648
    %v935 = vxor.u32 %v932, 2147483648
    %v936 = vmul.f32 %v933, 1.442695
    %v937 = vpow.pop %v936
    %v938 = vmul.f32 %v934, 1.442695
    %v939 = vpow.pop %v938
    %v940 = vmul.f32 %v935, 1.442695
    %v941 = vpow.pop %v940
    %v942 = vadd.f32 %v937, 1.0
    %v943 = vadd.f32 %v939, 1.0
    %v944 = vadd.f32 %v941, 1.0
    %v945 = vrcp.pop %v942
    %v946 = vmul.f32 1.0, %v945
    %v947 = vrcp.pop %v943
    %v948 = vmul.f32 1.0, %v947
    %v949 = vrcp.pop %v944
    %v950 = vmul.f32 1.0, %v949
    %v951 = vtanh.pop %v931
    %v953 = vrot.slane %v771, 7
    %v955 = vmul.f32 %v948, %v953
    %v956 = vmul.f32 %v946, %v951
    %v957 = vadd.f32 %v955, %v956
    %v958 = vtanh.pop %v957
    %v959 = vmul.f32 %v950, %v958
    %960 = vst [vmem:[#allocation3] sm:$0x2] %v959
    %v962 = vrot.slane %v959, 1
    %964 = vmatprep.subr.mxu0 %v449
    %965 = vmatpush1.msra.mxu0 %v448
    %966 = vmatprep.subr.mxu0 %v453
    %967 = vmatpush1.msra.mxu0 %v452
    %968 = vmatprep.subr.mxu0 %v457
    %969 = vmatpush1.msra.mxu0 %v456
    %970 = vmatprep.subr.mxu0 %v461
    %971 = vmatpush1.msra.mxu0 %v460
    %972 = vmatprep.subr.mxu0 %v465
    %973 = vmatpush1.msra.mxu0 %v464
    %974 = vmatprep.subr.mxu0 %v469
    %975 = vmatpush1.msra.mxu0 %v468
    %976 = vmatprep.subr.mxu0 %v473
    %977 = vmatpush1.msra.mxu0 %v472
    %978 = vmatprep.subr.mxu0 %v477
    %979 = vmatpush1.msra.mxu0 %v476
    %980 = vmatprep.subr.mxu0 %v481
    %981 = vmatpush1.msra.mxu0 %v480
    %982 = vmatprep.subr.mxu0 %v485
    %983 = vmatpush1.msra.mxu0 %v484
    %984 = vmatprep.subr.mxu0 %v489
    %985 = vmatpush1.msra.mxu0 %v488
    %986 = vmatprep.subr.mxu0 %v493
    %987 = vmatpush1.msra.mxu0 %v492
    %988 = vmatprep.subr.mxu0 %v497
    %989 = vmatpush1.msra.mxu0 %v496
    %990 = vmatprep.subr.mxu0 %v501
    %991 = vmatpush1.msra.mxu0 %v500
    %992 = vmatprep.subr.mxu0 %v505
    %993 = vmatpush1.msra.mxu0 %v504
    %994 = vmatprep.subr.mxu0 %v509
    %995 = vmatpush1.msra.mxu0 %v508
    %996 = vmatprep.subr.mxu0 0.0
    %997 = vmatpush1.msra.mxu0 0.0
    %998 = vmatprep.subr.mxu0 0.0
    %999 = vmatpush1.msra.mxu0 0.0
    %1000 = vmatprep.subr.mxu0 0.0
    %1001 = vmatpush1.msra.mxu0 0.0
    %1002 = vmatprep.subr.mxu0 0.0
    %1003 = vmatpush1.msra.mxu0 0.0
    %1004 = vmatprep.subr.mxu0 0.0
    %1005 = vmatpush1.msra.mxu0 0.0
    %1006 = vmatprep.subr.mxu0 0.0
    %1007 = vmatpush1.msra.mxu0 0.0
    %1008 = vmatprep.subr.mxu0 0.0
    %1009 = vmatpush1.msra.mxu0 0.0
    %1010 = vmatprep.subr.mxu0 0.0
    %1011 = vmatpush1.msra.mxu0 0.0
    %1012 = vmatprep.subr.mxu0 0.0
    %1013 = vmatpush1.msra.mxu0 0.0
    %1014 = vmatprep.subr.mxu0 0.0
    %1015 = vmatpush1.msra.mxu0 0.0
    %1016 = vmatprep.subr.mxu0 0.0
    %1017 = vmatpush1.msra.mxu0 0.0
    %1018 = vmatprep.subr.mxu0 0.0
    %1019 = vmatpush1.msra.mxu0 0.0
    %1020 = vmatprep.subr.mxu0 0.0
    %1021 = vmatpush1.msra.mxu0 0.0
    %1022 = vmatprep.subr.mxu0 0.0
    %1023 = vmatpush1.msra.mxu0 0.0
    %1024 = vmatprep.subr.mxu0 0.0
    %1025 = vmatpush1.msra.mxu0 0.0
    %1026 = vmatprep.subr.mxu0 0.0
    %1027 = vmatpush1.msra.mxu0 0.0
    %1028 = vmatprep.mubr.f32.mxu0 0.0
    %1029 = vmatmul.mubr.f32.gmra.mrb[0].mxu0 %v962
    %v1030 = vpop.f32.mrb[0].mxu0
    %v1031 = vadd.f32 0.0, %v1030
    %v1032 = vpop.f32.mrb[0].mxu0
    %v1033 = vadd.f32 0.0, %v1032
    %1034 = vdwg.mxu0
    %1035 = vmatprep.subr.mxu0 %v451
    %1036 = vmatpush1.msra.mxu0 %v450
    %1037 = vmatprep.subr.mxu0 %v455
    %1038 = vmatpush1.msra.mxu0 %v454
    %1039 = vmatprep.subr.mxu0 %v459
    %1040 = vmatpush1.msra.mxu0 %v458
    %1041 = vmatprep.subr.mxu0 %v463
    %1042 = vmatpush1.msra.mxu0 %v462
    %1043 = vmatprep.subr.mxu0 %v467
    %1044 = vmatpush1.msra.mxu0 %v466
    %1045 = vmatprep.subr.mxu0 %v471
    %1046 = vmatpush1.msra.mxu0 %v470
    %1047 = vmatprep.subr.mxu0 %v475
    %1048 = vmatpush1.msra.mxu0 %v474
    %1049 = vmatprep.subr.mxu0 %v479
    %1050 = vmatpush1.msra.mxu0 %v478
    %1051 = vmatprep.subr.mxu0 %v483
    %1052 = vmatpush1.msra.mxu0 %v482
    %1053 = vmatprep.subr.mxu0 %v487
    %1054 = vmatpush1.msra.mxu0 %v486
    %1055 = vmatprep.subr.mxu0 %v491
    %1056 = vmatpush1.msra.mxu0 %v490
    %1057 = vmatprep.subr.mxu0 %v495
    %1058 = vmatpush1.msra.mxu0 %v494
    %1059 = vmatprep.subr.mxu0 %v499
    %1060 = vmatpush1.msra.mxu0 %v498
    %1061 = vmatprep.subr.mxu0 %v503
    %1062 = vmatpush1.msra.mxu0 %v502
    %1063 = vmatprep.subr.mxu0 %v507
    %1064 = vmatpush1.msra.mxu0 %v506
    %1065 = vmatprep.subr.mxu0 %v511
    %1066 = vmatpush1.msra.mxu0 %v510
    %1067 = vmatprep.subr.mxu0 0.0
    %1068 = vmatpush1.msra.mxu0 0.0
    %1069 = vmatprep.subr.mxu0 0.0
    %1070 = vmatpush1.msra.mxu0 0.0
    %1071 = vmatprep.subr.mxu0 0.0
    %1072 = vmatpush1.msra.mxu0 0.0
    %1073 = vmatprep.subr.mxu0 0.0
    %1074 = vmatpush1.msra.mxu0 0.0
    %1075 = vmatprep.subr.mxu0 0.0
    %1076 = vmatpush1.msra.mxu0 0.0
    %1077 = vmatprep.subr.mxu0 0.0
    %1078 = vmatpush1.msra.mxu0 0.0
    %1079 = vmatprep.subr.mxu0 0.0
    %1080 = vmatpush1.msra.mxu0 0.0
    %1081 = vmatprep.subr.mxu0 0.0
    %1082 = vmatpush1.msra.mxu0 0.0
    %1083 = vmatprep.subr.mxu0 0.0
    %1084 = vmatpush1.msra.mxu0 0.0
    %1085 = vmatprep.subr.mxu0 0.0
    %1086 = vmatpush1.msra.mxu0 0.0
    %1087 = vmatprep.subr.mxu0 0.0
    %1088 = vmatpush1.msra.mxu0 0.0
    %1089 = vmatprep.subr.mxu0 0.0
    %1090 = vmatpush1.msra.mxu0 0.0
    %1091 = vmatprep.subr.mxu0 0.0
    %1092 = vmatpush1.msra.mxu0 0.0
    %1093 = vmatprep.subr.mxu0 0.0
    %1094 = vmatpush1.msra.mxu0 0.0
    %1095 = vmatprep.subr.mxu0 0.0
    %1096 = vmatpush1.msra.mxu0 0.0
    %1097 = vmatprep.subr.mxu0 0.0
    %1098 = vmatpush1.msra.mxu0 0.0
    %1099 = vmatprep.mubr.f32.mxu0 0.0
    %1100 = vmatmul.mubr.f32.gmra.mrb[0].mxu0 %v962
    %v1101 = vpop.f32.mrb[0].mxu0
    %v1102 = vadd.f32 0.0, %v1101
    %v1103 = vpop.f32.mrb[0].mxu0
    %v1104 = vadd.f32 0.0, %v1103
    %1105 = vdwg.mxu0
    %v1110 = vrot.slane %v1031, 6
    %v1111 = vrot.slane %v1033, 6
    %v1112 = vrot.slane %v1102, 6
    %v1113 = vrot.slane %v1104, 6
    %v1118 = vadd.f32 %v683, %v1110
    %v1119 = vadd.f32 %v685, %v1111
    %v1120 = vadd.f32 %v754, %v1112
    %v1121 = vadd.f32 %v756, %v1113
    %v1122 = vxor.u32 %v1118, 2147483648
    %v1123 = vxor.u32 %v1119, 2147483648
    %v1124 = vxor.u32 %v1121, 2147483648
    %v1125 = vmul.f32 %v1122, 1.442695
    %v1126 = vpow.pop %v1125
    %v1127 = vmul.f32 %v1123, 1.442695
    %v1128 = vpow.pop %v1127
    %v1129 = vmul.f32 %v1124, 1.442695
    %v1130 = vpow.pop %v1129
    %v1131 = vadd.f32 %v1126, 1.0
    %v1132 = vadd.f32 %v1128, 1.0
    %v1133 = vadd.f32 %v1130, 1.0
    %v1134 = vrcp.pop %v1131
    %v1135 = vmul.f32 1.0, %v1134
    %v1136 = vrcp.pop %v1132
    %v1137 = vmul.f32 1.0, %v1136
    %v1138 = vrcp.pop %v1133
    %v1139 = vmul.f32 1.0, %v1138
    %v1140 = vtanh.pop %v1120
    %v1142 = vrot.slane %v957, 7
    %v1144 = vmul.f32 %v1137, %v1142
    %v1145 = vmul.f32 %v1135, %v1140
    %v1146 = vadd.f32 %v1144, %v1145
    %v1147 = vtanh.pop %v1146
    %v1148 = vmul.f32 %v1139, %v1147
    %1149 = vst [vmem:[#allocation3] sm:$0x4] %v1148
    %v1151 = vrot.slane %v1148, 2
    %1153 = vmatprep.subr.mxu0 %v449
    %1154 = vmatpush1.msra.mxu0 %v448
    %1155 = vmatprep.subr.mxu0 %v453
    %1156 = vmatpush1.msra.mxu0 %v452
    %1157 = vmatprep.subr.mxu0 %v457
    %1158 = vmatpush1.msra.mxu0 %v456
    %1159 = vmatprep.subr.mxu0 %v461
    %1160 = vmatpush1.msra.mxu0 %v460
    %1161 = vmatprep.subr.mxu0 %v465
    %1162 = vmatpush1.msra.mxu0 %v464
    %1163 = vmatprep.subr.mxu0 %v469
    %1164 = vmatpush1.msra.mxu0 %v468
    %1165 = vmatprep.subr.mxu0 %v473
    %1166 = vmatpush1.msra.mxu0 %v472
    %1167 = vmatprep.subr.mxu0 %v477
    %1168 = vmatpush1.msra.mxu0 %v476
    %1169 = vmatprep.subr.mxu0 %v481
    %1170 = vmatpush1.msra.mxu0 %v480
    %1171 = vmatprep.subr.mxu0 %v485
    %1172 = vmatpush1.msra.mxu0 %v484
    %1173 = vmatprep.subr.mxu0 %v489
    %1174 = vmatpush1.msra.mxu0 %v488
    %1175 = vmatprep.subr.mxu0 %v493
    %1176 = vmatpush1.msra.mxu0 %v492
    %1177 = vmatprep.subr.mxu0 %v497
    %1178 = vmatpush1.msra.mxu0 %v496
    %1179 = vmatprep.subr.mxu0 %v501
    %1180 = vmatpush1.msra.mxu0 %v500
    %1181 = vmatprep.subr.mxu0 %v505
    %1182 = vmatpush1.msra.mxu0 %v504
    %1183 = vmatprep.subr.mxu0 %v509
    %1184 = vmatpush1.msra.mxu0 %v508
    %1185 = vmatprep.subr.mxu0 0.0
    %1186 = vmatpush1.msra.mxu0 0.0
    %1187 = vmatprep.subr.mxu0 0.0
    %1188 = vmatpush1.msra.mxu0 0.0
    %1189 = vmatprep.subr.mxu0 0.0
    %1190 = vmatpush1.msra.mxu0 0.0
    %1191 = vmatprep.subr.mxu0 0.0
    %1192 = vmatpush1.msra.mxu0 0.0
    %1193 = vmatprep.subr.mxu0 0.0
    %1194 = vmatpush1.msra.mxu0 0.0
    %1195 = vmatprep.subr.mxu0 0.0
    %1196 = vmatpush1.msra.mxu0 0.0
    %1197 = vmatprep.subr.mxu0 0.0
    %1198 = vmatpush1.msra.mxu0 0.0
    %1199 = vmatprep.subr.mxu0 0.0
    %1200 = vmatpush1.msra.mxu0 0.0
    %1201 = vmatprep.subr.mxu0 0.0
    %1202 = vmatpush1.msra.mxu0 0.0
    %1203 = vmatprep.subr.mxu0 0.0
    %1204 = vmatpush1.msra.mxu0 0.0
    %1205 = vmatprep.subr.mxu0 0.0
    %1206 = vmatpush1.msra.mxu0 0.0
    %1207 = vmatprep.subr.mxu0 0.0
    %1208 = vmatpush1.msra.mxu0 0.0
    %1209 = vmatprep.subr.mxu0 0.0
    %1210 = vmatpush1.msra.mxu0 0.0
    %1211 = vmatprep.subr.mxu0 0.0
    %1212 = vmatpush1.msra.mxu0 0.0
    %1213 = vmatprep.subr.mxu0 0.0
    %1214 = vmatpush1.msra.mxu0 0.0
    %1215 = vmatprep.subr.mxu0 0.0
    %1216 = vmatpush1.msra.mxu0 0.0
    %1217 = vmatprep.mubr.f32.mxu0 0.0
    %1218 = vmatmul.mubr.f32.gmra.mrb[0].mxu0 %v1151
    %v1219 = vpop.f32.mrb[0].mxu0
    %v1220 = vadd.f32 0.0, %v1219
    %v1221 = vpop.f32.mrb[0].mxu0
    %v1222 = vadd.f32 0.0, %v1221
    %1223 = vdwg.mxu0
    %1224 = vmatprep.subr.mxu0 %v451
    %1225 = vmatpush1.msra.mxu0 %v450
    %1226 = vmatprep.subr.mxu0 %v455
    %1227 = vmatpush1.msra.mxu0 %v454
    %1228 = vmatprep.subr.mxu0 %v459
    %1229 = vmatpush1.msra.mxu0 %v458
    %1230 = vmatprep.subr.mxu0 %v463
    %1231 = vmatpush1.msra.mxu0 %v462
    %1232 = vmatprep.subr.mxu0 %v467
    %1233 = vmatpush1.msra.mxu0 %v466
    %1234 = vmatprep.subr.mxu0 %v471
    %1235 = vmatpush1.msra.mxu0 %v470
    %1236 = vmatprep.subr.mxu0 %v475
    %1237 = vmatpush1.msra.mxu0 %v474
    %1238 = vmatprep.subr.mxu0 %v479
    %1239 = vmatpush1.msra.mxu0 %v478
    %1240 = vmatprep.subr.mxu0 %v483
    %1241 = vmatpush1.msra.mxu0 %v482
    %1242 = vmatprep.subr.mxu0 %v487
    %1243 = vmatpush1.msra.mxu0 %v486
    %1244 = vmatprep.subr.mxu0 %v491
    %1245 = vmatpush1.msra.mxu0 %v490
    %1246 = vmatprep.subr.mxu0 %v495
    %1247 = vmatpush1.msra.mxu0 %v494
    %1248 = vmatprep.subr.mxu0 %v499
    %1249 = vmatpush1.msra.mxu0 %v498
    %1250 = vmatprep.subr.mxu0 %v503
    %1251 = vmatpush1.msra.mxu0 %v502
    %1252 = vmatprep.subr.mxu0 %v507
    %1253 = vmatpush1.msra.mxu0 %v506
    %1254 = vmatprep.subr.mxu0 %v511
    %1255 = vmatpush1.msra.mxu0 %v510
    %1256 = vmatprep.subr.mxu0 0.0
    %1257 = vmatpush1.msra.mxu0 0.0
    %1258 = vmatprep.subr.mxu0 0.0
    %1259 = vmatpush1.msra.mxu0 0.0
    %1260 = vmatprep.subr.mxu0 0.0
    %1261 = vmatpush1.msra.mxu0 0.0
    %1262 = vmatprep.subr.mxu0 0.0
    %1263 = vmatpush1.msra.mxu0 0.0
    %1264 = vmatprep.subr.mxu0 0.0
    %1265 = vmatpush1.msra.mxu0 0.0
    %1266 = vmatprep.subr.mxu0 0.0
    %1267 = vmatpush1.msra.mxu0 0.0
    %1268 = vmatprep.subr.mxu0 0.0
    %1269 = vmatpush1.msra.mxu0 0.0
    %1270 = vmatprep.subr.mxu0 0.0
    %1271 = vmatpush1.msra.mxu0 0.0
    %1272 = vmatprep.subr.mxu0 0.0
    %1273 = vmatpush1.msra.mxu0 0.0
    %1274 = vmatprep.subr.mxu0 0.0
    %1275 = vmatpush1.msra.mxu0 0.0
    %1276 = vmatprep.subr.mxu0 0.0
    %1277 = vmatpush1.msra.mxu0 0.0
    %1278 = vmatprep.subr.mxu0 0.0
    %1279 = vmatpush1.msra.mxu0 0.0
    %1280 = vmatprep.subr.mxu0 0.0
    %1281 = vmatpush1.msra.mxu0 0.0
    %1282 = vmatprep.subr.mxu0 0.0
    %1283 = vmatpush1.msra.mxu0 0.0
    %1284 = vmatprep.subr.mxu0 0.0
    %1285 = vmatpush1.msra.mxu0 0.0
    %1286 = vmatprep.subr.mxu0 0.0
    %1287 = vmatpush1.msra.mxu0 0.0
    %1288 = vmatprep.mubr.f32.mxu0 0.0
    %1289 = vmatmul.mubr.f32.gmra.mrb[0].mxu0 %v1151
    %v1290 = vpop.f32.mrb[0].mxu0
    %v1291 = vadd.f32 0.0, %v1290
    %v1292 = vpop.f32.mrb[0].mxu0
    %v1293 = vadd.f32 0.0, %v1292
    %1294 = vdwg.mxu0
    %v1299 = vrot.slane %v1220, 5
    %v1300 = vrot.slane %v1222, 5
    %v1301 = vrot.slane %v1291, 5
    %v1302 = vrot.slane %v1293, 5
    %v1307 = vadd.f32 %v683, %v1299
    %v1308 = vadd.f32 %v685, %v1300
    %v1309 = vadd.f32 %v754, %v1301
    %v1310 = vadd.f32 %v756, %v1302
    %v1311 = vxor.u32 %v1307, 2147483648
    %v1312 = vxor.u32 %v1308, 2147483648
    %v1313 = vxor.u32 %v1310, 2147483648
    %v1314 = vmul.f32 %v1311, 1.442695
    %v1315 = vpow.pop %v1314
    %v1316 = vmul.f32 %v1312, 1.442695
    %v1317 = vpow.pop %v1316
    %v1318 = vmul.f32 %v1313, 1.442695
    %v1319 = vpow.pop %v1318
    %v1320 = vadd.f32 %v1315, 1.0
    %v1321 = vadd.f32 %v1317, 1.0
    %v1322 = vadd.f32 %v1319, 1.0
    %v1323 = vrcp.pop %v1320
    %v1324 = vmul.f32 1.0, %v1323
    %v1325 = vrcp.pop %v1321
    %v1326 = vmul.f32 1.0, %v1325
    %v1327 = vrcp.pop %v1322
    %v1328 = vmul.f32 1.0, %v1327
    %v1329 = vtanh.pop %v1309
    %v1331 = vrot.slane %v1146, 7
    %v1333 = vmul.f32 %v1326, %v1331
    %v1334 = vmul.f32 %v1324, %v1329
    %v1335 = vadd.f32 %v1333, %v1334
    %v1336 = vtanh.pop %v1335
    %v1337 = vmul.f32 %v1328, %v1336
    %1338 = vst [vmem:[#allocation3] sm:$0x8] %v1337
    %v1340 = vrot.slane %v1337, 3
    %1342 = vmatprep.subr.mxu0 %v449
    %1343 = vmatpush1.msra.mxu0 %v448
    %1344 = vmatprep.subr.mxu0 %v453
    %1345 = vmatpush1.msra.mxu0 %v452
    %1346 = vmatprep.subr.mxu0 %v457
    %1347 = vmatpush1.msra.mxu0 %v456
    %1348 = vmatprep.subr.mxu0 %v461
    %1349 = vmatpush1.msra.mxu0 %v460
    %1350 = vmatprep.subr.mxu0 %v465
    %1351 = vmatpush1.msra.mxu0 %v464
    %1352 = vmatprep.subr.mxu0 %v469
    %1353 = vmatpush1.msra.mxu0 %v468
    %1354 = vmatprep.subr.mxu0 %v473
    %1355 = vmatpush1.msra.mxu0 %v472
    %1356 = vmatprep.subr.mxu0 %v477
    %1357 = vmatpush1.msra.mxu0 %v476
    %1358 = vmatprep.subr.mxu0 %v481
    %1359 = vmatpush1.msra.mxu0 %v480
    %1360 = vmatprep.subr.mxu0 %v485
    %1361 = vmatpush1.msra.mxu0 %v484
    %1362 = vmatprep.subr.mxu0 %v489
    %1363 = vmatpush1.msra.mxu0 %v488
    %1364 = vmatprep.subr.mxu0 %v493
    %1365 = vmatpush1.msra.mxu0 %v492
    %1366 = vmatprep.subr.mxu0 %v497
    %1367 = vmatpush1.msra.mxu0 %v496
    %1368 = vmatprep.subr.mxu0 %v501
    %1369 = vmatpush1.msra.mxu0 %v500
    %1370 = vmatprep.subr.mxu0 %v505
    %1371 = vmatpush1.msra.mxu0 %v504
    %1372 = vmatprep.subr.mxu0 %v509
    %1373 = vmatpush1.msra.mxu0 %v508
    %1374 = vmatprep.subr.mxu0 0.0
    %1375 = vmatpush1.msra.mxu0 0.0
    %1376 = vmatprep.subr.mxu0 0.0
    %1377 = vmatpush1.msra.mxu0 0.0
    %1378 = vmatprep.subr.mxu0 0.0
    %1379 = vmatpush1.msra.mxu0 0.0
    %1380 = vmatprep.subr.mxu0 0.0
    %1381 = vmatpush1.msra.mxu0 0.0
    %1382 = vmatprep.subr.mxu0 0.0
    %1383 = vmatpush1.msra.mxu0 0.0
    %1384 = vmatprep.subr.mxu0 0.0
    %1385 = vmatpush1.msra.mxu0 0.0
    %1386 = vmatprep.subr.mxu0 0.0
    %1387 = vmatpush1.msra.mxu0 0.0
    %1388 = vmatprep.subr.mxu0 0.0
    %1389 = vmatpush1.msra.mxu0 0.0
    %1390 = vmatprep.subr.mxu0 0.0
    %1391 = vmatpush1.msra.mxu0 0.0
    %1392 = vmatprep.subr.mxu0 0.0
    %1393 = vmatpush1.msra.mxu0 0.0
    %1394 = vmatprep.subr.mxu0 0.0
    %1395 = vmatpush1.msra.mxu0 0.0
    %1396 = vmatprep.subr.mxu0 0.0
    %1397 = vmatpush1.msra.mxu0 0.0
    %1398 = vmatprep.subr.mxu0 0.0
    %1399 = vmatpush1.msra.mxu0 0.0
    %1400 = vmatprep.subr.mxu0 0.0
    %1401 = vmatpush1.msra.mxu0 0.0
    %1402 = vmatprep.subr.mxu0 0.0
    %1403 = vmatpush1.msra.mxu0 0.0
    %1404 = vmatprep.subr.mxu0 0.0
    %1405 = vmatpush1.msra.mxu0 0.0
    %1406 = vmatprep.mubr.f32.mxu0 0.0
    %1407 = vmatmul.mubr.f32.gmra.mrb[0].mxu0 %v1340
    %v1408 = vpop.f32.mrb[0].mxu0
    %v1409 = vadd.f32 0.0, %v1408
    %v1410 = vpop.f32.mrb[0].mxu0
    %v1411 = vadd.f32 0.0, %v1410
    %1412 = vdwg.mxu0
    %1413 = vmatprep.subr.mxu0 %v451
    %1414 = vmatpush1.msra.mxu0 %v450
    %1415 = vmatprep.subr.mxu0 %v455
    %1416 = vmatpush1.msra.mxu0 %v454
    %1417 = vmatprep.subr.mxu0 %v459
    %1418 = vmatpush1.msra.mxu0 %v458
    %1419 = vmatprep.subr.mxu0 %v463
    %1420 = vmatpush1.msra.mxu0 %v462
    %1421 = vmatprep.subr.mxu0 %v467
    %1422 = vmatpush1.msra.mxu0 %v466
    %1423 = vmatprep.subr.mxu0 %v471
    %1424 = vmatpush1.msra.mxu0 %v470
    %1425 = vmatprep.subr.mxu0 %v475
    %1426 = vmatpush1.msra.mxu0 %v474
    %1427 = vmatprep.subr.mxu0 %v479
    %1428 = vmatpush1.msra.mxu0 %v478
    %1429 = vmatprep.subr.mxu0 %v483
    %1430 = vmatpush1.msra.mxu0 %v482
    %1431 = vmatprep.subr.mxu0 %v487
    %1432 = vmatpush1.msra.mxu0 %v486
    %1433 = vmatprep.subr.mxu0 %v491
    %1434 = vmatpush1.msra.mxu0 %v490
    %1435 = vmatprep.subr.mxu0 %v495
    %1436 = vmatpush1.msra.mxu0 %v494
    %1437 = vmatprep.subr.mxu0 %v499
    %1438 = vmatpush1.msra.mxu0 %v498
    %1439 = vmatprep.subr.mxu0 %v503
    %1440 = vmatpush1.msra.mxu0 %v502
    %1441 = vmatprep.subr.mxu0 %v507
    %1442 = vmatpush1.msra.mxu0 %v506
    %1443 = vmatprep.subr.mxu0 %v511
    %1444 = vmatpush1.msra.mxu0 %v510
    %1445 = vmatprep.subr.mxu0 0.0
    %1446 = vmatpush1.msra.mxu0 0.0
    %1447 = vmatprep.subr.mxu0 0.0
    %1448 = vmatpush1.msra.mxu0 0.0
    %1449 = vmatprep.subr.mxu0 0.0
    %1450 = vmatpush1.msra.mxu0 0.0
    %1451 = vmatprep.subr.mxu0 0.0
    %1452 = vmatpush1.msra.mxu0 0.0
    %1453 = vmatprep.subr.mxu0 0.0
    %1454 = vmatpush1.msra.mxu0 0.0
    %1455 = vmatprep.subr.mxu0 0.0
    %1456 = vmatpush1.msra.mxu0 0.0
    %1457 = vmatprep.subr.mxu0 0.0
    %1458 = vmatpush1.msra.mxu0 0.0
    %1459 = vmatprep.subr.mxu0 0.0
    %1460 = vmatpush1.msra.mxu0 0.0
    %1461 = vmatprep.subr.mxu0 0.0
    %1462 = vmatpush1.msra.mxu0 0.0
    %1463 = vmatprep.subr.mxu0 0.0
    %1464 = vmatpush1.msra.mxu0 0.0
    %1465 = vmatprep.subr.mxu0 0.0
    %1466 = vmatpush1.msra.mxu0 0.0
    %1467 = vmatprep.subr.mxu0 0.0
    %1468 = vmatpush1.msra.mxu0 0.0
    %1469 = vmatprep.subr.mxu0 0.0
    %1470 = vmatpush1.msra.mxu0 0.0
    %1471 = vmatprep.subr.mxu0 0.0
    %1472 = vmatpush1.msra.mxu0 0.0
    %1473 = vmatprep.subr.mxu0 0.0
    %1474 = vmatpush1.msra.mxu0 0.0
    %1475 = vmatprep.subr.mxu0 0.0
    %1476 = vmatpush1.msra.mxu0 0.0
    %1477 = vmatprep.mubr.f32.mxu0 0.0
    %1478 = vmatmul.mubr.f32.gmra.mrb[0].mxu0 %v1340
    %v1479 = vpop.f32.mrb[0].mxu0
    %v1480 = vadd.f32 0.0, %v1479
    %v1481 = vpop.f32.mrb[0].mxu0
    %v1482 = vadd.f32 0.0, %v1481
    %1483 = vdwg.mxu0
    %v1488 = vrot.slane %v1409, 4
    %v1489 = vrot.slane %v1411, 4
    %v1490 = vrot.slane %v1480, 4
    %v1491 = vrot.slane %v1482, 4
    %v1496 = vadd.f32 %v683, %v1488
    %v1497 = vadd.f32 %v685, %v1489
    %v1498 = vadd.f32 %v754, %v1490
    %v1499 = vadd.f32 %v756, %v1491
    %v1500 = vxor.u32 %v1496, 2147483648
    %v1501 = vxor.u32 %v1497, 2147483648
    %v1502 = vxor.u32 %v1499, 2147483648
    %v1503 = vmul.f32 %v1500, 1.442695
    %v1504 = vpow.pop %v1503
    %v1505 = vmul.f32 %v1501, 1.442695
    %v1506 = vpow.pop %v1505
    %v1507 = vmul.f32 %v1502, 1.442695
    %v1508 = vpow.pop %v1507
    %v1509 = vadd.f32 %v1504, 1.0
    %v1510 = vadd.f32 %v1506, 1.0
    %v1511 = vadd.f32 %v1508, 1.0
    %v1512 = vrcp.pop %v1509
    %v1513 = vmul.f32 1.0, %v1512
    %v1514 = vrcp.pop %v1510
    %v1515 = vmul.f32 1.0, %v1514
    %v1516 = vrcp.pop %v1511
    %v1517 = vmul.f32 1.0, %v1516
    %v1518 = vtanh.pop %v1498
    %v1520 = vrot.slane %v1335, 7
    %v1522 = vmul.f32 %v1515, %v1520
    %v1523 = vmul.f32 %v1513, %v1518
    %v1524 = vadd.f32 %v1522, %v1523
    %v1525 = vtanh.pop %v1524
    %v1526 = vmul.f32 %v1517, %v1525
    %1527 = vst [vmem:[#allocation3] sm:$0x10] %v1526
    %v1529 = vrot.slane %v1526, 4
    %1531 = vmatprep.subr.mxu0 %v449
    %1532 = vmatpush1.msra.mxu0 %v448
    %1533 = vmatprep.subr.mxu0 %v453
    %1534 = vmatpush1.msra.mxu0 %v452
    %1535 = vmatprep.subr.mxu0 %v457
    %1536 = vmatpush1.msra.mxu0 %v456
    %1537 = vmatprep.subr.mxu0 %v461
    %1538 = vmatpush1.msra.mxu0 %v460
    %1539 = vmatprep.subr.mxu0 %v465
    %1540 = vmatpush1.msra.mxu0 %v464
    %1541 = vmatprep.subr.mxu0 %v469
    %1542 = vmatpush1.msra.mxu0 %v468
    %1543 = vmatprep.subr.mxu0 %v473
    %1544 = vmatpush1.msra.mxu0 %v472
    %1545 = vmatprep.subr.mxu0 %v477
    %1546 = vmatpush1.msra.mxu0 %v476
    %1547 = vmatprep.subr.mxu0 %v481
    %1548 = vmatpush1.msra.mxu0 %v480
    %1549 = vmatprep.subr.mxu0 %v485
    %1550 = vmatpush1.msra.mxu0 %v484
    %1551 = vmatprep.subr.mxu0 %v489
    %1552 = vmatpush1.msra.mxu0 %v488
    %1553 = vmatprep.subr.mxu0 %v493
    %1554 = vmatpush1.msra.mxu0 %v492
    %1555 = vmatprep.subr.mxu0 %v497
    %1556 = vmatpush1.msra.mxu0 %v496
    %1557 = vmatprep.subr.mxu0 %v501
    %1558 = vmatpush1.msra.mxu0 %v500
    %1559 = vmatprep.subr.mxu0 %v505
    %1560 = vmatpush1.msra.mxu0 %v504
    %1561 = vmatprep.subr.mxu0 %v509
    %1562 = vmatpush1.msra.mxu0 %v508
    %1563 = vmatprep.subr.mxu0 0.0
    %1564 = vmatpush1.msra.mxu0 0.0
    %1565 = vmatprep.subr.mxu0 0.0
    %1566 = vmatpush1.msra.mxu0 0.0
    %1567 = vmatprep.subr.mxu0 0.0
    %1568 = vmatpush1.msra.mxu0 0.0
    %1569 = vmatprep.subr.mxu0 0.0
    %1570 = vmatpush1.msra.mxu0 0.0
    %1571 = vmatprep.subr.mxu0 0.0
    %1572 = vmatpush1.msra.mxu0 0.0
    %1573 = vmatprep.subr.mxu0 0.0
    %1574 = vmatpush1.msra.mxu0 0.0
    %1575 = vmatprep.subr.mxu0 0.0
    %1576 = vmatpush1.msra.mxu0 0.0
    %1577 = vmatprep.subr.mxu0 0.0
    %1578 = vmatpush1.msra.mxu0 0.0
    %1579 = vmatprep.subr.mxu0 0.0
    %1580 = vmatpush1.msra.mxu0 0.0
    %1581 = vmatprep.subr.mxu0 0.0
    %1582 = vmatpush1.msra.mxu0 0.0
    %1583 = vmatprep.subr.mxu0 0.0
    %1584 = vmatpush1.msra.mxu0 0.0
    %1585 = vmatprep.subr.mxu0 0.0
    %1586 = vmatpush1.msra.mxu0 0.0
    %1587 = vmatprep.subr.mxu0 0.0
    %1588 = vmatpush1.msra.mxu0 0.0
    %1589 = vmatprep.subr.mxu0 0.0
    %1590 = vmatpush1.msra.mxu0 0.0
    %1591 = vmatprep.subr.mxu0 0.0
    %1592 = vmatpush1.msra.mxu0 0.0
    %1593 = vmatprep.subr.mxu0 0.0
    %1594 = vmatpush1.msra.mxu0 0.0
    %1595 = vmatprep.mubr.f32.mxu0 0.0
    %1596 = vmatmul.mubr.f32.gmra.mrb[0].mxu0 %v1529
    %v1597 = vpop.f32.mrb[0].mxu0
    %v1598 = vadd.f32 0.0, %v1597
    %v1599 = vpop.f32.mrb[0].mxu0
    %v1600 = vadd.f32 0.0, %v1599
    %1601 = vdwg.mxu0
    %1602 = vmatprep.subr.mxu0 %v451
    %1603 = vmatpush1.msra.mxu0 %v450
    %1604 = vmatprep.subr.mxu0 %v455
    %1605 = vmatpush1.msra.mxu0 %v454
    %1606 = vmatprep.subr.mxu0 %v459
    %1607 = vmatpush1.msra.mxu0 %v458
    %1608 = vmatprep.subr.mxu0 %v463
    %1609 = vmatpush1.msra.mxu0 %v462
    %1610 = vmatprep.subr.mxu0 %v467
    %1611 = vmatpush1.msra.mxu0 %v466
    %1612 = vmatprep.subr.mxu0 %v471
    %1613 = vmatpush1.msra.mxu0 %v470
    %1614 = vmatprep.subr.mxu0 %v475
    %1615 = vmatpush1.msra.mxu0 %v474
    %1616 = vmatprep.subr.mxu0 %v479
    %1617 = vmatpush1.msra.mxu0 %v478
    %1618 = vmatprep.subr.mxu0 %v483
    %1619 = vmatpush1.msra.mxu0 %v482
    %1620 = vmatprep.subr.mxu0 %v487
    %1621 = vmatpush1.msra.mxu0 %v486
    %1622 = vmatprep.subr.mxu0 %v491
    %1623 = vmatpush1.msra.mxu0 %v490
    %1624 = vmatprep.subr.mxu0 %v495
    %1625 = vmatpush1.msra.mxu0 %v494
    %1626 = vmatprep.subr.mxu0 %v499
    %1627 = vmatpush1.msra.mxu0 %v498
    %1628 = vmatprep.subr.mxu0 %v503
    %1629 = vmatpush1.msra.mxu0 %v502
    %1630 = vmatprep.subr.mxu0 %v507
    %1631 = vmatpush1.msra.mxu0 %v506
    %1632 = vmatprep.subr.mxu0 %v511
    %1633 = vmatpush1.msra.mxu0 %v510
    %1634 = vmatprep.subr.mxu0 0.0
    %1635 = vmatpush1.msra.mxu0 0.0
    %1636 = vmatprep.subr.mxu0 0.0
    %1637 = vmatpush1.msra.mxu0 0.0
    %1638 = vmatprep.subr.mxu0 0.0
    %1639 = vmatpush1.msra.mxu0 0.0
    %1640 = vmatprep.subr.mxu0 0.0
    %1641 = vmatpush1.msra.mxu0 0.0
    %1642 = vmatprep.subr.mxu0 0.0
    %1643 = vmatpush1.msra.mxu0 0.0
    %1644 = vmatprep.subr.mxu0 0.0
    %1645 = vmatpush1.msra.mxu0 0.0
    %1646 = vmatprep.subr.mxu0 0.0
    %1647 = vmatpush1.msra.mxu0 0.0
    %1648 = vmatprep.subr.mxu0 0.0
    %1649 = vmatpush1.msra.mxu0 0.0
    %1650 = vmatprep.subr.mxu0 0.0
    %1651 = vmatpush1.msra.mxu0 0.0
    %1652 = vmatprep.subr.mxu0 0.0
    %1653 = vmatpush1.msra.mxu0 0.0
    %1654 = vmatprep.subr.mxu0 0.0
    %1655 = vmatpush1.msra.mxu0 0.0
    %1656 = vmatprep.subr.mxu0 0.0
    %1657 = vmatpush1.msra.mxu0 0.0
    %1658 = vmatprep.subr.mxu0 0.0
    %1659 = vmatpush1.msra.mxu0 0.0
    %1660 = vmatprep.subr.mxu0 0.0
    %1661 = vmatpush1.msra.mxu0 0.0
    %1662 = vmatprep.subr.mxu0 0.0
    %1663 = vmatpush1.msra.mxu0 0.0
    %1664 = vmatprep.subr.mxu0 0.0
    %1665 = vmatpush1.msra.mxu0 0.0
    %1666 = vmatprep.mubr.f32.mxu0 0.0
    %1667 = vmatmul.mubr.f32.gmra.mrb[0].mxu0 %v1529
    %v1668 = vpop.f32.mrb[0].mxu0
    %v1669 = vadd.f32 0.0, %v1668
    %v1670 = vpop.f32.mrb[0].mxu0
    %v1671 = vadd.f32 0.0, %v1670
    %1672 = vdwg.mxu0
    %v1677 = vrot.slane %v1598, 3
    %v1678 = vrot.slane %v1600, 3
    %v1679 = vrot.slane %v1669, 3
    %v1680 = vrot.slane %v1671, 3
    %v1685 = vadd.f32 %v683, %v1677
    %v1686 = vadd.f32 %v685, %v1678
    %v1687 = vadd.f32 %v754, %v1679
    %v1688 = vadd.f32 %v756, %v1680
    %v1689 = vxor.u32 %v1685, 2147483648
    %v1690 = vxor.u32 %v1686, 2147483648
    %v1691 = vxor.u32 %v1688, 2147483648
    %v1692 = vmul.f32 %v1689, 1.442695
    %v1693 = vpow.pop %v1692
    %v1694 = vmul.f32 %v1690, 1.442695
    %v1695 = vpow.pop %v1694
    %v1696 = vmul.f32 %v1691, 1.442695
    %v1697 = vpow.pop %v1696
    %v1698 = vadd.f32 %v1693, 1.0
    %v1699 = vadd.f32 %v1695, 1.0
    %v1700 = vadd.f32 %v1697, 1.0
    %v1701 = vrcp.pop %v1698
    %v1702 = vmul.f32 1.0, %v1701
    %v1703 = vrcp.pop %v1699
    %v1704 = vmul.f32 1.0, %v1703
    %v1705 = vrcp.pop %v1700
    %v1706 = vmul.f32 1.0, %v1705
    %v1707 = vtanh.pop %v1687
    %v1709 = vrot.slane %v1524, 7
    %v1711 = vmul.f32 %v1704, %v1709
    %v1712 = vmul.f32 %v1702, %v1707
    %v1713 = vadd.f32 %v1711, %v1712
    %v1714 = vtanh.pop %v1713
    %v1715 = vmul.f32 %v1706, %v1714
    %1716 = vst [vmem:[#allocation3] sm:$0x20] %v1715
    %v1718 = vrot.slane %v1715, 5
    %1720 = vmatprep.subr.mxu0 %v449
    %1721 = vmatpush1.msra.mxu0 %v448
    %1722 = vmatprep.subr.mxu0 %v453
    %1723 = vmatpush1.msra.mxu0 %v452
    %1724 = vmatprep.subr.mxu0 %v457
    %1725 = vmatpush1.msra.mxu0 %v456
    %1726 = vmatprep.subr.mxu0 %v461
    %1727 = vmatpush1.msra.mxu0 %v460
    %1728 = vmatprep.subr.mxu0 %v465
    %1729 = vmatpush1.msra.mxu0 %v464
    %1730 = vmatprep.subr.mxu0 %v469
    %1731 = vmatpush1.msra.mxu0 %v468
    %1732 = vmatprep.subr.mxu0 %v473
    %1733 = vmatpush1.msra.mxu0 %v472
    %1734 = vmatprep.subr.mxu0 %v477
    %1735 = vmatpush1.msra.mxu0 %v476
    %1736 = vmatprep.subr.mxu0 %v481
    %1737 = vmatpush1.msra.mxu0 %v480
    %1738 = vmatprep.subr.mxu0 %v485
    %1739 = vmatpush1.msra.mxu0 %v484
    %1740 = vmatprep.subr.mxu0 %v489
    %1741 = vmatpush1.msra.mxu0 %v488
    %1742 = vmatprep.subr.mxu0 %v493
    %1743 = vmatpush1.msra.mxu0 %v492
    %1744 = vmatprep.subr.mxu0 %v497
    %1745 = vmatpush1.msra.mxu0 %v496
    %1746 = vmatprep.subr.mxu0 %v501
    %1747 = vmatpush1.msra.mxu0 %v500
    %1748 = vmatprep.subr.mxu0 %v505
    %1749 = vmatpush1.msra.mxu0 %v504
    %1750 = vmatprep.subr.mxu0 %v509
    %1751 = vmatpush1.msra.mxu0 %v508
    %1752 = vmatprep.subr.mxu0 0.0
    %1753 = vmatpush1.msra.mxu0 0.0
    %1754 = vmatprep.subr.mxu0 0.0
    %1755 = vmatpush1.msra.mxu0 0.0
    %1756 = vmatprep.subr.mxu0 0.0
    %1757 = vmatpush1.msra.mxu0 0.0
    %1758 = vmatprep.subr.mxu0 0.0
    %1759 = vmatpush1.msra.mxu0 0.0
    %1760 = vmatprep.subr.mxu0 0.0
    %1761 = vmatpush1.msra.mxu0 0.0
    %1762 = vmatprep.subr.mxu0 0.0
    %1763 = vmatpush1.msra.mxu0 0.0
    %1764 = vmatprep.subr.mxu0 0.0
    %1765 = vmatpush1.msra.mxu0 0.0
    %1766 = vmatprep.subr.mxu0 0.0
    %1767 = vmatpush1.msra.mxu0 0.0
    %1768 = vmatprep.subr.mxu0 0.0
    %1769 = vmatpush1.msra.mxu0 0.0
    %1770 = vmatprep.subr.mxu0 0.0
    %1771 = vmatpush1.msra.mxu0 0.0
    %1772 = vmatprep.subr.mxu0 0.0
    %1773 = vmatpush1.msra.mxu0 0.0
    %1774 = vmatprep.subr.mxu0 0.0
    %1775 = vmatpush1.msra.mxu0 0.0
    %1776 = vmatprep.subr.mxu0 0.0
    %1777 = vmatpush1.msra.mxu0 0.0
    %1778 = vmatprep.subr.mxu0 0.0
    %1779 = vmatpush1.msra.mxu0 0.0
    %1780 = vmatprep.subr.mxu0 0.0
    %1781 = vmatpush1.msra.mxu0 0.0
    %1782 = vmatprep.subr.mxu0 0.0
    %1783 = vmatpush1.msra.mxu0 0.0
    %1784 = vmatprep.mubr.f32.mxu0 0.0
    %1785 = vmatmul.mubr.f32.gmra.mrb[0].mxu0 %v1718
    %v1786 = vpop.f32.mrb[0].mxu0
    %v1787 = vadd.f32 0.0, %v1786
    %v1788 = vpop.f32.mrb[0].mxu0
    %v1789 = vadd.f32 0.0, %v1788
    %1790 = vdwg.mxu0
    %1791 = vmatprep.subr.mxu0 %v451
    %1792 = vmatpush1.msra.mxu0 %v450
    %1793 = vmatprep.subr.mxu0 %v455
    %1794 = vmatpush1.msra.mxu0 %v454
    %1795 = vmatprep.subr.mxu0 %v459
    %1796 = vmatpush1.msra.mxu0 %v458
    %1797 = vmatprep.subr.mxu0 %v463
    %1798 = vmatpush1.msra.mxu0 %v462
    %1799 = vmatprep.subr.mxu0 %v467
    %1800 = vmatpush1.msra.mxu0 %v466
    %1801 = vmatprep.subr.mxu0 %v471
    %1802 = vmatpush1.msra.mxu0 %v470
    %1803 = vmatprep.subr.mxu0 %v475
    %1804 = vmatpush1.msra.mxu0 %v474
    %1805 = vmatprep.subr.mxu0 %v479
    %1806 = vmatpush1.msra.mxu0 %v478
    %1807 = vmatprep.subr.mxu0 %v483
    %1808 = vmatpush1.msra.mxu0 %v482
    %1809 = vmatprep.subr.mxu0 %v487
    %1810 = vmatpush1.msra.mxu0 %v486
    %1811 = vmatprep.subr.mxu0 %v491
    %1812 = vmatpush1.msra.mxu0 %v490
    %1813 = vmatprep.subr.mxu0 %v495
    %1814 = vmatpush1.msra.mxu0 %v494
    %1815 = vmatprep.subr.mxu0 %v499
    %1816 = vmatpush1.msra.mxu0 %v498
    %1817 = vmatprep.subr.mxu0 %v503
    %1818 = vmatpush1.msra.mxu0 %v502
    %1819 = vmatprep.subr.mxu0 %v507
    %1820 = vmatpush1.msra.mxu0 %v506
    %1821 = vmatprep.subr.mxu0 %v511
    %1822 = vmatpush1.msra.mxu0 %v510
    %1823 = vmatprep.subr.mxu0 0.0
    %1824 = vmatpush1.msra.mxu0 0.0
    %1825 = vmatprep.subr.mxu0 0.0
    %1826 = vmatpush1.msra.mxu0 0.0
    %1827 = vmatprep.subr.mxu0 0.0
    %1828 = vmatpush1.msra.mxu0 0.0
    %1829 = vmatprep.subr.mxu0 0.0
    %1830 = vmatpush1.msra.mxu0 0.0
    %1831 = vmatprep.subr.mxu0 0.0
    %1832 = vmatpush1.msra.mxu0 0.0
    %1833 = vmatprep.subr.mxu0 0.0
    %1834 = vmatpush1.msra.mxu0 0.0
    %1835 = vmatprep.subr.mxu0 0.0
    %1836 = vmatpush1.msra.mxu0 0.0
    %1837 = vmatprep.subr.mxu0 0.0
    %1838 = vmatpush1.msra.mxu0 0.0
    %1839 = vmatprep.subr.mxu0 0.0
    %1840 = vmatpush1.msra.mxu0 0.0
    %1841 = vmatprep.subr.mxu0 0.0
    %1842 = vmatpush1.msra.mxu0 0.0
    %1843 = vmatprep.subr.mxu0 0.0
    %1844 = vmatpush1.msra.mxu0 0.0
    %1845 = vmatprep.subr.mxu0 0.0
    %1846 = vmatpush1.msra.mxu0 0.0
    %1847 = vmatprep.subr.mxu0 0.0
    %1848 = vmatpush1.msra.mxu0 0.0
    %1849 = vmatprep.subr.mxu0 0.0
    %1850 = vmatpush1.msra.mxu0 0.0
    %1851 = vmatprep.subr.mxu0 0.0
    %1852 = vmatpush1.msra.mxu0 0.0
    %1853 = vmatprep.subr.mxu0 0.0
    %1854 = vmatpush1.msra.mxu0 0.0
    %1855 = vmatprep.mubr.f32.mxu0 0.0
    %1856 = vmatmul.mubr.f32.gmra.mrb[0].mxu0 %v1718
    %v1857 = vpop.f32.mrb[0].mxu0
    %v1858 = vadd.f32 0.0, %v1857
    %v1859 = vpop.f32.mrb[0].mxu0
    %v1860 = vadd.f32 0.0, %v1859
    %1861 = vdwg.mxu0
    %v1866 = vrot.slane %v1787, 2
    %v1867 = vrot.slane %v1789, 2
    %v1868 = vrot.slane %v1858, 2
    %v1869 = vrot.slane %v1860, 2
    %v1874 = vadd.f32 %v683, %v1866
    %v1875 = vadd.f32 %v685, %v1867
    %v1876 = vadd.f32 %v754, %v1868
    %v1877 = vadd.f32 %v756, %v1869
    %v1878 = vxor.u32 %v1874, 2147483648
    %v1879 = vxor.u32 %v1875, 2147483648
    %v1880 = vxor.u32 %v1877, 2147483648
    %v1881 = vmul.f32 %v1878, 1.442695
    %v1882 = vpow.pop %v1881
    %v1883 = vmul.f32 %v1879, 1.442695
    %v1884 = vpow.pop %v1883
    %v1885 = vmul.f32 %v1880, 1.442695
    %v1886 = vpow.pop %v1885
    %v1887 = vadd.f32 %v1882, 1.0
    %v1888 = vadd.f32 %v1884, 1.0
    %v1889 = vadd.f32 %v1886, 1.0
    %v1890 = vrcp.pop %v1887
    %v1891 = vmul.f32 1.0, %v1890
    %v1892 = vrcp.pop %v1888
    %v1893 = vmul.f32 1.0, %v1892
    %v1894 = vrcp.pop %v1889
    %v1895 = vmul.f32 1.0, %v1894
    %v1896 = vtanh.pop %v1876
    %v1898 = vrot.slane %v1713, 7
    %v1900 = vmul.f32 %v1893, %v1898
    %v1901 = vmul.f32 %v1891, %v1896
    %v1902 = vadd.f32 %v1900, %v1901
    %v1903 = vtanh.pop %v1902
    %v1904 = vmul.f32 %v1895, %v1903
    %1905 = vst [vmem:[#allocation3] sm:$0x40] %v1904
    %v1907 = vrot.slane %v1904, 6
    %1909 = vmatprep.subr.mxu0 %v449
    %1910 = vmatpush1.msra.mxu0 %v448
    %1911 = vmatprep.subr.mxu0 %v453
    %1912 = vmatpush1.msra.mxu0 %v452
    %1913 = vmatprep.subr.mxu0 %v457
    %1914 = vmatpush1.msra.mxu0 %v456
    %1915 = vmatprep.subr.mxu0 %v461
    %1916 = vmatpush1.msra.mxu0 %v460
    %1917 = vmatprep.subr.mxu0 %v465
    %1918 = vmatpush1.msra.mxu0 %v464
    %1919 = vmatprep.subr.mxu0 %v469
    %1920 = vmatpush1.msra.mxu0 %v468
    %1921 = vmatprep.subr.mxu0 %v473
    %1922 = vmatpush1.msra.mxu0 %v472
    %1923 = vmatprep.subr.mxu0 %v477
    %1924 = vmatpush1.msra.mxu0 %v476
    %1925 = vmatprep.subr.mxu0 %v481
    %1926 = vmatpush1.msra.mxu0 %v480
    %1927 = vmatprep.subr.mxu0 %v485
    %1928 = vmatpush1.msra.mxu0 %v484
    %1929 = vmatprep.subr.mxu0 %v489
    %1930 = vmatpush1.msra.mxu0 %v488
    %1931 = vmatprep.subr.mxu0 %v493
    %1932 = vmatpush1.msra.mxu0 %v492
    %1933 = vmatprep.subr.mxu0 %v497
    %1934 = vmatpush1.msra.mxu0 %v496
    %1935 = vmatprep.subr.mxu0 %v501
    %1936 = vmatpush1.msra.mxu0 %v500
    %1937 = vmatprep.subr.mxu0 %v505
    %1938 = vmatpush1.msra.mxu0 %v504
    %1939 = vmatprep.subr.mxu0 %v509
    %1940 = vmatpush1.msra.mxu0 %v508
    %1941 = vmatprep.subr.mxu0 0.0
    %1942 = vmatpush1.msra.mxu0 0.0
    %1943 = vmatprep.subr.mxu0 0.0
    %1944 = vmatpush1.msra.mxu0 0.0
    %1945 = vmatprep.subr.mxu0 0.0
    %1946 = vmatpush1.msra.mxu0 0.0
    %1947 = vmatprep.subr.mxu0 0.0
    %1948 = vmatpush1.msra.mxu0 0.0
    %1949 = vmatprep.subr.mxu0 0.0
    %1950 = vmatpush1.msra.mxu0 0.0
    %1951 = vmatprep.subr.mxu0 0.0
    %1952 = vmatpush1.msra.mxu0 0.0
    %1953 = vmatprep.subr.mxu0 0.0
    %1954 = vmatpush1.msra.mxu0 0.0
    %1955 = vmatprep.subr.mxu0 0.0
    %1956 = vmatpush1.msra.mxu0 0.0
    %1957 = vmatprep.subr.mxu0 0.0
    %1958 = vmatpush1.msra.mxu0 0.0
    %1959 = vmatprep.subr.mxu0 0.0
    %1960 = vmatpush1.msra.mxu0 0.0
    %1961 = vmatprep.subr.mxu0 0.0
    %1962 = vmatpush1.msra.mxu0 0.0
    %1963 = vmatprep.subr.mxu0 0.0
    %1964 = vmatpush1.msra.mxu0 0.0
    %1965 = vmatprep.subr.mxu0 0.0
    %1966 = vmatpush1.msra.mxu0 0.0
    %1967 = vmatprep.subr.mxu0 0.0
    %1968 = vmatpush1.msra.mxu0 0.0
    %1969 = vmatprep.subr.mxu0 0.0
    %1970 = vmatpush1.msra.mxu0 0.0
    %1971 = vmatprep.subr.mxu0 0.0
    %1972 = vmatpush1.msra.mxu0 0.0
    %1973 = vmatprep.mubr.f32.mxu0 0.0
    %1974 = vmatmul.mubr.f32.gmra.mrb[0].mxu0 %v1907
    %v1975 = vpop.f32.mrb[0].mxu0
    %v1976 = vadd.f32 0.0, %v1975
    %v1977 = vpop.f32.mrb[0].mxu0
    %v1978 = vadd.f32 0.0, %v1977
    %1979 = vdwg.mxu0
    %1980 = vmatprep.subr.mxu0 %v451
    %1981 = vmatpush1.msra.mxu0 %v450
    %1982 = vmatprep.subr.mxu0 %v455
    %1983 = vmatpush1.msra.mxu0 %v454
    %1984 = vmatprep.subr.mxu0 %v459
    %1985 = vmatpush1.msra.mxu0 %v458
    %1986 = vmatprep.subr.mxu0 %v463
    %1987 = vmatpush1.msra.mxu0 %v462
    %1988 = vmatprep.subr.mxu0 %v467
    %1989 = vmatpush1.msra.mxu0 %v466
    %1990 = vmatprep.subr.mxu0 %v471
    %1991 = vmatpush1.msra.mxu0 %v470
    %1992 = vmatprep.subr.mxu0 %v475
    %1993 = vmatpush1.msra.mxu0 %v474
    %1994 = vmatprep.subr.mxu0 %v479
    %1995 = vmatpush1.msra.mxu0 %v478
    %1996 = vmatprep.subr.mxu0 %v483
    %1997 = vmatpush1.msra.mxu0 %v482
    %1998 = vmatprep.subr.mxu0 %v487
    %1999 = vmatpush1.msra.mxu0 %v486
    %2000 = vmatprep.subr.mxu0 %v491
    %2001 = vmatpush1.msra.mxu0 %v490
    %2002 = vmatprep.subr.mxu0 %v495
    %2003 = vmatpush1.msra.mxu0 %v494
    %2004 = vmatprep.subr.mxu0 %v499
    %2005 = vmatpush1.msra.mxu0 %v498
    %2006 = vmatprep.subr.mxu0 %v503
    %2007 = vmatpush1.msra.mxu0 %v502
    %2008 = vmatprep.subr.mxu0 %v507
    %2009 = vmatpush1.msra.mxu0 %v506
    %2010 = vmatprep.subr.mxu0 %v511
    %2011 = vmatpush1.msra.mxu0 %v510
    %2012 = vmatprep.subr.mxu0 0.0
    %2013 = vmatpush1.msra.mxu0 0.0
    %2014 = vmatprep.subr.mxu0 0.0
    %2015 = vmatpush1.msra.mxu0 0.0
    %2016 = vmatprep.subr.mxu0 0.0
    %2017 = vmatpush1.msra.mxu0 0.0
    %2018 = vmatprep.subr.mxu0 0.0
    %2019 = vmatpush1.msra.mxu0 0.0
    %2020 = vmatprep.subr.mxu0 0.0
    %2021 = vmatpush1.msra.mxu0 0.0
    %2022 = vmatprep.subr.mxu0 0.0
    %2023 = vmatpush1.msra.mxu0 0.0
    %2024 = vmatprep.subr.mxu0 0.0
    %2025 = vmatpush1.msra.mxu0 0.0
    %2026 = vmatprep.subr.mxu0 0.0
    %2027 = vmatpush1.msra.mxu0 0.0
    %2028 = vmatprep.subr.mxu0 0.0
    %2029 = vmatpush1.msra.mxu0 0.0
    %2030 = vmatprep.subr.mxu0 0.0
    %2031 = vmatpush1.msra.mxu0 0.0
    %2032 = vmatprep.subr.mxu0 0.0
    %2033 = vmatpush1.msra.mxu0 0.0
    %2034 = vmatprep.subr.mxu0 0.0
    %2035 = vmatpush1.msra.mxu0 0.0
    %2036 = vmatprep.subr.mxu0 0.0
    %2037 = vmatpush1.msra.mxu0 0.0
    %2038 = vmatprep.subr.mxu0 0.0
    %2039 = vmatpush1.msra.mxu0 0.0
    %2040 = vmatprep.subr.mxu0 0.0
    %2041 = vmatpush1.msra.mxu0 0.0
    %2042 = vmatprep.subr.mxu0 0.0
    %2043 = vmatpush1.msra.mxu0 0.0
    %2044 = vmatprep.mubr.f32.mxu0 0.0
    %2045 = vmatmul.mubr.f32.gmra.mrb[0].mxu0 %v1907
    %v2046 = vpop.f32.mrb[0].mxu0
    %v2047 = vadd.f32 0.0, %v2046
    %v2048 = vpop.f32.mrb[0].mxu0
    %v2049 = vadd.f32 0.0, %v2048
    %2050 = vdwg.mxu0
    %v2055 = vrot.slane %v1976, 1
    %v2056 = vrot.slane %v1978, 1
    %v2057 = vrot.slane %v2047, 1
    %v2058 = vrot.slane %v2049, 1
    %v2063 = vadd.f32 %v683, %v2055
    %v2064 = vadd.f32 %v685, %v2056
    %v2065 = vadd.f32 %v754, %v2057
    %v2066 = vadd.f32 %v756, %v2058
    %v2067 = vxor.u32 %v2063, 2147483648
    %v2068 = vxor.u32 %v2064, 2147483648
    %v2069 = vxor.u32 %v2066, 2147483648
    %v2070 = vmul.f32 %v2067, 1.442695
    %v2071 = vpow.pop %v2070
    %v2072 = vmul.f32 %v2068, 1.442695
    %v2073 = vpow.pop %v2072
    %v2074 = vmul.f32 %v2069, 1.442695
    %v2075 = vpow.pop %v2074
    %v2076 = vadd.f32 %v2071, 1.0
    %v2077 = vadd.f32 %v2073, 1.0
    %v2078 = vadd.f32 %v2075, 1.0
    %v2079 = vrcp.pop %v2076
    %v2080 = vmul.f32 1.0, %v2079
    %v2081 = vrcp.pop %v2077
    %v2082 = vmul.f32 1.0, %v2081
    %v2083 = vrcp.pop %v2078
    %v2084 = vmul.f32 1.0, %v2083
    %v2085 = vtanh.pop %v2065
    %v2087 = vrot.slane %v1902, 7
    %v2089 = vmul.f32 %v2082, %v2087
    %v2090 = vmul.f32 %v2080, %v2085
    %v2091 = vadd.f32 %v2089, %v2090
    %v2092 = vtanh.pop %v2091
    %v2093 = vmul.f32 %v2084, %v2092
    %2094 = vst [vmem:[#allocation3] sm:$0x80] %v2093
    %v2095 = vld [vmem:[#allocation3] sm:$0xff]
    %v2096 = vld [vmem:[%s5] sm:$0xff]
    %v2097 = vld [vmem:[%s5 + $0x8] sm:$0xff]
    %v2098 = vld [vmem:[%s5 + $0x10] sm:$0xff]
    %v2099 = vld [vmem:[%s5 + $0x18] sm:$0xff]
    %v2100 = vld [vmem:[%s5 + $0x20] sm:$0xff]
    %v2101 = vld [vmem:[%s5 + $0x28] sm:$0xff]
    %v2102 = vld [vmem:[%s5 + $0x30] sm:$0xff]
    %v2103 = vld [vmem:[%s5 + $0x38] sm:$0xff]
    %v2104 = vld [vmem:[%s5 + $0x40] sm:$0xff]
    %v2105 = vld [vmem:[%s5 + $0x48] sm:$0xff]
    %v2106 = vld [vmem:[%s5 + $0x50] sm:$0xff]
    %v2107 = vld [vmem:[%s5 + $0x58] sm:$0xff]
    %v2108 = vld [vmem:[%s5 + $0x60] sm:$0xff]
    %v2109 = vld [vmem:[%s5 + $0x68] sm:$0xff]
    %v2110 = vld [vmem:[%s5 + $0x70] sm:$0xff]
    %v2111 = vld [vmem:[%s5 + $0x78] sm:$0xff]
    %v2112 = vld [vmem:[%s6] sm:$0x1]
    %v2114 = vlaneseq
    %v2115 = vshrl.u32 %v2114, 7
    %v2116 = vsub.s32 0, %v2115
    %v2117 = vrot.slane %v2112, %v2116
    %2119 = vmatprep.subr.mxu0 0.0
    %2120 = vmatpush1.msra.mxu0 %v2096
    %2121 = vmatprep.subr.mxu0 0.0
    %2122 = vmatpush1.msra.mxu0 %v2097
    %2123 = vmatprep.subr.mxu0 0.0
    %2124 = vmatpush1.msra.mxu0 %v2098
    %2125 = vmatprep.subr.mxu0 0.0
    %2126 = vmatpush1.msra.mxu0 %v2099
    %2127 = vmatprep.subr.mxu0 0.0
    %2128 = vmatpush1.msra.mxu0 %v2100
    %2129 = vmatprep.subr.mxu0 0.0
    %2130 = vmatpush1.msra.mxu0 %v2101
    %2131 = vmatprep.subr.mxu0 0.0
    %2132 = vmatpush1.msra.mxu0 %v2102
    %2133 = vmatprep.subr.mxu0 0.0
    %2134 = vmatpush1.msra.mxu0 %v2103
    %2135 = vmatprep.subr.mxu0 0.0
    %2136 = vmatpush1.msra.mxu0 %v2104
    %2137 = vmatprep.subr.mxu0 0.0
    %2138 = vmatpush1.msra.mxu0 %v2105
    %2139 = vmatprep.subr.mxu0 0.0
    %2140 = vmatpush1.msra.mxu0 %v2106
    %2141 = vmatprep.subr.mxu0 0.0
    %2142 = vmatpush1.msra.mxu0 %v2107
    %2143 = vmatprep.subr.mxu0 0.0
    %2144 = vmatpush1.msra.mxu0 %v2108
    %2145 = vmatprep.subr.mxu0 0.0
    %2146 = vmatpush1.msra.mxu0 %v2109
    %2147 = vmatprep.subr.mxu0 0.0
    %2148 = vmatpush1.msra.mxu0 %v2110
    %2149 = vmatprep.subr.mxu0 0.0
    %2150 = vmatpush1.msra.mxu0 %v2111
    %2151 = vmatprep.subr.mxu0 0.0
    %2152 = vmatpush1.msra.mxu0 0.0
    %2153 = vmatprep.subr.mxu0 0.0
    %2154 = vmatpush1.msra.mxu0 0.0
    %2155 = vmatprep.subr.mxu0 0.0
    %2156 = vmatpush1.msra.mxu0 0.0
    %2157 = vmatprep.subr.mxu0 0.0
    %2158 = vmatpush1.msra.mxu0 0.0
    %2159 = vmatprep.subr.mxu0 0.0
    %2160 = vmatpush1.msra.mxu0 0.0
    %2161 = vmatprep.subr.mxu0 0.0
    %2162 = vmatpush1.msra.mxu0 0.0
    %2163 = vmatprep.subr.mxu0 0.0
    %2164 = vmatpush1.msra.mxu0 0.0
    %2165 = vmatprep.subr.mxu0 0.0
    %2166 = vmatpush1.msra.mxu0 0.0
    %2167 = vmatprep.subr.mxu0 0.0
    %2168 = vmatpush1.msra.mxu0 0.0
    %2169 = vmatprep.subr.mxu0 0.0
    %2170 = vmatpush1.msra.mxu0 0.0
    %2171 = vmatprep.subr.mxu0 0.0
    %2172 = vmatpush1.msra.mxu0 0.0
    %2173 = vmatprep.subr.mxu0 0.0
    %2174 = vmatpush1.msra.mxu0 0.0
    %2175 = vmatprep.subr.mxu0 0.0
    %2176 = vmatpush1.msra.mxu0 0.0
    %2177 = vmatprep.subr.mxu0 0.0
    %2178 = vmatpush1.msra.mxu0 0.0
    %2179 = vmatprep.subr.mxu0 0.0
    %2180 = vmatpush1.msra.mxu0 0.0
    %2181 = vmatprep.subr.mxu0 0.0
    %2182 = vmatpush1.msra.mxu0 0.0
    %2183 = vmatprep.mubr.f32.mxu0 0.0
    %2184 = vmatmul.mubr.f32.gmra.mrb[0].mxu0 %v2095
    %v2185 = vpop.f32.mrb[0].mxu0
    %v2186 = vadd.f32 %v2117, %v2185
    %v2187 = vpop.f32.mrb[0].mxu0
    %2188 = vdwg.mxu0
    %vm2189 = vcmask 64512
    %v2190 = vsel %vm2189, %v2186, -inf
    %2191 = vmax.xlane.f32.xlu0 %v2190
    %v2192 = vpop.xlane.xlu0 %2191
    %v2193 = vsub.f32 %v2186, %v2192
    %v2194 = vmul.f32 %v2193, 1.442695
    %v2195 = vpow.pop %v2194
    %v2196 = vsel %vm2189, %v2195, 0.0
    %2197 = vadd.xlane.f32.xlu0 %v2196
    %v2198 = vpop.xlane.xlu0 %2197
    %v2199 = vlog2.pop %v2198
    %v2200 = vmul.f32 %v2199, 0.6931472
    %v2201 = vadd.f32 %v2192, %v2200
    %v2202 = vsub.f32 %v2186, %v2201
    %2203 = vst.msk [vmem:[#allocation12] sm:$0xff] %vm2189, %v2202
    // Predicated region
    $region278: #{tpu_custom_call.1} parent=1 // pred_check
      _
    $region279: #{tpu_custom_call.1} parent=1 // pred_check_branch
      %2205 = sbr.rel (0) target = $region281
    $region280: #{tpu_custom_call.1} parent=1 // pred_region
      %s2207 = ssub.s32 128, 128
      %2208 = vsyncadd [#allocation7], %s2207
      %s2210 = sshll.u32 [#allocation12], 4
      %s2211 = int_to_ptr.vmem [resolvable:$true] %s2210
      %2213 = dma.vmem_to_hbm [thread:$0]  %s2211, 128, %s7, [#allocation7]
    $region281: #{tpu_custom_call.1} parent=1 // pred_fallthru
      _
    // Predicated region
    $region282: #{tpu_custom_call.1} parent=1 // pred_check
      _
    $region283: #{tpu_custom_call.1} parent=1 // pred_check_branch
      %2215 = sbr.rel (0) target = $region285
    $region284: #{tpu_custom_call.1} parent=1 // pred_region
      %2216 = dma.done [#allocation7], 128
    $region285: #{tpu_custom_call.1} parent=1 // pred_fallthru
      _
    %2217 = vsyncpa [#allocation6], 1
    %2218 = vsyncpa [#allocation11], 1
    %2219 = vsyncpa [#allocation7], 1
    %2220 = vsyncpa [#allocation8], 1
  %2221 = vsyncmov [#allocation4]
  %s2222 = vpop.sfrf %2221
  %p2223 = scmp.eq.s32.totalorder %s2222, 0
  %p2224 = pneg %p2223
  %2226 = shalt.err (%p2224)
  %s2227 = scalar_lea.sflag [#allocation4], 1
  %2228 = vsyncmov %s2227
  %s2229 = vpop.sfrf %2228
  %p2230 = scmp.eq.s32.totalorder %s2229, 0
  %p2231 = pneg %p2230
  %2233 = shalt.err (%p2231)
  %s2234 = scalar_lea.sflag [#allocation4], 2
  %2235 = vsyncmov %s2234
  %s2236 = vpop.sfrf %2235
  %p2237 = scmp.eq.s32.totalorder %s2236, 0
  %p2238 = pneg %p2237
  %2240 = shalt.err (%p2238)
  %s2241 = scalar_lea.sflag [#allocation4], 3
  %2242 = vsyncmov %s2241
  %s2243 = vpop.sfrf %2242
  %p2244 = scmp.eq.s32.totalorder %s2243, 0
  %p2245 = pneg %p2244
  %2247 = shalt.err (%p2245)
  %s2248 = scalar_lea.sflag [#allocation4], 4
  %2249 = vsyncmov %s2248
  %s2250 = vpop.sfrf %2249
  %p2251 = scmp.eq.s32.totalorder %s2250, 0
  %p2252 = pneg %p2251
  %2254 = shalt.err (%p2252)
  %s2255 = scalar_lea.sflag [#allocation4], 5
  %2256 = vsyncmov %s2255
  %s2257 = vpop.sfrf %2256
  %p2258 = scmp.eq.s32.totalorder %s2257, 0
  %p2259 = pneg %p2258
  %2261 = shalt.err (%p2259)
  %s2262 = scalar_lea.sflag [#allocation4], 6
  %2263 = vsyncmov %s2262
  %s2264 = vpop.sfrf %2263
  %p2265 = scmp.eq.s32.totalorder %s2264, 0
  %p2266 = pneg %p2265
  %2268 = shalt.err (%p2266)
  %s2269 = scalar_lea.sflag [#allocation4], 7
  %2270 = vsyncmov %s2269
  %s2271 = vpop.sfrf %2270
  %p2272 = scmp.eq.s32.totalorder %s2271, 0
  %p2273 = pneg %p2272
  %2275 = shalt.err (%p2273)

</llo_original>
